<compile_context>
chip_gen: v5e
topology: v5e:2x2
jax: 0.10.0
libtpu: 0.0.40
codegen_flags: <defaults>
</compile_context>

<pallas_src>
import jax
import jax.numpy as jnp
from jax.experimental import pallas as pl
from jax.experimental.pallas import tpu as pltpu

NUM_CLASSES = 3  # stand-in for get_NUM_CLASSES()

_VMEM = pl.BlockSpec(memory_space=pltpu.MemorySpace.VMEM)


# ----------------------------- fused forward kernel ------------------------------

def _build_fused_kernel(B, T, Cc, H, L, C, offs):
    f32 = jnp.float32
    H2, H4, H8 = 2 * H, 4 * H, 8 * H

    def kernel(x_ref, p_ref, o_ref):
        # static-offset slice out of the single packed parameter slab (one DMA for all
        # parameters; each get() is a cheap VMEM window load).
        def get(name):
            r0, r, c = offs[name]
            return p_ref[r0:r0 + r, 0:c]

        # ---------------- conv1d(k=3, pad=1) + ReLU, both layers fused ----------------
        def conv_block(xv, w, b):
            # xv: (B, T, Cin); pad in time as a value, one (B*T, 3*Cin) @ (3*Cin, Cout).
            Bv, Tv, Cin = xv.shape
            z = jnp.zeros((Bv, 1, Cin), f32)
            xp = jnp.concatenate([z, xv, z], axis=1)                     # (B, T+2, Cin)
            slab = jnp.concatenate(
                [xp[:, 0:Tv, :], xp[:, 1:Tv + 1, :], xp[:, 2:Tv + 2, :]],
                axis=-1).reshape(Bv * Tv, 3 * Cin)
            y = jnp.dot(slab, w, preferred_element_type=f32) + b
            return jnp.maximum(y, 0.0).reshape(Bv, Tv, -1)

        h = conv_block(x_ref[...], get('conv1_w'), get('conv1_b'))      # (B, T, Cc)
        h = conv_block(h, get('conv2_w'), get('conv2_b'))                # (B, T, Cc)

        # ------- bidirectional LSTM stack (fwd+bwd fused, time fully unrolled) -------
        inp = h
        for layer in range(L):
            Din = Cc if layer == 0 else H2
            wih = get(f'wih{layer}')      # (Din, 8H)  cols: [fwd i,f,g,o | bwd i,f,g,o]
            bias = get(f'b{layer}')       # (1, 8H)
            whh = get(f'whh{layer}')      # (2H, 8H)   block-diag [whh_f, 0; 0, whh_b]

            # hoisted time-parallel input projection: ONE matmul for both directions
            flat = inp.reshape(B * T, Din)
            proj = (jnp.dot(flat, wih, preferred_element_type=f32) + bias
                    ).reshape(B, T, H8)

            h_cat = jnp.zeros((B, H2), f32)    # [hf | hb]
            cf = jnp.zeros((B, H), f32)
            cb = jnp.zeros((B, H), f32)
            hf_steps, hb_steps = [], []
            # T is small & static -> full unroll. For large T: lax.fori_loop with a small
            # explicit unroll factor and lane-dense chunked output writes instead.
            for s in range(T):
                tr = T - 1 - s
                gpre = jnp.concatenate([proj[:, s, 0:H4], proj[:, tr, H4:H8]], axis=-1)
                # single block-diagonal recurrent matmul for fwd+bwd
                gates = gpre + jnp.dot(h_cat, whh, preferred_element_type=f32)
                # 2 full-width EUP pushes for all 8 gates, then lane-group slices
                sg = jax.nn.sigmoid(gates)
                th = jnp.tanh(gates)
                i_f, f_f = sg[:, 0:H], sg[:, H:2 * H]
                g_f, o_f = th[:, 2 * H:3 * H], sg[:, 3 * H:4 * H]
                i_b, f_b = sg[:, H4:H4 + H], sg[:, H4 + H:H4 + 2 * H]
                g_b, o_b = th[:, H4 + 2 * H:H4 + 3 * H], sg[:, H4 + 3 * H:H8]
                cf = f_f * cf + i_f * g_f
                cb = f_b * cb + i_b * g_b
                hf = o_f * jnp.tanh(cf)
                hb = o_b * jnp.tanh(cb)
                h_cat = jnp.concatenate([hf, hb], axis=-1)
                hf_steps.append(hf)        # fwd state at time s
                hb_steps.append(hb)        # bwd state at time T-1-s
            # assemble (B, T, 2H) layer output entirely in values (no VMEM scratch)
            hf_stack = jnp.stack(hf_steps, axis=1)                       # (B, T, H)
            hb_stack = jnp.stack(list(reversed(hb_steps)), axis=1)       # (B, T, H)
            inp = jnp.concatenate([hf_stack, hb_stack], axis=-1)         # (B, T, 2H)

        # ---------------- attention + LayerNorm + GELU MLP head ----------------
        y = inp
        aw = get('attn_w')                 # (1, 2H)
        ab = get('attn_b')                 # (1, 1)
        scores = (jnp.sum(y * aw.reshape(1, 1, H2), axis=-1, keepdims=True)
                  + ab.reshape(1, 1, 1))
        wts = jax.nn.softmax(scores, axis=1)          # softmax over time (dim=1)
        ctx = jnp.sum(y * wts, axis=1)                # (B, 2H)

        mu = jnp.mean(ctx, axis=-1, keepdims=True)
        var = jnp.mean((ctx - mu) ** 2, axis=-1, keepdims=True)
        ctx = (ctx - mu) * jax.lax.rsqrt(var + 1e-5)
        ctx = ctx * get('ln_g') + get('ln_b')
        # dropout: identity (eval mode)
        # TODO(synk): PyTorch nn.GELU default is exact-erf; tanh approximation used here.
        h1 = jax.nn.gelu(jnp.dot(ctx, get('fc1_w'), preferred_element_type=f32)
                         + get('fc1_b'), approximate=True)
        h2 = jax.nn.gelu(jnp.dot(h1, get('fc2_w'), preferred_element_type=f32)
                         + get('fc2_b'), approximate=True)
        o_ref[...] = (jnp.dot(h2, get('fco_w'), preferred_element_type=f32)
                      + get('fco_b'))

    return kernel


# ------------------------------- wrapper -----------------------------------

def cnn_lstm_forward(x, param_slab, offs):
    # x: (B, T, input_size) -> logits (B, NUM_CLASSES). One fused pallas_call,
    # two inputs total (activations + packed parameter slab).
    B, T, _ = x.shape
    Cc = offs['conv1_b'][2]
    H = offs['ln_g'][2] // 2
    L = sum(1 for k in offs if k.startswith('whh'))
    C = offs['fco_b'][2]

    kernel = _build_fused_kernel(B, T, Cc, H, L, C, offs)
    return pl.pallas_call(
        kernel,
        out_shape=jax.ShapeDtypeStruct((B, C), jnp.float32),
        in_specs=[_VMEM, _VMEM],
        out_specs=_VMEM,
    )(x, param_slab)


# --------------------------- parameter packing ---------------------------

def _pack_entries(entries):
    """Pack a list of (name, 2-D f32 array) into one (rows, cols) slab.

    Each entry starts at a sublane-aligned row offset; columns are lane-aligned.
    Returns (slab, offsets) with offsets[name] = (row0, rows, cols) as Python ints.
    """
    cols = max(int(a.shape[1]) for _, a in entries)
    cols = ((cols + 127) // 128) * 128
    offs = {}
    chunks = []
    r0 = 0
    for name, a in entries:
        a = jnp.asarray(a, jnp.float32)
        r, c = int(a.shape[0]), int(a.shape[1])
        offs[name] = (r0, r, c)
        rpad = ((r + 7) // 8) * 8
        chunks.append(jnp.pad(a, ((0, rpad - r), (0, cols - c))))
        r0 += rpad
    return jnp.concatenate(chunks, axis=0), offs


def init_params(key, input_size, cnn_channels, hidden, layers, num_classes):
    """Deterministic PyTorch-equivalent init, packed into a single f32 slab."""
    def uni(k, shape, fan_in):
        bound = 1.0 / (fan_in ** 0.5)
        return jax.random.uniform(k, shape, jnp.float32, -bound, bound)

    keys = iter(jax.random.split(key, 64))
    entries = []

    # Conv1d weights, PyTorch layout (Cout, Cin, 3) -> matmul layout (3*Cin, Cout)
    w1 = uni(next(keys), (cnn_channels, input_size, 3), input_size * 3)
    entries.append(('conv1_w',
                    jnp.transpose(w1, (2, 1, 0)).reshape(3 * input_size, cnn_channels)))
    entries.append(('conv1_b', uni(next(keys), (1, cnn_channels), input_size * 3)))
    w2 = uni(next(keys), (cnn_channels, cnn_channels, 3), cnn_channels * 3)
    entries.append(('conv2_w',
                    jnp.transpose(w2, (2, 1, 0)).reshape(3 * cnn_channels, cnn_channels)))
    entries.append(('conv2_b', uni(next(keys), (1, cnn_channels), cnn_channels * 3)))

    # Bi-LSTM stack. Per layer:
    #   wih{l}: (Din, 8H) = [wih_fwd^T | wih_bwd^T]   (PyTorch gate order i,f,g,o)
    #   b{l}  : (1, 8H)   = [b_fwd | b_bwd]           (bias_ih + bias_hh)
    #   whh{l}: (2H, 8H)  block-diag so fwd+bwd share one recurrent matmul per step.
    for layer in range(layers):
        d_in = cnn_channels if layer == 0 else 2 * hidden
        wihs, whhs, biases = [], [], []
        for _ in range(2):  # fwd, bwd
            wih = uni(next(keys), (4 * hidden, d_in), hidden)
            whh = uni(next(keys), (4 * hidden, hidden), hidden)
            bih = uni(next(keys), (4 * hidden,), hidden)
            bhh = uni(next(keys), (4 * hidden,), hidden)
            wihs.append(wih.T)                                  # (d_in, 4H)
            whhs.append(whh.T)                                  # (H, 4H)
            biases.append((bih + bhh).reshape(1, 4 * hidden))
        entries.append((f'wih{layer}', jnp.concatenate(wihs, axis=1)))
        entries.append((f'b{layer}', jnp.concatenate(biases, axis=1)))
        whh_blk = jnp.zeros((2 * hidden, 8 * hidden), jnp.float32)
        whh_blk = whh_blk.at[0:hidden, 0:4 * hidden].set(whhs[0])
        whh_blk = whh_blk.at[hidden:2 * hidden, 4 * hidden:8 * hidden].set(whhs[1])
        entries.append((f'whh{layer}', whh_blk))

    # attention Linear(2H -> 1)
    entries.append(('attn_w', uni(next(keys), (1, 2 * hidden), 2 * hidden)))
    entries.append(('attn_b', uni(next(keys), (1, 1), 2 * hidden)))
    # LayerNorm(2H) default init
    entries.append(('ln_g', jnp.ones((1, 2 * hidden), jnp.float32)))
    entries.append(('ln_b', jnp.zeros((1, 2 * hidden), jnp.float32)))
    # MLP head (PyTorch Linear (out, in) stored transposed for x @ W^T)
    w = uni(next(keys), (hidden, 2 * hidden), 2 * hidden)
    entries.append(('fc1_w', w.T))
    entries.append(('fc1_b', uni(next(keys), (1, hidden), 2 * hidden)))
    w = uni(next(keys), (hidden // 2, hidden), hidden)
    entries.append(('fc2_w', w.T))
    entries.append(('fc2_b', uni(next(keys), (1, hidden // 2), hidden)))
    w = uni(next(keys), (num_classes, hidden // 2), hidden // 2)
    entries.append(('fco_w', w.T))
    entries.append(('fco_b', uni(next(keys), (1, num_classes), hidden // 2)))

    return _pack_entries(entries)


if __name__ == "__main__":
    B, T, F = 2, 8, 4            # batch, sequence length, input features
    CNN_C, H, L = 16, 32, 3      # cnn_channels, lstm_hidden_size, lstm_layers

    key = jax.random.PRNGKey(0)
    kx, kp = jax.random.split(key)
    x = jax.random.normal(kx, (B, T, F), dtype=jnp.float32)
    param_slab, offs = init_params(kp, F, CNN_C, H, L, NUM_CLASSES)

    fwd = jax.jit(lambda xv, pv: cnn_lstm_forward(xv, pv, offs))
    logits = fwd(x, param_slab)
    jax.block_until_ready(logits)
    assert logits.shape == (B, NUM_CLASSES), logits.shape
    print("KERNEL_OK")
</pallas_src>

<mosaic_0001>
module attributes {stable_mosaic.version = 11 : i64} {
  func.func @kernel(%arg0: memref<2x8x4xf32, #tpu.memory_space<vmem>>, %arg1: memref<608x256xf32, #tpu.memory_space<vmem>>, %arg2: memref<2x3xf32, #tpu.memory_space<vmem>>) attributes {dimension_semantics = [], scalar_prefetch = 0 : i64, scratch_operands = 0 : i64, tpu.core_type = #tpu.core_type<tc>} {
    %c0 = arith.constant 0 : index
    %c0_0 = arith.constant 0 : index
    %c0_1 = arith.constant 0 : index
    %0 = vector.load %arg0[%c0, %c0_0, %c0_1] : memref<2x8x4xf32, #tpu.memory_space<vmem>>, vector<2x8x4xf32>
    %c0_2 = arith.constant 0 : index
    %c0_3 = arith.constant 0 : index
    %1 = vector.load %arg1[%c0_2, %c0_3] : memref<608x256xf32, #tpu.memory_space<vmem>>, vector<12x16xf32>
    %c16 = arith.constant 16 : index
    %c0_4 = arith.constant 0 : index
    %2 = vector.load %arg1[%c16, %c0_4] : memref<608x256xf32, #tpu.memory_space<vmem>>, vector<1x16xf32>
    %cst = arith.constant 0.000000e+00 : f32
    %3 = vector.broadcast %cst : f32 to vector<2x1x4xf32>
    %4 = tpu.concatenate %3, %0, %3 in 1 : vector<2x1x4xf32>, vector<2x8x4xf32>, vector<2x1x4xf32> -> vector<2x10x4xf32>
    %5 = vector.extract_strided_slice %4 {offsets = [0, 0, 0], sizes = [2, 8, 4], strides = [1, 1, 1]} : vector<2x10x4xf32> to vector<2x8x4xf32>
    %6 = vector.extract_strided_slice %4 {offsets = [0, 1, 0], sizes = [2, 8, 4], strides = [1, 1, 1]} : vector<2x10x4xf32> to vector<2x8x4xf32>
    %7 = vector.extract_strided_slice %4 {offsets = [0, 2, 0], sizes = [2, 8, 4], strides = [1, 1, 1]} : vector<2x10x4xf32> to vector<2x8x4xf32>
    %8 = tpu.concatenate %5, %6, %7 in 2 : vector<2x8x4xf32>, vector<2x8x4xf32>, vector<2x8x4xf32> -> vector<2x8x12xf32>
    %9 = vector.shape_cast %8 : vector<2x8x12xf32> to vector<16x12xf32>
    %cst_5 = arith.constant dense<0.000000e+00> : vector<16x16xf32>
    %10 = tpu.matmul %9, %1, %cst_5 {dimension_numbers = #tpu.dot_dimension_numbers<[1], [0], [0], [1], [0, 0, 1, 1], [], []>} : vector<16x12xf32>, vector<12x16xf32>, vector<16x16xf32> -> vector<16x16xf32>
    %11 = vector.broadcast %2 : vector<1x16xf32> to vector<16x16xf32>
    %12 = arith.addf %10, %11 : vector<16x16xf32>
    %cst_6 = arith.constant 0.000000e+00 : f32
    %13 = vector.broadcast %cst_6 : f32 to vector<16x16xf32>
    %14 = arith.maximumf %12, %13 : vector<16x16xf32>
    %15 = vector.shape_cast %14 : vector<16x16xf32> to vector<2x8x16xf32>
    %c24 = arith.constant 24 : index
    %c0_7 = arith.constant 0 : index
    %16 = vector.load %arg1[%c24, %c0_7] : memref<608x256xf32, #tpu.memory_space<vmem>>, vector<48x16xf32>
    %c72 = arith.constant 72 : index
    %c0_8 = arith.constant 0 : index
    %17 = vector.load %arg1[%c72, %c0_8] : memref<608x256xf32, #tpu.memory_space<vmem>>, vector<1x16xf32>
    %cst_9 = arith.constant 0.000000e+00 : f32
    %18 = vector.broadcast %cst_9 : f32 to vector<2x1x16xf32>
    %19 = tpu.concatenate %18, %15, %18 in 1 : vector<2x1x16xf32>, vector<2x8x16xf32>, vector<2x1x16xf32> -> vector<2x10x16xf32>
    %20 = vector.extract_strided_slice %19 {offsets = [0, 0, 0], sizes = [2, 8, 16], strides = [1, 1, 1]} : vector<2x10x16xf32> to vector<2x8x16xf32>
    %21 = vector.extract_strided_slice %19 {offsets = [0, 1, 0], sizes = [2, 8, 16], strides = [1, 1, 1]} : vector<2x10x16xf32> to vector<2x8x16xf32>
    %22 = vector.extract_strided_slice %19 {offsets = [0, 2, 0], sizes = [2, 8, 16], strides = [1, 1, 1]} : vector<2x10x16xf32> to vector<2x8x16xf32>
    %23 = tpu.concatenate %20, %21, %22 in 2 : vector<2x8x16xf32>, vector<2x8x16xf32>, vector<2x8x16xf32> -> vector<2x8x48xf32>
    %24 = vector.shape_cast %23 : vector<2x8x48xf32> to vector<16x48xf32>
    %cst_10 = arith.constant dense<0.000000e+00> : vector<16x16xf32>
    %25 = tpu.matmul %24, %16, %cst_10 {dimension_numbers = #tpu.dot_dimension_numbers<[1], [0], [0], [1], [0, 0, 1, 1], [], []>} : vector<16x48xf32>, vector<48x16xf32>, vector<16x16xf32> -> vector<16x16xf32>
    %26 = vector.broadcast %17 : vector<1x16xf32> to vector<16x16xf32>
    %27 = arith.addf %25, %26 : vector<16x16xf32>
    %cst_11 = arith.constant 0.000000e+00 : f32
    %28 = vector.broadcast %cst_11 : f32 to vector<16x16xf32>
    %29 = arith.maximumf %27, %28 : vector<16x16xf32>
    %30 = vector.shape_cast %29 : vector<16x16xf32> to vector<2x8x16xf32>
    %c80 = arith.constant 80 : index
    %c0_12 = arith.constant 0 : index
    %31 = vector.load %arg1[%c80, %c0_12] : memref<608x256xf32, #tpu.memory_space<vmem>>, vector<16x256xf32>
    %c96 = arith.constant 96 : index
    %c0_13 = arith.constant 0 : index
    %32 = vector.load %arg1[%c96, %c0_13] : memref<608x256xf32, #tpu.memory_space<vmem>>, vector<1x256xf32>
    %c104 = arith.constant 104 : index
    %c0_14 = arith.constant 0 : index
    %33 = vector.load %arg1[%c104, %c0_14] : memref<608x256xf32, #tpu.memory_space<vmem>>, vector<64x256xf32>
    %34 = vector.shape_cast %30 : vector<2x8x16xf32> to vector<16x16xf32>
    %cst_15 = arith.constant dense<0.000000e+00> : vector<16x256xf32>
    %35 = tpu.matmul %34, %31, %cst_15 {dimension_numbers = #tpu.dot_dimension_numbers<[1], [0], [0], [1], [0, 0, 1, 1], [], []>} : vector<16x16xf32>, vector<16x256xf32>, vector<16x256xf32> -> vector<16x256xf32>
    %36 = vector.broadcast %32 : vector<1x256xf32> to vector<16x256xf32>
    %37 = arith.addf %35, %36 : vector<16x256xf32>
    %38 = vector.shape_cast %37 : vector<16x256xf32> to vector<2x8x256xf32>
    %cst_16 = arith.constant 0.000000e+00 : f32
    %39 = vector.broadcast %cst_16 : f32 to vector<2x64xf32>
    %cst_17 = arith.constant 0.000000e+00 : f32
    %40 = vector.broadcast %cst_17 : f32 to vector<2x32xf32>
    %cst_18 = arith.constant 0.000000e+00 : f32
    %41 = vector.broadcast %cst_18 : f32 to vector<2x32xf32>
    %42 = vector.extract_strided_slice %38 {offsets = [0, 0, 0], sizes = [2, 1, 128], strides = [1, 1, 1]} : vector<2x8x256xf32> to vector<2x1x128xf32>
    %43 = vector.shape_cast %42 : vector<2x1x128xf32> to vector<2x128xf32>
    %44 = vector.extract_strided_slice %38 {offsets = [0, 7, 128], sizes = [2, 1, 128], strides = [1, 1, 1]} : vector<2x8x256xf32> to vector<2x1x128xf32>
    %45 = vector.shape_cast %44 : vector<2x1x128xf32> to vector<2x128xf32>
    %46 = tpu.concatenate %43, %45 in 1 : vector<2x128xf32>, vector<2x128xf32> -> vector<2x256xf32>
    %cst_19 = arith.constant dense<0.000000e+00> : vector<2x256xf32>
    %47 = tpu.matmul %39, %33, %cst_19 {dimension_numbers = #tpu.dot_dimension_numbers<[1], [0], [0], [1], [0, 0, 1, 1], [], []>} : vector<2x64xf32>, vector<64x256xf32>, vector<2x256xf32> -> vector<2x256xf32>
    %48 = arith.addf %46, %47 : vector<2x256xf32>
    %49 = arith.negf %48 : vector<2x256xf32>
    %50 = math.exp %49 : vector<2x256xf32>
    %cst_20 = arith.constant 1.000000e+00 : f32
    %51 = vector.broadcast %cst_20 : f32 to vector<2x256xf32>
    %52 = arith.addf %51, %50 : vector<2x256xf32>
    %53 = arith.divf %51, %52 : vector<2x256xf32>
    %54 = math.tanh %48 : vector<2x256xf32>
    %55 = vector.extract_strided_slice %53 {offsets = [0, 0], sizes = [2, 32], strides = [1, 1]} : vector<2x256xf32> to vector<2x32xf32>
    %56 = vector.extract_strided_slice %53 {offsets = [0, 32], sizes = [2, 32], strides = [1, 1]} : vector<2x256xf32> to vector<2x32xf32>
    %57 = vector.extract_strided_slice %54 {offsets = [0, 64], sizes = [2, 32], strides = [1, 1]} : vector<2x256xf32> to vector<2x32xf32>
    %58 = vector.extract_strided_slice %53 {offsets = [0, 96], sizes = [2, 32], strides = [1, 1]} : vector<2x256xf32> to vector<2x32xf32>
    %59 = vector.extract_strided_slice %53 {offsets = [0, 128], sizes = [2, 32], strides = [1, 1]} : vector<2x256xf32> to vector<2x32xf32>
    %60 = vector.extract_strided_slice %53 {offsets = [0, 160], sizes = [2, 32], strides = [1, 1]} : vector<2x256xf32> to vector<2x32xf32>
    %61 = vector.extract_strided_slice %54 {offsets = [0, 192], sizes = [2, 32], strides = [1, 1]} : vector<2x256xf32> to vector<2x32xf32>
    %62 = vector.extract_strided_slice %53 {offsets = [0, 224], sizes = [2, 32], strides = [1, 1]} : vector<2x256xf32> to vector<2x32xf32>
    %63 = arith.mulf %56, %40 : vector<2x32xf32>
    %64 = arith.mulf %55, %57 : vector<2x32xf32>
    %65 = arith.addf %63, %64 : vector<2x32xf32>
    %66 = arith.mulf %60, %41 : vector<2x32xf32>
    %67 = arith.mulf %59, %61 : vector<2x32xf32>
    %68 = arith.addf %66, %67 : vector<2x32xf32>
    %69 = math.tanh %65 : vector<2x32xf32>
    %70 = arith.mulf %58, %69 : vector<2x32xf32>
    %71 = math.tanh %68 : vector<2x32xf32>
    %72 = arith.mulf %62, %71 : vector<2x32xf32>
    %73 = tpu.concatenate %70, %72 in 1 : vector<2x32xf32>, vector<2x32xf32> -> vector<2x64xf32>
    %74 = vector.extract_strided_slice %38 {offsets = [0, 1, 0], sizes = [2, 1, 128], strides = [1, 1, 1]} : vector<2x8x256xf32> to vector<2x1x128xf32>
    %75 = vector.shape_cast %74 : vector<2x1x128xf32> to vector<2x128xf32>
    %76 = vector.extract_strided_slice %38 {offsets = [0, 6, 128], sizes = [2, 1, 128], strides = [1, 1, 1]} : vector<2x8x256xf32> to vector<2x1x128xf32>
    %77 = vector.shape_cast %76 : vector<2x1x128xf32> to vector<2x128xf32>
    %78 = tpu.concatenate %75, %77 in 1 : vector<2x128xf32>, vector<2x128xf32> -> vector<2x256xf32>
    %cst_21 = arith.constant dense<0.000000e+00> : vector<2x256xf32>
    %79 = tpu.matmul %73, %33, %cst_21 {dimension_numbers = #tpu.dot_dimension_numbers<[1], [0], [0], [1], [0, 0, 1, 1], [], []>} : vector<2x64xf32>, vector<64x256xf32>, vector<2x256xf32> -> vector<2x256xf32>
    %80 = arith.addf %78, %79 : vector<2x256xf32>
    %81 = arith.negf %80 : vector<2x256xf32>
    %82 = math.exp %81 : vector<2x256xf32>
    %cst_22 = arith.constant 1.000000e+00 : f32
    %83 = vector.broadcast %cst_22 : f32 to vector<2x256xf32>
    %84 = arith.addf %83, %82 : vector<2x256xf32>
    %85 = arith.divf %83, %84 : vector<2x256xf32>
    %86 = math.tanh %80 : vector<2x256xf32>
    %87 = vector.extract_strided_slice %85 {offsets = [0, 0], sizes = [2, 32], strides = [1, 1]} : vector<2x256xf32> to vector<2x32xf32>
    %88 = vector.extract_strided_slice %85 {offsets = [0, 32], sizes = [2, 32], strides = [1, 1]} : vector<2x256xf32> to vector<2x32xf32>
    %89 = vector.extract_strided_slice %86 {offsets = [0, 64], sizes = [2, 32], strides = [1, 1]} : vector<2x256xf32> to vector<2x32xf32>
    %90 = vector.extract_strided_slice %85 {offsets = [0, 96], sizes = [2, 32], strides = [1, 1]} : vector<2x256xf32> to vector<2x32xf32>
    %91 = vector.extract_strided_slice %85 {offsets = [0, 128], sizes = [2, 32], strides = [1, 1]} : vector<2x256xf32> to vector<2x32xf32>
    %92 = vector.extract_strided_slice %85 {offsets = [0, 160], sizes = [2, 32], strides = [1, 1]} : vector<2x256xf32> to vector<2x32xf32>
    %93 = vector.extract_strided_slice %86 {offsets = [0, 192], sizes = [2, 32], strides = [1, 1]} : vector<2x256xf32> to vector<2x32xf32>
    %94 = vector.extract_strided_slice %85 {offsets = [0, 224], sizes = [2, 32], strides = [1, 1]} : vector<2x256xf32> to vector<2x32xf32>
    %95 = arith.mulf %88, %65 : vector<2x32xf32>
    %96 = arith.mulf %87, %89 : vector<2x32xf32>
    %97 = arith.addf %95, %96 : vector<2x32xf32>
    %98 = arith.mulf %92, %68 : vector<2x32xf32>
    %99 = arith.mulf %91, %93 : vector<2x32xf32>
    %100 = arith.addf %98, %99 : vector<2x32xf32>
    %101 = math.tanh %97 : vector<2x32xf32>
    %102 = arith.mulf %90, %101 : vector<2x32xf32>
    %103 = math.tanh %100 : vector<2x32xf32>
    %104 = arith.mulf %94, %103 : vector<2x32xf32>
    %105 = tpu.concatenate %102, %104 in 1 : vector<2x32xf32>, vector<2x32xf32> -> vector<2x64xf32>
    %106 = vector.extract_strided_slice %38 {offsets = [0, 2, 0], sizes = [2, 1, 128], strides = [1, 1, 1]} : vector<2x8x256xf32> to vector<2x1x128xf32>
    %107 = vector.shape_cast %106 : vector<2x1x128xf32> to vector<2x128xf32>
    %108 = vector.extract_strided_slice %38 {offsets = [0, 5, 128], sizes = [2, 1, 128], strides = [1, 1, 1]} : vector<2x8x256xf32> to vector<2x1x128xf32>
    %109 = vector.shape_cast %108 : vector<2x1x128xf32> to vector<2x128xf32>
    %110 = tpu.concatenate %107, %109 in 1 : vector<2x128xf32>, vector<2x128xf32> -> vector<2x256xf32>
    %cst_23 = arith.constant dense<0.000000e+00> : vector<2x256xf32>
    %111 = tpu.matmul %105, %33, %cst_23 {dimension_numbers = #tpu.dot_dimension_numbers<[1], [0], [0], [1], [0, 0, 1, 1], [], []>} : vector<2x64xf32>, vector<64x256xf32>, vector<2x256xf32> -> vector<2x256xf32>
    %112 = arith.addf %110, %111 : vector<2x256xf32>
    %113 = arith.negf %112 : vector<2x256xf32>
    %114 = math.exp %113 : vector<2x256xf32>
    %cst_24 = arith.constant 1.000000e+00 : f32
    %115 = vector.broadcast %cst_24 : f32 to vector<2x256xf32>
    %116 = arith.addf %115, %114 : vector<2x256xf32>
    %117 = arith.divf %115, %116 : vector<2x256xf32>
    %118 = math.tanh %112 : vector<2x256xf32>
    %119 = vector.extract_strided_slice %117 {offsets = [0, 0], sizes = [2, 32], strides = [1, 1]} : vector<2x256xf32> to vector<2x32xf32>
    %120 = vector.extract_strided_slice %117 {offsets = [0, 32], sizes = [2, 32], strides = [1, 1]} : vector<2x256xf32> to vector<2x32xf32>
    %121 = vector.extract_strided_slice %118 {offsets = [0, 64], sizes = [2, 32], strides = [1, 1]} : vector<2x256xf32> to vector<2x32xf32>
    %122 = vector.extract_strided_slice %117 {offsets = [0, 96], sizes = [2, 32], strides = [1, 1]} : vector<2x256xf32> to vector<2x32xf32>
    %123 = vector.extract_strided_slice %117 {offsets = [0, 128], sizes = [2, 32], strides = [1, 1]} : vector<2x256xf32> to vector<2x32xf32>
    %124 = vector.extract_strided_slice %117 {offsets = [0, 160], sizes = [2, 32], strides = [1, 1]} : vector<2x256xf32> to vector<2x32xf32>
    %125 = vector.extract_strided_slice %118 {offsets = [0, 192], sizes = [2, 32], strides = [1, 1]} : vector<2x256xf32> to vector<2x32xf32>
    %126 = vector.extract_strided_slice %117 {offsets = [0, 224], sizes = [2, 32], strides = [1, 1]} : vector<2x256xf32> to vector<2x32xf32>
    %127 = arith.mulf %120, %97 : vector<2x32xf32>
    %128 = arith.mulf %119, %121 : vector<2x32xf32>
    %129 = arith.addf %127, %128 : vector<2x32xf32>
    %130 = arith.mulf %124, %100 : vector<2x32xf32>
    %131 = arith.mulf %123, %125 : vector<2x32xf32>
    %132 = arith.addf %130, %131 : vector<2x32xf32>
    %133 = math.tanh %129 : vector<2x32xf32>
    %134 = arith.mulf %122, %133 : vector<2x32xf32>
    %135 = math.tanh %132 : vector<2x32xf32>
    %136 = arith.mulf %126, %135 : vector<2x32xf32>
    %137 = tpu.concatenate %134, %136 in 1 : vector<2x32xf32>, vector<2x32xf32> -> vector<2x64xf32>
    %138 = vector.extract_strided_slice %38 {offsets = [0, 3, 0], sizes = [2, 1, 128], strides = [1, 1, 1]} : vector<2x8x256xf32> to vector<2x1x128xf32>
    %139 = vector.shape_cast %138 : vector<2x1x128xf32> to vector<2x128xf32>
    %140 = vector.extract_strided_slice %38 {offsets = [0, 4, 128], sizes = [2, 1, 128], strides = [1, 1, 1]} : vector<2x8x256xf32> to vector<2x1x128xf32>
    %141 = vector.shape_cast %140 : vector<2x1x128xf32> to vector<2x128xf32>
    %142 = tpu.concatenate %139, %141 in 1 : vector<2x128xf32>, vector<2x128xf32> -> vector<2x256xf32>
    %cst_25 = arith.constant dense<0.000000e+00> : vector<2x256xf32>
    %143 = tpu.matmul %137, %33, %cst_25 {dimension_numbers = #tpu.dot_dimension_numbers<[1], [0], [0], [1], [0, 0, 1, 1], [], []>} : vector<2x64xf32>, vector<64x256xf32>, vector<2x256xf32> -> vector<2x256xf32>
    %144 = arith.addf %142, %143 : vector<2x256xf32>
    %145 = arith.negf %144 : vector<2x256xf32>
    %146 = math.exp %145 : vector<2x256xf32>
    %cst_26 = arith.constant 1.000000e+00 : f32
    %147 = vector.broadcast %cst_26 : f32 to vector<2x256xf32>
    %148 = arith.addf %147, %146 : vector<2x256xf32>
    %149 = arith.divf %147, %148 : vector<2x256xf32>
    %150 = math.tanh %144 : vector<2x256xf32>
    %151 = vector.extract_strided_slice %149 {offsets = [0, 0], sizes = [2, 32], strides = [1, 1]} : vector<2x256xf32> to vector<2x32xf32>
    %152 = vector.extract_strided_slice %149 {offsets = [0, 32], sizes = [2, 32], strides = [1, 1]} : vector<2x256xf32> to vector<2x32xf32>
    %153 = vector.extract_strided_slice %150 {offsets = [0, 64], sizes = [2, 32], strides = [1, 1]} : vector<2x256xf32> to vector<2x32xf32>
    %154 = vector.extract_strided_slice %149 {offsets = [0, 96], sizes = [2, 32], strides = [1, 1]} : vector<2x256xf32> to vector<2x32xf32>
    %155 = vector.extract_strided_slice %149 {offsets = [0, 128], sizes = [2, 32], strides = [1, 1]} : vector<2x256xf32> to vector<2x32xf32>
    %156 = vector.extract_strided_slice %149 {offsets = [0, 160], sizes = [2, 32], strides = [1, 1]} : vector<2x256xf32> to vector<2x32xf32>
    %157 = vector.extract_strided_slice %150 {offsets = [0, 192], sizes = [2, 32], strides = [1, 1]} : vector<2x256xf32> to vector<2x32xf32>
    %158 = vector.extract_strided_slice %149 {offsets = [0, 224], sizes = [2, 32], strides = [1, 1]} : vector<2x256xf32> to vector<2x32xf32>
    %159 = arith.mulf %152, %129 : vector<2x32xf32>
    %160 = arith.mulf %151, %153 : vector<2x32xf32>
    %161 = arith.addf %159, %160 : vector<2x32xf32>
    %162 = arith.mulf %156, %132 : vector<2x32xf32>
    %163 = arith.mulf %155, %157 : vector<2x32xf32>
    %164 = arith.addf %162, %163 : vector<2x32xf32>
    %165 = math.tanh %161 : vector<2x32xf32>
    %166 = arith.mulf %154, %165 : vector<2x32xf32>
    %167 = math.tanh %164 : vector<2x32xf32>
    %168 = arith.mulf %158, %167 : vector<2x32xf32>
    %169 = tpu.concatenate %166, %168 in 1 : vector<2x32xf32>, vector<2x32xf32> -> vector<2x64xf32>
    %170 = vector.extract_strided_slice %38 {offsets = [0, 4, 0], sizes = [2, 1, 128], strides = [1, 1, 1]} : vector<2x8x256xf32> to vector<2x1x128xf32>
    %171 = vector.shape_cast %170 : vector<2x1x128xf32> to vector<2x128xf32>
    %172 = vector.extract_strided_slice %38 {offsets = [0, 3, 128], sizes = [2, 1, 128], strides = [1, 1, 1]} : vector<2x8x256xf32> to vector<2x1x128xf32>
    %173 = vector.shape_cast %172 : vector<2x1x128xf32> to vector<2x128xf32>
    %174 = tpu.concatenate %171, %173 in 1 : vector<2x128xf32>, vector<2x128xf32> -> vector<2x256xf32>
    %cst_27 = arith.constant dense<0.000000e+00> : vector<2x256xf32>
    %175 = tpu.matmul %169, %33, %cst_27 {dimension_numbers = #tpu.dot_dimension_numbers<[1], [0], [0], [1], [0, 0, 1, 1], [], []>} : vector<2x64xf32>, vector<64x256xf32>, vector<2x256xf32> -> vector<2x256xf32>
    %176 = arith.addf %174, %175 : vector<2x256xf32>
    %177 = arith.negf %176 : vector<2x256xf32>
    %178 = math.exp %177 : vector<2x256xf32>
    %cst_28 = arith.constant 1.000000e+00 : f32
    %179 = vector.broadcast %cst_28 : f32 to vector<2x256xf32>
    %180 = arith.addf %179, %178 : vector<2x256xf32>
    %181 = arith.divf %179, %180 : vector<2x256xf32>
    %182 = math.tanh %176 : vector<2x256xf32>
    %183 = vector.extract_strided_slice %181 {offsets = [0, 0], sizes = [2, 32], strides = [1, 1]} : vector<2x256xf32> to vector<2x32xf32>
    %184 = vector.extract_strided_slice %181 {offsets = [0, 32], sizes = [2, 32], strides = [1, 1]} : vector<2x256xf32> to vector<2x32xf32>
    %185 = vector.extract_strided_slice %182 {offsets = [0, 64], sizes = [2, 32], strides = [1, 1]} : vector<2x256xf32> to vector<2x32xf32>
    %186 = vector.extract_strided_slice %181 {offsets = [0, 96], sizes = [2, 32], strides = [1, 1]} : vector<2x256xf32> to vector<2x32xf32>
    %187 = vector.extract_strided_slice %181 {offsets = [0, 128], sizes = [2, 32], strides = [1, 1]} : vector<2x256xf32> to vector<2x32xf32>
    %188 = vector.extract_strided_slice %181 {offsets = [0, 160], sizes = [2, 32], strides = [1, 1]} : vector<2x256xf32> to vector<2x32xf32>
    %189 = vector.extract_strided_slice %182 {offsets = [0, 192], sizes = [2, 32], strides = [1, 1]} : vector<2x256xf32> to vector<2x32xf32>
    %190 = vector.extract_strided_slice %181 {offsets = [0, 224], sizes = [2, 32], strides = [1, 1]} : vector<2x256xf32> to vector<2x32xf32>
    %191 = arith.mulf %184, %161 : vector<2x32xf32>
    %192 = arith.mulf %183, %185 : vector<2x32xf32>
    %193 = arith.addf %191, %192 : vector<2x32xf32>
    %194 = arith.mulf %188, %164 : vector<2x32xf32>
    %195 = arith.mulf %187, %189 : vector<2x32xf32>
    %196 = arith.addf %194, %195 : vector<2x32xf32>
    %197 = math.tanh %193 : vector<2x32xf32>
    %198 = arith.mulf %186, %197 : vector<2x32xf32>
    %199 = math.tanh %196 : vector<2x32xf32>
    %200 = arith.mulf %190, %199 : vector<2x32xf32>
    %201 = tpu.concatenate %198, %200 in 1 : vector<2x32xf32>, vector<2x32xf32> -> vector<2x64xf32>
    %202 = vector.extract_strided_slice %38 {offsets = [0, 5, 0], sizes = [2, 1, 128], strides = [1, 1, 1]} : vector<2x8x256xf32> to vector<2x1x128xf32>
    %203 = vector.shape_cast %202 : vector<2x1x128xf32> to vector<2x128xf32>
    %204 = vector.extract_strided_slice %38 {offsets = [0, 2, 128], sizes = [2, 1, 128], strides = [1, 1, 1]} : vector<2x8x256xf32> to vector<2x1x128xf32>
    %205 = vector.shape_cast %204 : vector<2x1x128xf32> to vector<2x128xf32>
    %206 = tpu.concatenate %203, %205 in 1 : vector<2x128xf32>, vector<2x128xf32> -> vector<2x256xf32>
    %cst_29 = arith.constant dense<0.000000e+00> : vector<2x256xf32>
    %207 = tpu.matmul %201, %33, %cst_29 {dimension_numbers = #tpu.dot_dimension_numbers<[1], [0], [0], [1], [0, 0, 1, 1], [], []>} : vector<2x64xf32>, vector<64x256xf32>, vector<2x256xf32> -> vector<2x256xf32>
    %208 = arith.addf %206, %207 : vector<2x256xf32>
    %209 = arith.negf %208 : vector<2x256xf32>
    %210 = math.exp %209 : vector<2x256xf32>
    %cst_30 = arith.constant 1.000000e+00 : f32
    %211 = vector.broadcast %cst_30 : f32 to vector<2x256xf32>
    %212 = arith.addf %211, %210 : vector<2x256xf32>
    %213 = arith.divf %211, %212 : vector<2x256xf32>
    %214 = math.tanh %208 : vector<2x256xf32>
    %215 = vector.extract_strided_slice %213 {offsets = [0, 0], sizes = [2, 32], strides = [1, 1]} : vector<2x256xf32> to vector<2x32xf32>
    %216 = vector.extract_strided_slice %213 {offsets = [0, 32], sizes = [2, 32], strides = [1, 1]} : vector<2x256xf32> to vector<2x32xf32>
    %217 = vector.extract_strided_slice %214 {offsets = [0, 64], sizes = [2, 32], strides = [1, 1]} : vector<2x256xf32> to vector<2x32xf32>
    %218 = vector.extract_strided_slice %213 {offsets = [0, 96], sizes = [2, 32], strides = [1, 1]} : vector<2x256xf32> to vector<2x32xf32>
    %219 = vector.extract_strided_slice %213 {offsets = [0, 128], sizes = [2, 32], strides = [1, 1]} : vector<2x256xf32> to vector<2x32xf32>
    %220 = vector.extract_strided_slice %213 {offsets = [0, 160], sizes = [2, 32], strides = [1, 1]} : vector<2x256xf32> to vector<2x32xf32>
    %221 = vector.extract_strided_slice %214 {offsets = [0, 192], sizes = [2, 32], strides = [1, 1]} : vector<2x256xf32> to vector<2x32xf32>
    %222 = vector.extract_strided_slice %213 {offsets = [0, 224], sizes = [2, 32], strides = [1, 1]} : vector<2x256xf32> to vector<2x32xf32>
    %223 = arith.mulf %216, %193 : vector<2x32xf32>
    %224 = arith.mulf %215, %217 : vector<2x32xf32>
    %225 = arith.addf %223, %224 : vector<2x32xf32>
    %226 = arith.mulf %220, %196 : vector<2x32xf32>
    %227 = arith.mulf %219, %221 : vector<2x32xf32>
    %228 = arith.addf %226, %227 : vector<2x32xf32>
    %229 = math.tanh %225 : vector<2x32xf32>
    %230 = arith.mulf %218, %229 : vector<2x32xf32>
    %231 = math.tanh %228 : vector<2x32xf32>
    %232 = arith.mulf %222, %231 : vector<2x32xf32>
    %233 = tpu.concatenate %230, %232 in 1 : vector<2x32xf32>, vector<2x32xf32> -> vector<2x64xf32>
    %234 = vector.extract_strided_slice %38 {offsets = [0, 6, 0], sizes = [2, 1, 128], strides = [1, 1, 1]} : vector<2x8x256xf32> to vector<2x1x128xf32>
    %235 = vector.shape_cast %234 : vector<2x1x128xf32> to vector<2x128xf32>
    %236 = vector.extract_strided_slice %38 {offsets = [0, 1, 128], sizes = [2, 1, 128], strides = [1, 1, 1]} : vector<2x8x256xf32> to vector<2x1x128xf32>
    %237 = vector.shape_cast %236 : vector<2x1x128xf32> to vector<2x128xf32>
    %238 = tpu.concatenate %235, %237 in 1 : vector<2x128xf32>, vector<2x128xf32> -> vector<2x256xf32>
    %cst_31 = arith.constant dense<0.000000e+00> : vector<2x256xf32>
    %239 = tpu.matmul %233, %33, %cst_31 {dimension_numbers = #tpu.dot_dimension_numbers<[1], [0], [0], [1], [0, 0, 1, 1], [], []>} : vector<2x64xf32>, vector<64x256xf32>, vector<2x256xf32> -> vector<2x256xf32>
    %240 = arith.addf %238, %239 : vector<2x256xf32>
    %241 = arith.negf %240 : vector<2x256xf32>
    %242 = math.exp %241 : vector<2x256xf32>
    %cst_32 = arith.constant 1.000000e+00 : f32
    %243 = vector.broadcast %cst_32 : f32 to vector<2x256xf32>
    %244 = arith.addf %243, %242 : vector<2x256xf32>
    %245 = arith.divf %243, %244 : vector<2x256xf32>
    %246 = math.tanh %240 : vector<2x256xf32>
    %247 = vector.extract_strided_slice %245 {offsets = [0, 0], sizes = [2, 32], strides = [1, 1]} : vector<2x256xf32> to vector<2x32xf32>
    %248 = vector.extract_strided_slice %245 {offsets = [0, 32], sizes = [2, 32], strides = [1, 1]} : vector<2x256xf32> to vector<2x32xf32>
    %249 = vector.extract_strided_slice %246 {offsets = [0, 64], sizes = [2, 32], strides = [1, 1]} : vector<2x256xf32> to vector<2x32xf32>
    %250 = vector.extract_strided_slice %245 {offsets = [0, 96], sizes = [2, 32], strides = [1, 1]} : vector<2x256xf32> to vector<2x32xf32>
    %251 = vector.extract_strided_slice %245 {offsets = [0, 128], sizes = [2, 32], strides = [1, 1]} : vector<2x256xf32> to vector<2x32xf32>
    %252 = vector.extract_strided_slice %245 {offsets = [0, 160], sizes = [2, 32], strides = [1, 1]} : vector<2x256xf32> to vector<2x32xf32>
    %253 = vector.extract_strided_slice %246 {offsets = [0, 192], sizes = [2, 32], strides = [1, 1]} : vector<2x256xf32> to vector<2x32xf32>
    %254 = vector.extract_strided_slice %245 {offsets = [0, 224], sizes = [2, 32], strides = [1, 1]} : vector<2x256xf32> to vector<2x32xf32>
    %255 = arith.mulf %248, %225 : vector<2x32xf32>
    %256 = arith.mulf %247, %249 : vector<2x32xf32>
    %257 = arith.addf %255, %256 : vector<2x32xf32>
    %258 = arith.mulf %252, %228 : vector<2x32xf32>
    %259 = arith.mulf %251, %253 : vector<2x32xf32>
    %260 = arith.addf %258, %259 : vector<2x32xf32>
    %261 = math.tanh %257 : vector<2x32xf32>
    %262 = arith.mulf %250, %261 : vector<2x32xf32>
    %263 = math.tanh %260 : vector<2x32xf32>
    %264 = arith.mulf %254, %263 : vector<2x32xf32>
    %265 = tpu.concatenate %262, %264 in 1 : vector<2x32xf32>, vector<2x32xf32> -> vector<2x64xf32>
    %266 = vector.extract_strided_slice %38 {offsets = [0, 7, 0], sizes = [2, 1, 128], strides = [1, 1, 1]} : vector<2x8x256xf32> to vector<2x1x128xf32>
    %267 = vector.shape_cast %266 : vector<2x1x128xf32> to vector<2x128xf32>
    %268 = vector.extract_strided_slice %38 {offsets = [0, 0, 128], sizes = [2, 1, 128], strides = [1, 1, 1]} : vector<2x8x256xf32> to vector<2x1x128xf32>
    %269 = vector.shape_cast %268 : vector<2x1x128xf32> to vector<2x128xf32>
    %270 = tpu.concatenate %267, %269 in 1 : vector<2x128xf32>, vector<2x128xf32> -> vector<2x256xf32>
    %cst_33 = arith.constant dense<0.000000e+00> : vector<2x256xf32>
    %271 = tpu.matmul %265, %33, %cst_33 {dimension_numbers = #tpu.dot_dimension_numbers<[1], [0], [0], [1], [0, 0, 1, 1], [], []>} : vector<2x64xf32>, vector<64x256xf32>, vector<2x256xf32> -> vector<2x256xf32>
    %272 = arith.addf %270, %271 : vector<2x256xf32>
    %273 = arith.negf %272 : vector<2x256xf32>
    %274 = math.exp %273 : vector<2x256xf32>
    %cst_34 = arith.constant 1.000000e+00 : f32
    %275 = vector.broadcast %cst_34 : f32 to vector<2x256xf32>
    %276 = arith.addf %275, %274 : vector<2x256xf32>
    %277 = arith.divf %275, %276 : vector<2x256xf32>
    %278 = math.tanh %272 : vector<2x256xf32>
    %279 = vector.extract_strided_slice %277 {offsets = [0, 0], sizes = [2, 32], strides = [1, 1]} : vector<2x256xf32> to vector<2x32xf32>
    %280 = vector.extract_strided_slice %277 {offsets = [0, 32], sizes = [2, 32], strides = [1, 1]} : vector<2x256xf32> to vector<2x32xf32>
    %281 = vector.extract_strided_slice %278 {offsets = [0, 64], sizes = [2, 32], strides = [1, 1]} : vector<2x256xf32> to vector<2x32xf32>
    %282 = vector.extract_strided_slice %277 {offsets = [0, 96], sizes = [2, 32], strides = [1, 1]} : vector<2x256xf32> to vector<2x32xf32>
    %283 = vector.extract_strided_slice %277 {offsets = [0, 128], sizes = [2, 32], strides = [1, 1]} : vector<2x256xf32> to vector<2x32xf32>
    %284 = vector.extract_strided_slice %277 {offsets = [0, 160], sizes = [2, 32], strides = [1, 1]} : vector<2x256xf32> to vector<2x32xf32>
    %285 = vector.extract_strided_slice %278 {offsets = [0, 192], sizes = [2, 32], strides = [1, 1]} : vector<2x256xf32> to vector<2x32xf32>
    %286 = vector.extract_strided_slice %277 {offsets = [0, 224], sizes = [2, 32], strides = [1, 1]} : vector<2x256xf32> to vector<2x32xf32>
    %287 = arith.mulf %280, %257 : vector<2x32xf32>
    %288 = arith.mulf %279, %281 : vector<2x32xf32>
    %289 = arith.addf %287, %288 : vector<2x32xf32>
    %290 = arith.mulf %284, %260 : vector<2x32xf32>
    %291 = arith.mulf %283, %285 : vector<2x32xf32>
    %292 = arith.addf %290, %291 : vector<2x32xf32>
    %293 = math.tanh %289 : vector<2x32xf32>
    %294 = arith.mulf %282, %293 : vector<2x32xf32>
    %295 = math.tanh %292 : vector<2x32xf32>
    %296 = arith.mulf %286, %295 : vector<2x32xf32>
    %297 = vector.shape_cast %70 : vector<2x32xf32> to vector<2x1x32xf32>
    %298 = vector.shape_cast %102 : vector<2x32xf32> to vector<2x1x32xf32>
    %299 = vector.shape_cast %134 : vector<2x32xf32> to vector<2x1x32xf32>
    %300 = vector.shape_cast %166 : vector<2x32xf32> to vector<2x1x32xf32>
    %301 = vector.shape_cast %198 : vector<2x32xf32> to vector<2x1x32xf32>
    %302 = vector.shape_cast %230 : vector<2x32xf32> to vector<2x1x32xf32>
    %303 = vector.shape_cast %262 : vector<2x32xf32> to vector<2x1x32xf32>
    %304 = vector.shape_cast %294 : vector<2x32xf32> to vector<2x1x32xf32>
    %305 = tpu.concatenate %297, %298, %299, %300, %301, %302, %303, %304 in 1 : vector<2x1x32xf32>, vector<2x1x32xf32>, vector<2x1x32xf32>, vector<2x1x32xf32>, vector<2x1x32xf32>, vector<2x1x32xf32>, vector<2x1x32xf32>, vector<2x1x32xf32> -> vector<2x8x32xf32>
    %306 = vector.shape_cast %296 : vector<2x32xf32> to vector<2x1x32xf32>
    %307 = vector.shape_cast %264 : vector<2x32xf32> to vector<2x1x32xf32>
    %308 = vector.shape_cast %232 : vector<2x32xf32> to vector<2x1x32xf32>
    %309 = vector.shape_cast %200 : vector<2x32xf32> to vector<2x1x32xf32>
    %310 = vector.shape_cast %168 : vector<2x32xf32> to vector<2x1x32xf32>
    %311 = vector.shape_cast %136 : vector<2x32xf32> to vector<2x1x32xf32>
    %312 = vector.shape_cast %104 : vector<2x32xf32> to vector<2x1x32xf32>
    %313 = vector.shape_cast %72 : vector<2x32xf32> to vector<2x1x32xf32>
    %314 = tpu.concatenate %306, %307, %308, %309, %310, %311, %312, %313 in 1 : vector<2x1x32xf32>, vector<2x1x32xf32>, vector<2x1x32xf32>, vector<2x1x32xf32>, vector<2x1x32xf32>, vector<2x1x32xf32>, vector<2x1x32xf32>, vector<2x1x32xf32> -> vector<2x8x32xf32>
    %315 = tpu.concatenate %305, %314 in 2 : vector<2x8x32xf32>, vector<2x8x32xf32> -> vector<2x8x64xf32>
    %c168 = arith.constant 168 : index
    %c0_35 = arith.constant 0 : index
    %316 = vector.load %arg1[%c168, %c0_35] : memref<608x256xf32, #tpu.memory_space<vmem>>, vector<64x256xf32>
    %c232 = arith.constant 232 : index
    %c0_36 = arith.constant 0 : index
    %317 = vector.load %arg1[%c232, %c0_36] : memref<608x256xf32, #tpu.memory_space<vmem>>, vector<1x256xf32>
    %c240 = arith.constant 240 : index
    %c0_37 = arith.constant 0 : index
    %318 = vector.load %arg1[%c240, %c0_37] : memref<608x256xf32, #tpu.memory_space<vmem>>, vector<64x256xf32>
    %319 = vector.shape_cast %315 : vector<2x8x64xf32> to vector<16x64xf32>
    %cst_38 = arith.constant dense<0.000000e+00> : vector<16x256xf32>
    %320 = tpu.matmul %319, %316, %cst_38 {dimension_numbers = #tpu.dot_dimension_numbers<[1], [0], [0], [1], [0, 0, 1, 1], [], []>} : vector<16x64xf32>, vector<64x256xf32>, vector<16x256xf32> -> vector<16x256xf32>
    %321 = vector.broadcast %317 : vector<1x256xf32> to vector<16x256xf32>
    %322 = arith.addf %320, %321 : vector<16x256xf32>
    %323 = vector.shape_cast %322 : vector<16x256xf32> to vector<2x8x256xf32>
    %cst_39 = arith.constant 0.000000e+00 : f32
    %324 = vector.broadcast %cst_39 : f32 to vector<2x64xf32>
    %cst_40 = arith.constant 0.000000e+00 : f32
    %325 = vector.broadcast %cst_40 : f32 to vector<2x32xf32>
    %cst_41 = arith.constant 0.000000e+00 : f32
    %326 = vector.broadcast %cst_41 : f32 to vector<2x32xf32>
    %327 = vector.extract_strided_slice %323 {offsets = [0, 0, 0], sizes = [2, 1, 128], strides = [1, 1, 1]} : vector<2x8x256xf32> to vector<2x1x128xf32>
    %328 = vector.shape_cast %327 : vector<2x1x128xf32> to vector<2x128xf32>
    %329 = vector.extract_strided_slice %323 {offsets = [0, 7, 128], sizes = [2, 1, 128], strides = [1, 1, 1]} : vector<2x8x256xf32> to vector<2x1x128xf32>
    %330 = vector.shape_cast %329 : vector<2x1x128xf32> to vector<2x128xf32>
    %331 = tpu.concatenate %328, %330 in 1 : vector<2x128xf32>, vector<2x128xf32> -> vector<2x256xf32>
    %cst_42 = arith.constant dense<0.000000e+00> : vector<2x256xf32>
    %332 = tpu.matmul %324, %318, %cst_42 {dimension_numbers = #tpu.dot_dimension_numbers<[1], [0], [0], [1], [0, 0, 1, 1], [], []>} : vector<2x64xf32>, vector<64x256xf32>, vector<2x256xf32> -> vector<2x256xf32>
    %333 = arith.addf %331, %332 : vector<2x256xf32>
    %334 = arith.negf %333 : vector<2x256xf32>
    %335 = math.exp %334 : vector<2x256xf32>
    %cst_43 = arith.constant 1.000000e+00 : f32
    %336 = vector.broadcast %cst_43 : f32 to vector<2x256xf32>
    %337 = arith.addf %336, %335 : vector<2x256xf32>
    %338 = arith.divf %336, %337 : vector<2x256xf32>
    %339 = math.tanh %333 : vector<2x256xf32>
    %340 = vector.extract_strided_slice %338 {offsets = [0, 0], sizes = [2, 32], strides = [1, 1]} : vector<2x256xf32> to vector<2x32xf32>
    %341 = vector.extract_strided_slice %338 {offsets = [0, 32], sizes = [2, 32], strides = [1, 1]} : vector<2x256xf32> to vector<2x32xf32>
    %342 = vector.extract_strided_slice %339 {offsets = [0, 64], sizes = [2, 32], strides = [1, 1]} : vector<2x256xf32> to vector<2x32xf32>
    %343 = vector.extract_strided_slice %338 {offsets = [0, 96], sizes = [2, 32], strides = [1, 1]} : vector<2x256xf32> to vector<2x32xf32>
    %344 = vector.extract_strided_slice %338 {offsets = [0, 128], sizes = [2, 32], strides = [1, 1]} : vector<2x256xf32> to vector<2x32xf32>
    %345 = vector.extract_strided_slice %338 {offsets = [0, 160], sizes = [2, 32], strides = [1, 1]} : vector<2x256xf32> to vector<2x32xf32>
    %346 = vector.extract_strided_slice %339 {offsets = [0, 192], sizes = [2, 32], strides = [1, 1]} : vector<2x256xf32> to vector<2x32xf32>
    %347 = vector.extract_strided_slice %338 {offsets = [0, 224], sizes = [2, 32], strides = [1, 1]} : vector<2x256xf32> to vector<2x32xf32>
    %348 = arith.mulf %341, %325 : vector<2x32xf32>
    %349 = arith.mulf %340, %342 : vector<2x32xf32>
    %350 = arith.addf %348, %349 : vector<2x32xf32>
    %351 = arith.mulf %345, %326 : vector<2x32xf32>
    %352 = arith.mulf %344, %346 : vector<2x32xf32>
    %353 = arith.addf %351, %352 : vector<2x32xf32>
    %354 = math.tanh %350 : vector<2x32xf32>
    %355 = arith.mulf %343, %354 : vector<2x32xf32>
    %356 = math.tanh %353 : vector<2x32xf32>
    %357 = arith.mulf %347, %356 : vector<2x32xf32>
    %358 = tpu.concatenate %355, %357 in 1 : vector<2x32xf32>, vector<2x32xf32> -> vector<2x64xf32>
    %359 = vector.extract_strided_slice %323 {offsets = [0, 1, 0], sizes = [2, 1, 128], strides = [1, 1, 1]} : vector<2x8x256xf32> to vector<2x1x128xf32>
    %360 = vector.shape_cast %359 : vector<2x1x128xf32> to vector<2x128xf32>
    %361 = vector.extract_strided_slice %323 {offsets = [0, 6, 128], sizes = [2, 1, 128], strides = [1, 1, 1]} : vector<2x8x256xf32> to vector<2x1x128xf32>
    %362 = vector.shape_cast %361 : vector<2x1x128xf32> to vector<2x128xf32>
    %363 = tpu.concatenate %360, %362 in 1 : vector<2x128xf32>, vector<2x128xf32> -> vector<2x256xf32>
    %cst_44 = arith.constant dense<0.000000e+00> : vector<2x256xf32>
    %364 = tpu.matmul %358, %318, %cst_44 {dimension_numbers = #tpu.dot_dimension_numbers<[1], [0], [0], [1], [0, 0, 1, 1], [], []>} : vector<2x64xf32>, vector<64x256xf32>, vector<2x256xf32> -> vector<2x256xf32>
    %365 = arith.addf %363, %364 : vector<2x256xf32>
    %366 = arith.negf %365 : vector<2x256xf32>
    %367 = math.exp %366 : vector<2x256xf32>
    %cst_45 = arith.constant 1.000000e+00 : f32
    %368 = vector.broadcast %cst_45 : f32 to vector<2x256xf32>
    %369 = arith.addf %368, %367 : vector<2x256xf32>
    %370 = arith.divf %368, %369 : vector<2x256xf32>
    %371 = math.tanh %365 : vector<2x256xf32>
    %372 = vector.extract_strided_slice %370 {offsets = [0, 0], sizes = [2, 32], strides = [1, 1]} : vector<2x256xf32> to vector<2x32xf32>
    %373 = vector.extract_strided_slice %370 {offsets = [0, 32], sizes = [2, 32], strides = [1, 1]} : vector<2x256xf32> to vector<2x32xf32>
    %374 = vector.extract_strided_slice %371 {offsets = [0, 64], sizes = [2, 32], strides = [1, 1]} : vector<2x256xf32> to vector<2x32xf32>
    %375 = vector.extract_strided_slice %370 {offsets = [0, 96], sizes = [2, 32], strides = [1, 1]} : vector<2x256xf32> to vector<2x32xf32>
    %376 = vector.extract_strided_slice %370 {offsets = [0, 128], sizes = [2, 32], strides = [1, 1]} : vector<2x256xf32> to vector<2x32xf32>
    %377 = vector.extract_strided_slice %370 {offsets = [0, 160], sizes = [2, 32], strides = [1, 1]} : vector<2x256xf32> to vector<2x32xf32>
    %378 = vector.extract_strided_slice %371 {offsets = [0, 192], sizes = [2, 32], strides = [1, 1]} : vector<2x256xf32> to vector<2x32xf32>
    %379 = vector.extract_strided_slice %370 {offsets = [0, 224], sizes = [2, 32], strides = [1, 1]} : vector<2x256xf32> to vector<2x32xf32>
    %380 = arith.mulf %373, %350 : vector<2x32xf32>
    %381 = arith.mulf %372, %374 : vector<2x32xf32>
    %382 = arith.addf %380, %381 : vector<2x32xf32>
    %383 = arith.mulf %377, %353 : vector<2x32xf32>
    %384 = arith.mulf %376, %378 : vector<2x32xf32>
    %385 = arith.addf %383, %384 : vector<2x32xf32>
    %386 = math.tanh %382 : vector<2x32xf32>
    %387 = arith.mulf %375, %386 : vector<2x32xf32>
    %388 = math.tanh %385 : vector<2x32xf32>
    %389 = arith.mulf %379, %388 : vector<2x32xf32>
    %390 = tpu.concatenate %387, %389 in 1 : vector<2x32xf32>, vector<2x32xf32> -> vector<2x64xf32>
    %391 = vector.extract_strided_slice %323 {offsets = [0, 2, 0], sizes = [2, 1, 128], strides = [1, 1, 1]} : vector<2x8x256xf32> to vector<2x1x128xf32>
    %392 = vector.shape_cast %391 : vector<2x1x128xf32> to vector<2x128xf32>
    %393 = vector.extract_strided_slice %323 {offsets = [0, 5, 128], sizes = [2, 1, 128], strides = [1, 1, 1]} : vector<2x8x256xf32> to vector<2x1x128xf32>
    %394 = vector.shape_cast %393 : vector<2x1x128xf32> to vector<2x128xf32>
    %395 = tpu.concatenate %392, %394 in 1 : vector<2x128xf32>, vector<2x128xf32> -> vector<2x256xf32>
    %cst_46 = arith.constant dense<0.000000e+00> : vector<2x256xf32>
    %396 = tpu.matmul %390, %318, %cst_46 {dimension_numbers = #tpu.dot_dimension_numbers<[1], [0], [0], [1], [0, 0, 1, 1], [], []>} : vector<2x64xf32>, vector<64x256xf32>, vector<2x256xf32> -> vector<2x256xf32>
    %397 = arith.addf %395, %396 : vector<2x256xf32>
    %398 = arith.negf %397 : vector<2x256xf32>
    %399 = math.exp %398 : vector<2x256xf32>
    %cst_47 = arith.constant 1.000000e+00 : f32
    %400 = vector.broadcast %cst_47 : f32 to vector<2x256xf32>
    %401 = arith.addf %400, %399 : vector<2x256xf32>
    %402 = arith.divf %400, %401 : vector<2x256xf32>
    %403 = math.tanh %397 : vector<2x256xf32>
    %404 = vector.extract_strided_slice %402 {offsets = [0, 0], sizes = [2, 32], strides = [1, 1]} : vector<2x256xf32> to vector<2x32xf32>
    %405 = vector.extract_strided_slice %402 {offsets = [0, 32], sizes = [2, 32], strides = [1, 1]} : vector<2x256xf32> to vector<2x32xf32>
    %406 = vector.extract_strided_slice %403 {offsets = [0, 64], sizes = [2, 32], strides = [1, 1]} : vector<2x256xf32> to vector<2x32xf32>
    %407 = vector.extract_strided_slice %402 {offsets = [0, 96], sizes = [2, 32], strides = [1, 1]} : vector<2x256xf32> to vector<2x32xf32>
    %408 = vector.extract_strided_slice %402 {offsets = [0, 128], sizes = [2, 32], strides = [1, 1]} : vector<2x256xf32> to vector<2x32xf32>
    %409 = vector.extract_strided_slice %402 {offsets = [0, 160], sizes = [2, 32], strides = [1, 1]} : vector<2x256xf32> to vector<2x32xf32>
    %410 = vector.extract_strided_slice %403 {offsets = [0, 192], sizes = [2, 32], strides = [1, 1]} : vector<2x256xf32> to vector<2x32xf32>
    %411 = vector.extract_strided_slice %402 {offsets = [0, 224], sizes = [2, 32], strides = [1, 1]} : vector<2x256xf32> to vector<2x32xf32>
    %412 = arith.mulf %405, %382 : vector<2x32xf32>
    %413 = arith.mulf %404, %406 : vector<2x32xf32>
    %414 = arith.addf %412, %413 : vector<2x32xf32>
    %415 = arith.mulf %409, %385 : vector<2x32xf32>
    %416 = arith.mulf %408, %410 : vector<2x32xf32>
    %417 = arith.addf %415, %416 : vector<2x32xf32>
    %418 = math.tanh %414 : vector<2x32xf32>
    %419 = arith.mulf %407, %418 : vector<2x32xf32>
    %420 = math.tanh %417 : vector<2x32xf32>
    %421 = arith.mulf %411, %420 : vector<2x32xf32>
    %422 = tpu.concatenate %419, %421 in 1 : vector<2x32xf32>, vector<2x32xf32> -> vector<2x64xf32>
    %423 = vector.extract_strided_slice %323 {offsets = [0, 3, 0], sizes = [2, 1, 128], strides = [1, 1, 1]} : vector<2x8x256xf32> to vector<2x1x128xf32>
    %424 = vector.shape_cast %423 : vector<2x1x128xf32> to vector<2x128xf32>
    %425 = vector.extract_strided_slice %323 {offsets = [0, 4, 128], sizes = [2, 1, 128], strides = [1, 1, 1]} : vector<2x8x256xf32> to vector<2x1x128xf32>
    %426 = vector.shape_cast %425 : vector<2x1x128xf32> to vector<2x128xf32>
    %427 = tpu.concatenate %424, %426 in 1 : vector<2x128xf32>, vector<2x128xf32> -> vector<2x256xf32>
    %cst_48 = arith.constant dense<0.000000e+00> : vector<2x256xf32>
    %428 = tpu.matmul %422, %318, %cst_48 {dimension_numbers = #tpu.dot_dimension_numbers<[1], [0], [0], [1], [0, 0, 1, 1], [], []>} : vector<2x64xf32>, vector<64x256xf32>, vector<2x256xf32> -> vector<2x256xf32>
    %429 = arith.addf %427, %428 : vector<2x256xf32>
    %430 = arith.negf %429 : vector<2x256xf32>
    %431 = math.exp %430 : vector<2x256xf32>
    %cst_49 = arith.constant 1.000000e+00 : f32
    %432 = vector.broadcast %cst_49 : f32 to vector<2x256xf32>
    %433 = arith.addf %432, %431 : vector<2x256xf32>
    %434 = arith.divf %432, %433 : vector<2x256xf32>
    %435 = math.tanh %429 : vector<2x256xf32>
    %436 = vector.extract_strided_slice %434 {offsets = [0, 0], sizes = [2, 32], strides = [1, 1]} : vector<2x256xf32> to vector<2x32xf32>
    %437 = vector.extract_strided_slice %434 {offsets = [0, 32], sizes = [2, 32], strides = [1, 1]} : vector<2x256xf32> to vector<2x32xf32>
    %438 = vector.extract_strided_slice %435 {offsets = [0, 64], sizes = [2, 32], strides = [1, 1]} : vector<2x256xf32> to vector<2x32xf32>
    %439 = vector.extract_strided_slice %434 {offsets = [0, 96], sizes = [2, 32], strides = [1, 1]} : vector<2x256xf32> to vector<2x32xf32>
    %440 = vector.extract_strided_slice %434 {offsets = [0, 128], sizes = [2, 32], strides = [1, 1]} : vector<2x256xf32> to vector<2x32xf32>
    %441 = vector.extract_strided_slice %434 {offsets = [0, 160], sizes = [2, 32], strides = [1, 1]} : vector<2x256xf32> to vector<2x32xf32>
    %442 = vector.extract_strided_slice %435 {offsets = [0, 192], sizes = [2, 32], strides = [1, 1]} : vector<2x256xf32> to vector<2x32xf32>
    %443 = vector.extract_strided_slice %434 {offsets = [0, 224], sizes = [2, 32], strides = [1, 1]} : vector<2x256xf32> to vector<2x32xf32>
    %444 = arith.mulf %437, %414 : vector<2x32xf32>
    %445 = arith.mulf %436, %438 : vector<2x32xf32>
    %446 = arith.addf %444, %445 : vector<2x32xf32>
    %447 = arith.mulf %441, %417 : vector<2x32xf32>
    %448 = arith.mulf %440, %442 : vector<2x32xf32>
    %449 = arith.addf %447, %448 : vector<2x32xf32>
    %450 = math.tanh %446 : vector<2x32xf32>
    %451 = arith.mulf %439, %450 : vector<2x32xf32>
    %452 = math.tanh %449 : vector<2x32xf32>
    %453 = arith.mulf %443, %452 : vector<2x32xf32>
    %454 = tpu.concatenate %451, %453 in 1 : vector<2x32xf32>, vector<2x32xf32> -> vector<2x64xf32>
    %455 = vector.extract_strided_slice %323 {offsets = [0, 4, 0], sizes = [2, 1, 128], strides = [1, 1, 1]} : vector<2x8x256xf32> to vector<2x1x128xf32>
    %456 = vector.shape_cast %455 : vector<2x1x128xf32> to vector<2x128xf32>
    %457 = vector.extract_strided_slice %323 {offsets = [0, 3, 128], sizes = [2, 1, 128], strides = [1, 1, 1]} : vector<2x8x256xf32> to vector<2x1x128xf32>
    %458 = vector.shape_cast %457 : vector<2x1x128xf32> to vector<2x128xf32>
    %459 = tpu.concatenate %456, %458 in 1 : vector<2x128xf32>, vector<2x128xf32> -> vector<2x256xf32>
    %cst_50 = arith.constant dense<0.000000e+00> : vector<2x256xf32>
    %460 = tpu.matmul %454, %318, %cst_50 {dimension_numbers = #tpu.dot_dimension_numbers<[1], [0], [0], [1], [0, 0, 1, 1], [], []>} : vector<2x64xf32>, vector<64x256xf32>, vector<2x256xf32> -> vector<2x256xf32>
    %461 = arith.addf %459, %460 : vector<2x256xf32>
    %462 = arith.negf %461 : vector<2x256xf32>
    %463 = math.exp %462 : vector<2x256xf32>
    %cst_51 = arith.constant 1.000000e+00 : f32
    %464 = vector.broadcast %cst_51 : f32 to vector<2x256xf32>
    %465 = arith.addf %464, %463 : vector<2x256xf32>
    %466 = arith.divf %464, %465 : vector<2x256xf32>
    %467 = math.tanh %461 : vector<2x256xf32>
    %468 = vector.extract_strided_slice %466 {offsets = [0, 0], sizes = [2, 32], strides = [1, 1]} : vector<2x256xf32> to vector<2x32xf32>
    %469 = vector.extract_strided_slice %466 {offsets = [0, 32], sizes = [2, 32], strides = [1, 1]} : vector<2x256xf32> to vector<2x32xf32>
    %470 = vector.extract_strided_slice %467 {offsets = [0, 64], sizes = [2, 32], strides = [1, 1]} : vector<2x256xf32> to vector<2x32xf32>
    %471 = vector.extract_strided_slice %466 {offsets = [0, 96], sizes = [2, 32], strides = [1, 1]} : vector<2x256xf32> to vector<2x32xf32>
    %472 = vector.extract_strided_slice %466 {offsets = [0, 128], sizes = [2, 32], strides = [1, 1]} : vector<2x256xf32> to vector<2x32xf32>
    %473 = vector.extract_strided_slice %466 {offsets = [0, 160], sizes = [2, 32], strides = [1, 1]} : vector<2x256xf32> to vector<2x32xf32>
    %474 = vector.extract_strided_slice %467 {offsets = [0, 192], sizes = [2, 32], strides = [1, 1]} : vector<2x256xf32> to vector<2x32xf32>
    %475 = vector.extract_strided_slice %466 {offsets = [0, 224], sizes = [2, 32], strides = [1, 1]} : vector<2x256xf32> to vector<2x32xf32>
    %476 = arith.mulf %469, %446 : vector<2x32xf32>
    %477 = arith.mulf %468, %470 : vector<2x32xf32>
    %478 = arith.addf %476, %477 : vector<2x32xf32>
    %479 = arith.mulf %473, %449 : vector<2x32xf32>
    %480 = arith.mulf %472, %474 : vector<2x32xf32>
    %481 = arith.addf %479, %480 : vector<2x32xf32>
    %482 = math.tanh %478 : vector<2x32xf32>
    %483 = arith.mulf %471, %482 : vector<2x32xf32>
    %484 = math.tanh %481 : vector<2x32xf32>
    %485 = arith.mulf %475, %484 : vector<2x32xf32>
    %486 = tpu.concatenate %483, %485 in 1 : vector<2x32xf32>, vector<2x32xf32> -> vector<2x64xf32>
    %487 = vector.extract_strided_slice %323 {offsets = [0, 5, 0], sizes = [2, 1, 128], strides = [1, 1, 1]} : vector<2x8x256xf32> to vector<2x1x128xf32>
    %488 = vector.shape_cast %487 : vector<2x1x128xf32> to vector<2x128xf32>
    %489 = vector.extract_strided_slice %323 {offsets = [0, 2, 128], sizes = [2, 1, 128], strides = [1, 1, 1]} : vector<2x8x256xf32> to vector<2x1x128xf32>
    %490 = vector.shape_cast %489 : vector<2x1x128xf32> to vector<2x128xf32>
    %491 = tpu.concatenate %488, %490 in 1 : vector<2x128xf32>, vector<2x128xf32> -> vector<2x256xf32>
    %cst_52 = arith.constant dense<0.000000e+00> : vector<2x256xf32>
    %492 = tpu.matmul %486, %318, %cst_52 {dimension_numbers = #tpu.dot_dimension_numbers<[1], [0], [0], [1], [0, 0, 1, 1], [], []>} : vector<2x64xf32>, vector<64x256xf32>, vector<2x256xf32> -> vector<2x256xf32>
    %493 = arith.addf %491, %492 : vector<2x256xf32>
    %494 = arith.negf %493 : vector<2x256xf32>
    %495 = math.exp %494 : vector<2x256xf32>
    %cst_53 = arith.constant 1.000000e+00 : f32
    %496 = vector.broadcast %cst_53 : f32 to vector<2x256xf32>
    %497 = arith.addf %496, %495 : vector<2x256xf32>
    %498 = arith.divf %496, %497 : vector<2x256xf32>
    %499 = math.tanh %493 : vector<2x256xf32>
    %500 = vector.extract_strided_slice %498 {offsets = [0, 0], sizes = [2, 32], strides = [1, 1]} : vector<2x256xf32> to vector<2x32xf32>
    %501 = vector.extract_strided_slice %498 {offsets = [0, 32], sizes = [2, 32], strides = [1, 1]} : vector<2x256xf32> to vector<2x32xf32>
    %502 = vector.extract_strided_slice %499 {offsets = [0, 64], sizes = [2, 32], strides = [1, 1]} : vector<2x256xf32> to vector<2x32xf32>
    %503 = vector.extract_strided_slice %498 {offsets = [0, 96], sizes = [2, 32], strides = [1, 1]} : vector<2x256xf32> to vector<2x32xf32>
    %504 = vector.extract_strided_slice %498 {offsets = [0, 128], sizes = [2, 32], strides = [1, 1]} : vector<2x256xf32> to vector<2x32xf32>
    %505 = vector.extract_strided_slice %498 {offsets = [0, 160], sizes = [2, 32], strides = [1, 1]} : vector<2x256xf32> to vector<2x32xf32>
    %506 = vector.extract_strided_slice %499 {offsets = [0, 192], sizes = [2, 32], strides = [1, 1]} : vector<2x256xf32> to vector<2x32xf32>
    %507 = vector.extract_strided_slice %498 {offsets = [0, 224], sizes = [2, 32], strides = [1, 1]} : vector<2x256xf32> to vector<2x32xf32>
    %508 = arith.mulf %501, %478 : vector<2x32xf32>
    %509 = arith.mulf %500, %502 : vector<2x32xf32>
    %510 = arith.addf %508, %509 : vector<2x32xf32>
    %511 = arith.mulf %505, %481 : vector<2x32xf32>
    %512 = arith.mulf %504, %506 : vector<2x32xf32>
    %513 = arith.addf %511, %512 : vector<2x32xf32>
    %514 = math.tanh %510 : vector<2x32xf32>
    %515 = arith.mulf %503, %514 : vector<2x32xf32>
    %516 = math.tanh %513 : vector<2x32xf32>
    %517 = arith.mulf %507, %516 : vector<2x32xf32>
    %518 = tpu.concatenate %515, %517 in 1 : vector<2x32xf32>, vector<2x32xf32> -> vector<2x64xf32>
    %519 = vector.extract_strided_slice %323 {offsets = [0, 6, 0], sizes = [2, 1, 128], strides = [1, 1, 1]} : vector<2x8x256xf32> to vector<2x1x128xf32>
    %520 = vector.shape_cast %519 : vector<2x1x128xf32> to vector<2x128xf32>
    %521 = vector.extract_strided_slice %323 {offsets = [0, 1, 128], sizes = [2, 1, 128], strides = [1, 1, 1]} : vector<2x8x256xf32> to vector<2x1x128xf32>
    %522 = vector.shape_cast %521 : vector<2x1x128xf32> to vector<2x128xf32>
    %523 = tpu.concatenate %520, %522 in 1 : vector<2x128xf32>, vector<2x128xf32> -> vector<2x256xf32>
    %cst_54 = arith.constant dense<0.000000e+00> : vector<2x256xf32>
    %524 = tpu.matmul %518, %318, %cst_54 {dimension_numbers = #tpu.dot_dimension_numbers<[1], [0], [0], [1], [0, 0, 1, 1], [], []>} : vector<2x64xf32>, vector<64x256xf32>, vector<2x256xf32> -> vector<2x256xf32>
    %525 = arith.addf %523, %524 : vector<2x256xf32>
    %526 = arith.negf %525 : vector<2x256xf32>
    %527 = math.exp %526 : vector<2x256xf32>
    %cst_55 = arith.constant 1.000000e+00 : f32
    %528 = vector.broadcast %cst_55 : f32 to vector<2x256xf32>
    %529 = arith.addf %528, %527 : vector<2x256xf32>
    %530 = arith.divf %528, %529 : vector<2x256xf32>
    %531 = math.tanh %525 : vector<2x256xf32>
    %532 = vector.extract_strided_slice %530 {offsets = [0, 0], sizes = [2, 32], strides = [1, 1]} : vector<2x256xf32> to vector<2x32xf32>
    %533 = vector.extract_strided_slice %530 {offsets = [0, 32], sizes = [2, 32], strides = [1, 1]} : vector<2x256xf32> to vector<2x32xf32>
    %534 = vector.extract_strided_slice %531 {offsets = [0, 64], sizes = [2, 32], strides = [1, 1]} : vector<2x256xf32> to vector<2x32xf32>
    %535 = vector.extract_strided_slice %530 {offsets = [0, 96], sizes = [2, 32], strides = [1, 1]} : vector<2x256xf32> to vector<2x32xf32>
    %536 = vector.extract_strided_slice %530 {offsets = [0, 128], sizes = [2, 32], strides = [1, 1]} : vector<2x256xf32> to vector<2x32xf32>
    %537 = vector.extract_strided_slice %530 {offsets = [0, 160], sizes = [2, 32], strides = [1, 1]} : vector<2x256xf32> to vector<2x32xf32>
    %538 = vector.extract_strided_slice %531 {offsets = [0, 192], sizes = [2, 32], strides = [1, 1]} : vector<2x256xf32> to vector<2x32xf32>
    %539 = vector.extract_strided_slice %530 {offsets = [0, 224], sizes = [2, 32], strides = [1, 1]} : vector<2x256xf32> to vector<2x32xf32>
    %540 = arith.mulf %533, %510 : vector<2x32xf32>
    %541 = arith.mulf %532, %534 : vector<2x32xf32>
    %542 = arith.addf %540, %541 : vector<2x32xf32>
    %543 = arith.mulf %537, %513 : vector<2x32xf32>
    %544 = arith.mulf %536, %538 : vector<2x32xf32>
    %545 = arith.addf %543, %544 : vector<2x32xf32>
    %546 = math.tanh %542 : vector<2x32xf32>
    %547 = arith.mulf %535, %546 : vector<2x32xf32>
    %548 = math.tanh %545 : vector<2x32xf32>
    %549 = arith.mulf %539, %548 : vector<2x32xf32>
    %550 = tpu.concatenate %547, %549 in 1 : vector<2x32xf32>, vector<2x32xf32> -> vector<2x64xf32>
    %551 = vector.extract_strided_slice %323 {offsets = [0, 7, 0], sizes = [2, 1, 128], strides = [1, 1, 1]} : vector<2x8x256xf32> to vector<2x1x128xf32>
    %552 = vector.shape_cast %551 : vector<2x1x128xf32> to vector<2x128xf32>
    %553 = vector.extract_strided_slice %323 {offsets = [0, 0, 128], sizes = [2, 1, 128], strides = [1, 1, 1]} : vector<2x8x256xf32> to vector<2x1x128xf32>
    %554 = vector.shape_cast %553 : vector<2x1x128xf32> to vector<2x128xf32>
    %555 = tpu.concatenate %552, %554 in 1 : vector<2x128xf32>, vector<2x128xf32> -> vector<2x256xf32>
    %cst_56 = arith.constant dense<0.000000e+00> : vector<2x256xf32>
    %556 = tpu.matmul %550, %318, %cst_56 {dimension_numbers = #tpu.dot_dimension_numbers<[1], [0], [0], [1], [0, 0, 1, 1], [], []>} : vector<2x64xf32>, vector<64x256xf32>, vector<2x256xf32> -> vector<2x256xf32>
    %557 = arith.addf %555, %556 : vector<2x256xf32>
    %558 = arith.negf %557 : vector<2x256xf32>
    %559 = math.exp %558 : vector<2x256xf32>
    %cst_57 = arith.constant 1.000000e+00 : f32
    %560 = vector.broadcast %cst_57 : f32 to vector<2x256xf32>
    %561 = arith.addf %560, %559 : vector<2x256xf32>
    %562 = arith.divf %560, %561 : vector<2x256xf32>
    %563 = math.tanh %557 : vector<2x256xf32>
    %564 = vector.extract_strided_slice %562 {offsets = [0, 0], sizes = [2, 32], strides = [1, 1]} : vector<2x256xf32> to vector<2x32xf32>
    %565 = vector.extract_strided_slice %562 {offsets = [0, 32], sizes = [2, 32], strides = [1, 1]} : vector<2x256xf32> to vector<2x32xf32>
    %566 = vector.extract_strided_slice %563 {offsets = [0, 64], sizes = [2, 32], strides = [1, 1]} : vector<2x256xf32> to vector<2x32xf32>
    %567 = vector.extract_strided_slice %562 {offsets = [0, 96], sizes = [2, 32], strides = [1, 1]} : vector<2x256xf32> to vector<2x32xf32>
    %568 = vector.extract_strided_slice %562 {offsets = [0, 128], sizes = [2, 32], strides = [1, 1]} : vector<2x256xf32> to vector<2x32xf32>
    %569 = vector.extract_strided_slice %562 {offsets = [0, 160], sizes = [2, 32], strides = [1, 1]} : vector<2x256xf32> to vector<2x32xf32>
    %570 = vector.extract_strided_slice %563 {offsets = [0, 192], sizes = [2, 32], strides = [1, 1]} : vector<2x256xf32> to vector<2x32xf32>
    %571 = vector.extract_strided_slice %562 {offsets = [0, 224], sizes = [2, 32], strides = [1, 1]} : vector<2x256xf32> to vector<2x32xf32>
    %572 = arith.mulf %565, %542 : vector<2x32xf32>
    %573 = arith.mulf %564, %566 : vector<2x32xf32>
    %574 = arith.addf %572, %573 : vector<2x32xf32>
    %575 = arith.mulf %569, %545 : vector<2x32xf32>
    %576 = arith.mulf %568, %570 : vector<2x32xf32>
    %577 = arith.addf %575, %576 : vector<2x32xf32>
    %578 = math.tanh %574 : vector<2x32xf32>
    %579 = arith.mulf %567, %578 : vector<2x32xf32>
    %580 = math.tanh %577 : vector<2x32xf32>
    %581 = arith.mulf %571, %580 : vector<2x32xf32>
    %582 = vector.shape_cast %355 : vector<2x32xf32> to vector<2x1x32xf32>
    %583 = vector.shape_cast %387 : vector<2x32xf32> to vector<2x1x32xf32>
    %584 = vector.shape_cast %419 : vector<2x32xf32> to vector<2x1x32xf32>
    %585 = vector.shape_cast %451 : vector<2x32xf32> to vector<2x1x32xf32>
    %586 = vector.shape_cast %483 : vector<2x32xf32> to vector<2x1x32xf32>
    %587 = vector.shape_cast %515 : vector<2x32xf32> to vector<2x1x32xf32>
    %588 = vector.shape_cast %547 : vector<2x32xf32> to vector<2x1x32xf32>
    %589 = vector.shape_cast %579 : vector<2x32xf32> to vector<2x1x32xf32>
    %590 = tpu.concatenate %582, %583, %584, %585, %586, %587, %588, %589 in 1 : vector<2x1x32xf32>, vector<2x1x32xf32>, vector<2x1x32xf32>, vector<2x1x32xf32>, vector<2x1x32xf32>, vector<2x1x32xf32>, vector<2x1x32xf32>, vector<2x1x32xf32> -> vector<2x8x32xf32>
    %591 = vector.shape_cast %581 : vector<2x32xf32> to vector<2x1x32xf32>
    %592 = vector.shape_cast %549 : vector<2x32xf32> to vector<2x1x32xf32>
    %593 = vector.shape_cast %517 : vector<2x32xf32> to vector<2x1x32xf32>
    %594 = vector.shape_cast %485 : vector<2x32xf32> to vector<2x1x32xf32>
    %595 = vector.shape_cast %453 : vector<2x32xf32> to vector<2x1x32xf32>
    %596 = vector.shape_cast %421 : vector<2x32xf32> to vector<2x1x32xf32>
    %597 = vector.shape_cast %389 : vector<2x32xf32> to vector<2x1x32xf32>
    %598 = vector.shape_cast %357 : vector<2x32xf32> to vector<2x1x32xf32>
    %599 = tpu.concatenate %591, %592, %593, %594, %595, %596, %597, %598 in 1 : vector<2x1x32xf32>, vector<2x1x32xf32>, vector<2x1x32xf32>, vector<2x1x32xf32>, vector<2x1x32xf32>, vector<2x1x32xf32>, vector<2x1x32xf32>, vector<2x1x32xf32> -> vector<2x8x32xf32>
    %600 = tpu.concatenate %590, %599 in 2 : vector<2x8x32xf32>, vector<2x8x32xf32> -> vector<2x8x64xf32>
    %c304 = arith.constant 304 : index
    %c0_58 = arith.constant 0 : index
    %601 = vector.load %arg1[%c304, %c0_58] : memref<608x256xf32, #tpu.memory_space<vmem>>, vector<64x256xf32>
    %c368 = arith.constant 368 : index
    %c0_59 = arith.constant 0 : index
    %602 = vector.load %arg1[%c368, %c0_59] : memref<608x256xf32, #tpu.memory_space<vmem>>, vector<1x256xf32>
    %c376 = arith.constant 376 : index
    %c0_60 = arith.constant 0 : index
    %603 = vector.load %arg1[%c376, %c0_60] : memref<608x256xf32, #tpu.memory_space<vmem>>, vector<64x256xf32>
    %604 = vector.shape_cast %600 : vector<2x8x64xf32> to vector<16x64xf32>
    %cst_61 = arith.constant dense<0.000000e+00> : vector<16x256xf32>
    %605 = tpu.matmul %604, %601, %cst_61 {dimension_numbers = #tpu.dot_dimension_numbers<[1], [0], [0], [1], [0, 0, 1, 1], [], []>} : vector<16x64xf32>, vector<64x256xf32>, vector<16x256xf32> -> vector<16x256xf32>
    %606 = vector.broadcast %602 : vector<1x256xf32> to vector<16x256xf32>
    %607 = arith.addf %605, %606 : vector<16x256xf32>
    %608 = vector.shape_cast %607 : vector<16x256xf32> to vector<2x8x256xf32>
    %cst_62 = arith.constant 0.000000e+00 : f32
    %609 = vector.broadcast %cst_62 : f32 to vector<2x64xf32>
    %cst_63 = arith.constant 0.000000e+00 : f32
    %610 = vector.broadcast %cst_63 : f32 to vector<2x32xf32>
    %cst_64 = arith.constant 0.000000e+00 : f32
    %611 = vector.broadcast %cst_64 : f32 to vector<2x32xf32>
    %612 = vector.extract_strided_slice %608 {offsets = [0, 0, 0], sizes = [2, 1, 128], strides = [1, 1, 1]} : vector<2x8x256xf32> to vector<2x1x128xf32>
    %613 = vector.shape_cast %612 : vector<2x1x128xf32> to vector<2x128xf32>
    %614 = vector.extract_strided_slice %608 {offsets = [0, 7, 128], sizes = [2, 1, 128], strides = [1, 1, 1]} : vector<2x8x256xf32> to vector<2x1x128xf32>
    %615 = vector.shape_cast %614 : vector<2x1x128xf32> to vector<2x128xf32>
    %616 = tpu.concatenate %613, %615 in 1 : vector<2x128xf32>, vector<2x128xf32> -> vector<2x256xf32>
    %cst_65 = arith.constant dense<0.000000e+00> : vector<2x256xf32>
    %617 = tpu.matmul %609, %603, %cst_65 {dimension_numbers = #tpu.dot_dimension_numbers<[1], [0], [0], [1], [0, 0, 1, 1], [], []>} : vector<2x64xf32>, vector<64x256xf32>, vector<2x256xf32> -> vector<2x256xf32>
    %618 = arith.addf %616, %617 : vector<2x256xf32>
    %619 = arith.negf %618 : vector<2x256xf32>
    %620 = math.exp %619 : vector<2x256xf32>
    %cst_66 = arith.constant 1.000000e+00 : f32
    %621 = vector.broadcast %cst_66 : f32 to vector<2x256xf32>
    %622 = arith.addf %621, %620 : vector<2x256xf32>
    %623 = arith.divf %621, %622 : vector<2x256xf32>
    %624 = math.tanh %618 : vector<2x256xf32>
    %625 = vector.extract_strided_slice %623 {offsets = [0, 0], sizes = [2, 32], strides = [1, 1]} : vector<2x256xf32> to vector<2x32xf32>
    %626 = vector.extract_strided_slice %623 {offsets = [0, 32], sizes = [2, 32], strides = [1, 1]} : vector<2x256xf32> to vector<2x32xf32>
    %627 = vector.extract_strided_slice %624 {offsets = [0, 64], sizes = [2, 32], strides = [1, 1]} : vector<2x256xf32> to vector<2x32xf32>
    %628 = vector.extract_strided_slice %623 {offsets = [0, 96], sizes = [2, 32], strides = [1, 1]} : vector<2x256xf32> to vector<2x32xf32>
    %629 = vector.extract_strided_slice %623 {offsets = [0, 128], sizes = [2, 32], strides = [1, 1]} : vector<2x256xf32> to vector<2x32xf32>
    %630 = vector.extract_strided_slice %623 {offsets = [0, 160], sizes = [2, 32], strides = [1, 1]} : vector<2x256xf32> to vector<2x32xf32>
    %631 = vector.extract_strided_slice %624 {offsets = [0, 192], sizes = [2, 32], strides = [1, 1]} : vector<2x256xf32> to vector<2x32xf32>
    %632 = vector.extract_strided_slice %623 {offsets = [0, 224], sizes = [2, 32], strides = [1, 1]} : vector<2x256xf32> to vector<2x32xf32>
    %633 = arith.mulf %626, %610 : vector<2x32xf32>
    %634 = arith.mulf %625, %627 : vector<2x32xf32>
    %635 = arith.addf %633, %634 : vector<2x32xf32>
    %636 = arith.mulf %630, %611 : vector<2x32xf32>
    %637 = arith.mulf %629, %631 : vector<2x32xf32>
    %638 = arith.addf %636, %637 : vector<2x32xf32>
    %639 = math.tanh %635 : vector<2x32xf32>
    %640 = arith.mulf %628, %639 : vector<2x32xf32>
    %641 = math.tanh %638 : vector<2x32xf32>
    %642 = arith.mulf %632, %641 : vector<2x32xf32>
    %643 = tpu.concatenate %640, %642 in 1 : vector<2x32xf32>, vector<2x32xf32> -> vector<2x64xf32>
    %644 = vector.extract_strided_slice %608 {offsets = [0, 1, 0], sizes = [2, 1, 128], strides = [1, 1, 1]} : vector<2x8x256xf32> to vector<2x1x128xf32>
    %645 = vector.shape_cast %644 : vector<2x1x128xf32> to vector<2x128xf32>
    %646 = vector.extract_strided_slice %608 {offsets = [0, 6, 128], sizes = [2, 1, 128], strides = [1, 1, 1]} : vector<2x8x256xf32> to vector<2x1x128xf32>
    %647 = vector.shape_cast %646 : vector<2x1x128xf32> to vector<2x128xf32>
    %648 = tpu.concatenate %645, %647 in 1 : vector<2x128xf32>, vector<2x128xf32> -> vector<2x256xf32>
    %cst_67 = arith.constant dense<0.000000e+00> : vector<2x256xf32>
    %649 = tpu.matmul %643, %603, %cst_67 {dimension_numbers = #tpu.dot_dimension_numbers<[1], [0], [0], [1], [0, 0, 1, 1], [], []>} : vector<2x64xf32>, vector<64x256xf32>, vector<2x256xf32> -> vector<2x256xf32>
    %650 = arith.addf %648, %649 : vector<2x256xf32>
    %651 = arith.negf %650 : vector<2x256xf32>
    %652 = math.exp %651 : vector<2x256xf32>
    %cst_68 = arith.constant 1.000000e+00 : f32
    %653 = vector.broadcast %cst_68 : f32 to vector<2x256xf32>
    %654 = arith.addf %653, %652 : vector<2x256xf32>
    %655 = arith.divf %653, %654 : vector<2x256xf32>
    %656 = math.tanh %650 : vector<2x256xf32>
    %657 = vector.extract_strided_slice %655 {offsets = [0, 0], sizes = [2, 32], strides = [1, 1]} : vector<2x256xf32> to vector<2x32xf32>
    %658 = vector.extract_strided_slice %655 {offsets = [0, 32], sizes = [2, 32], strides = [1, 1]} : vector<2x256xf32> to vector<2x32xf32>
    %659 = vector.extract_strided_slice %656 {offsets = [0, 64], sizes = [2, 32], strides = [1, 1]} : vector<2x256xf32> to vector<2x32xf32>
    %660 = vector.extract_strided_slice %655 {offsets = [0, 96], sizes = [2, 32], strides = [1, 1]} : vector<2x256xf32> to vector<2x32xf32>
    %661 = vector.extract_strided_slice %655 {offsets = [0, 128], sizes = [2, 32], strides = [1, 1]} : vector<2x256xf32> to vector<2x32xf32>
    %662 = vector.extract_strided_slice %655 {offsets = [0, 160], sizes = [2, 32], strides = [1, 1]} : vector<2x256xf32> to vector<2x32xf32>
    %663 = vector.extract_strided_slice %656 {offsets = [0, 192], sizes = [2, 32], strides = [1, 1]} : vector<2x256xf32> to vector<2x32xf32>
    %664 = vector.extract_strided_slice %655 {offsets = [0, 224], sizes = [2, 32], strides = [1, 1]} : vector<2x256xf32> to vector<2x32xf32>
    %665 = arith.mulf %658, %635 : vector<2x32xf32>
    %666 = arith.mulf %657, %659 : vector<2x32xf32>
    %667 = arith.addf %665, %666 : vector<2x32xf32>
    %668 = arith.mulf %662, %638 : vector<2x32xf32>
    %669 = arith.mulf %661, %663 : vector<2x32xf32>
    %670 = arith.addf %668, %669 : vector<2x32xf32>
    %671 = math.tanh %667 : vector<2x32xf32>
    %672 = arith.mulf %660, %671 : vector<2x32xf32>
    %673 = math.tanh %670 : vector<2x32xf32>
    %674 = arith.mulf %664, %673 : vector<2x32xf32>
    %675 = tpu.concatenate %672, %674 in 1 : vector<2x32xf32>, vector<2x32xf32> -> vector<2x64xf32>
    %676 = vector.extract_strided_slice %608 {offsets = [0, 2, 0], sizes = [2, 1, 128], strides = [1, 1, 1]} : vector<2x8x256xf32> to vector<2x1x128xf32>
    %677 = vector.shape_cast %676 : vector<2x1x128xf32> to vector<2x128xf32>
    %678 = vector.extract_strided_slice %608 {offsets = [0, 5, 128], sizes = [2, 1, 128], strides = [1, 1, 1]} : vector<2x8x256xf32> to vector<2x1x128xf32>
    %679 = vector.shape_cast %678 : vector<2x1x128xf32> to vector<2x128xf32>
    %680 = tpu.concatenate %677, %679 in 1 : vector<2x128xf32>, vector<2x128xf32> -> vector<2x256xf32>
    %cst_69 = arith.constant dense<0.000000e+00> : vector<2x256xf32>
    %681 = tpu.matmul %675, %603, %cst_69 {dimension_numbers = #tpu.dot_dimension_numbers<[1], [0], [0], [1], [0, 0, 1, 1], [], []>} : vector<2x64xf32>, vector<64x256xf32>, vector<2x256xf32> -> vector<2x256xf32>
    %682 = arith.addf %680, %681 : vector<2x256xf32>
    %683 = arith.negf %682 : vector<2x256xf32>
    %684 = math.exp %683 : vector<2x256xf32>
    %cst_70 = arith.constant 1.000000e+00 : f32
    %685 = vector.broadcast %cst_70 : f32 to vector<2x256xf32>
    %686 = arith.addf %685, %684 : vector<2x256xf32>
    %687 = arith.divf %685, %686 : vector<2x256xf32>
    %688 = math.tanh %682 : vector<2x256xf32>
    %689 = vector.extract_strided_slice %687 {offsets = [0, 0], sizes = [2, 32], strides = [1, 1]} : vector<2x256xf32> to vector<2x32xf32>
    %690 = vector.extract_strided_slice %687 {offsets = [0, 32], sizes = [2, 32], strides = [1, 1]} : vector<2x256xf32> to vector<2x32xf32>
    %691 = vector.extract_strided_slice %688 {offsets = [0, 64], sizes = [2, 32], strides = [1, 1]} : vector<2x256xf32> to vector<2x32xf32>
    %692 = vector.extract_strided_slice %687 {offsets = [0, 96], sizes = [2, 32], strides = [1, 1]} : vector<2x256xf32> to vector<2x32xf32>
    %693 = vector.extract_strided_slice %687 {offsets = [0, 128], sizes = [2, 32], strides = [1, 1]} : vector<2x256xf32> to vector<2x32xf32>
    %694 = vector.extract_strided_slice %687 {offsets = [0, 160], sizes = [2, 32], strides = [1, 1]} : vector<2x256xf32> to vector<2x32xf32>
    %695 = vector.extract_strided_slice %688 {offsets = [0, 192], sizes = [2, 32], strides = [1, 1]} : vector<2x256xf32> to vector<2x32xf32>
    %696 = vector.extract_strided_slice %687 {offsets = [0, 224], sizes = [2, 32], strides = [1, 1]} : vector<2x256xf32> to vector<2x32xf32>
    %697 = arith.mulf %690, %667 : vector<2x32xf32>
    %698 = arith.mulf %689, %691 : vector<2x32xf32>
    %699 = arith.addf %697, %698 : vector<2x32xf32>
    %700 = arith.mulf %694, %670 : vector<2x32xf32>
    %701 = arith.mulf %693, %695 : vector<2x32xf32>
    %702 = arith.addf %700, %701 : vector<2x32xf32>
    %703 = math.tanh %699 : vector<2x32xf32>
    %704 = arith.mulf %692, %703 : vector<2x32xf32>
    %705 = math.tanh %702 : vector<2x32xf32>
    %706 = arith.mulf %696, %705 : vector<2x32xf32>
    %707 = tpu.concatenate %704, %706 in 1 : vector<2x32xf32>, vector<2x32xf32> -> vector<2x64xf32>
    %708 = vector.extract_strided_slice %608 {offsets = [0, 3, 0], sizes = [2, 1, 128], strides = [1, 1, 1]} : vector<2x8x256xf32> to vector<2x1x128xf32>
    %709 = vector.shape_cast %708 : vector<2x1x128xf32> to vector<2x128xf32>
    %710 = vector.extract_strided_slice %608 {offsets = [0, 4, 128], sizes = [2, 1, 128], strides = [1, 1, 1]} : vector<2x8x256xf32> to vector<2x1x128xf32>
    %711 = vector.shape_cast %710 : vector<2x1x128xf32> to vector<2x128xf32>
    %712 = tpu.concatenate %709, %711 in 1 : vector<2x128xf32>, vector<2x128xf32> -> vector<2x256xf32>
    %cst_71 = arith.constant dense<0.000000e+00> : vector<2x256xf32>
    %713 = tpu.matmul %707, %603, %cst_71 {dimension_numbers = #tpu.dot_dimension_numbers<[1], [0], [0], [1], [0, 0, 1, 1], [], []>} : vector<2x64xf32>, vector<64x256xf32>, vector<2x256xf32> -> vector<2x256xf32>
    %714 = arith.addf %712, %713 : vector<2x256xf32>
    %715 = arith.negf %714 : vector<2x256xf32>
    %716 = math.exp %715 : vector<2x256xf32>
    %cst_72 = arith.constant 1.000000e+00 : f32
    %717 = vector.broadcast %cst_72 : f32 to vector<2x256xf32>
    %718 = arith.addf %717, %716 : vector<2x256xf32>
    %719 = arith.divf %717, %718 : vector<2x256xf32>
    %720 = math.tanh %714 : vector<2x256xf32>
    %721 = vector.extract_strided_slice %719 {offsets = [0, 0], sizes = [2, 32], strides = [1, 1]} : vector<2x256xf32> to vector<2x32xf32>
    %722 = vector.extract_strided_slice %719 {offsets = [0, 32], sizes = [2, 32], strides = [1, 1]} : vector<2x256xf32> to vector<2x32xf32>
    %723 = vector.extract_strided_slice %720 {offsets = [0, 64], sizes = [2, 32], strides = [1, 1]} : vector<2x256xf32> to vector<2x32xf32>
    %724 = vector.extract_strided_slice %719 {offsets = [0, 96], sizes = [2, 32], strides = [1, 1]} : vector<2x256xf32> to vector<2x32xf32>
    %725 = vector.extract_strided_slice %719 {offsets = [0, 128], sizes = [2, 32], strides = [1, 1]} : vector<2x256xf32> to vector<2x32xf32>
    %726 = vector.extract_strided_slice %719 {offsets = [0, 160], sizes = [2, 32], strides = [1, 1]} : vector<2x256xf32> to vector<2x32xf32>
    %727 = vector.extract_strided_slice %720 {offsets = [0, 192], sizes = [2, 32], strides = [1, 1]} : vector<2x256xf32> to vector<2x32xf32>
    %728 = vector.extract_strided_slice %719 {offsets = [0, 224], sizes = [2, 32], strides = [1, 1]} : vector<2x256xf32> to vector<2x32xf32>
    %729 = arith.mulf %722, %699 : vector<2x32xf32>
    %730 = arith.mulf %721, %723 : vector<2x32xf32>
    %731 = arith.addf %729, %730 : vector<2x32xf32>
    %732 = arith.mulf %726, %702 : vector<2x32xf32>
    %733 = arith.mulf %725, %727 : vector<2x32xf32>
    %734 = arith.addf %732, %733 : vector<2x32xf32>
    %735 = math.tanh %731 : vector<2x32xf32>
    %736 = arith.mulf %724, %735 : vector<2x32xf32>
    %737 = math.tanh %734 : vector<2x32xf32>
    %738 = arith.mulf %728, %737 : vector<2x32xf32>
    %739 = tpu.concatenate %736, %738 in 1 : vector<2x32xf32>, vector<2x32xf32> -> vector<2x64xf32>
    %740 = vector.extract_strided_slice %608 {offsets = [0, 4, 0], sizes = [2, 1, 128], strides = [1, 1, 1]} : vector<2x8x256xf32> to vector<2x1x128xf32>
    %741 = vector.shape_cast %740 : vector<2x1x128xf32> to vector<2x128xf32>
    %742 = vector.extract_strided_slice %608 {offsets = [0, 3, 128], sizes = [2, 1, 128], strides = [1, 1, 1]} : vector<2x8x256xf32> to vector<2x1x128xf32>
    %743 = vector.shape_cast %742 : vector<2x1x128xf32> to vector<2x128xf32>
    %744 = tpu.concatenate %741, %743 in 1 : vector<2x128xf32>, vector<2x128xf32> -> vector<2x256xf32>
    %cst_73 = arith.constant dense<0.000000e+00> : vector<2x256xf32>
    %745 = tpu.matmul %739, %603, %cst_73 {dimension_numbers = #tpu.dot_dimension_numbers<[1], [0], [0], [1], [0, 0, 1, 1], [], []>} : vector<2x64xf32>, vector<64x256xf32>, vector<2x256xf32> -> vector<2x256xf32>
    %746 = arith.addf %744, %745 : vector<2x256xf32>
    %747 = arith.negf %746 : vector<2x256xf32>
    %748 = math.exp %747 : vector<2x256xf32>
    %cst_74 = arith.constant 1.000000e+00 : f32
    %749 = vector.broadcast %cst_74 : f32 to vector<2x256xf32>
    %750 = arith.addf %749, %748 : vector<2x256xf32>
    %751 = arith.divf %749, %750 : vector<2x256xf32>
    %752 = math.tanh %746 : vector<2x256xf32>
    %753 = vector.extract_strided_slice %751 {offsets = [0, 0], sizes = [2, 32], strides = [1, 1]} : vector<2x256xf32> to vector<2x32xf32>
    %754 = vector.extract_strided_slice %751 {offsets = [0, 32], sizes = [2, 32], strides = [1, 1]} : vector<2x256xf32> to vector<2x32xf32>
    %755 = vector.extract_strided_slice %752 {offsets = [0, 64], sizes = [2, 32], strides = [1, 1]} : vector<2x256xf32> to vector<2x32xf32>
    %756 = vector.extract_strided_slice %751 {offsets = [0, 96], sizes = [2, 32], strides = [1, 1]} : vector<2x256xf32> to vector<2x32xf32>
    %757 = vector.extract_strided_slice %751 {offsets = [0, 128], sizes = [2, 32], strides = [1, 1]} : vector<2x256xf32> to vector<2x32xf32>
    %758 = vector.extract_strided_slice %751 {offsets = [0, 160], sizes = [2, 32], strides = [1, 1]} : vector<2x256xf32> to vector<2x32xf32>
    %759 = vector.extract_strided_slice %752 {offsets = [0, 192], sizes = [2, 32], strides = [1, 1]} : vector<2x256xf32> to vector<2x32xf32>
    %760 = vector.extract_strided_slice %751 {offsets = [0, 224], sizes = [2, 32], strides = [1, 1]} : vector<2x256xf32> to vector<2x32xf32>
    %761 = arith.mulf %754, %731 : vector<2x32xf32>
    %762 = arith.mulf %753, %755 : vector<2x32xf32>
    %763 = arith.addf %761, %762 : vector<2x32xf32>
    %764 = arith.mulf %758, %734 : vector<2x32xf32>
    %765 = arith.mulf %757, %759 : vector<2x32xf32>
    %766 = arith.addf %764, %765 : vector<2x32xf32>
    %767 = math.tanh %763 : vector<2x32xf32>
    %768 = arith.mulf %756, %767 : vector<2x32xf32>
    %769 = math.tanh %766 : vector<2x32xf32>
    %770 = arith.mulf %760, %769 : vector<2x32xf32>
    %771 = tpu.concatenate %768, %770 in 1 : vector<2x32xf32>, vector<2x32xf32> -> vector<2x64xf32>
    %772 = vector.extract_strided_slice %608 {offsets = [0, 5, 0], sizes = [2, 1, 128], strides = [1, 1, 1]} : vector<2x8x256xf32> to vector<2x1x128xf32>
    %773 = vector.shape_cast %772 : vector<2x1x128xf32> to vector<2x128xf32>
    %774 = vector.extract_strided_slice %608 {offsets = [0, 2, 128], sizes = [2, 1, 128], strides = [1, 1, 1]} : vector<2x8x256xf32> to vector<2x1x128xf32>
    %775 = vector.shape_cast %774 : vector<2x1x128xf32> to vector<2x128xf32>
    %776 = tpu.concatenate %773, %775 in 1 : vector<2x128xf32>, vector<2x128xf32> -> vector<2x256xf32>
    %cst_75 = arith.constant dense<0.000000e+00> : vector<2x256xf32>
    %777 = tpu.matmul %771, %603, %cst_75 {dimension_numbers = #tpu.dot_dimension_numbers<[1], [0], [0], [1], [0, 0, 1, 1], [], []>} : vector<2x64xf32>, vector<64x256xf32>, vector<2x256xf32> -> vector<2x256xf32>
    %778 = arith.addf %776, %777 : vector<2x256xf32>
    %779 = arith.negf %778 : vector<2x256xf32>
    %780 = math.exp %779 : vector<2x256xf32>
    %cst_76 = arith.constant 1.000000e+00 : f32
    %781 = vector.broadcast %cst_76 : f32 to vector<2x256xf32>
    %782 = arith.addf %781, %780 : vector<2x256xf32>
    %783 = arith.divf %781, %782 : vector<2x256xf32>
    %784 = math.tanh %778 : vector<2x256xf32>
    %785 = vector.extract_strided_slice %783 {offsets = [0, 0], sizes = [2, 32], strides = [1, 1]} : vector<2x256xf32> to vector<2x32xf32>
    %786 = vector.extract_strided_slice %783 {offsets = [0, 32], sizes = [2, 32], strides = [1, 1]} : vector<2x256xf32> to vector<2x32xf32>
    %787 = vector.extract_strided_slice %784 {offsets = [0, 64], sizes = [2, 32], strides = [1, 1]} : vector<2x256xf32> to vector<2x32xf32>
    %788 = vector.extract_strided_slice %783 {offsets = [0, 96], sizes = [2, 32], strides = [1, 1]} : vector<2x256xf32> to vector<2x32xf32>
    %789 = vector.extract_strided_slice %783 {offsets = [0, 128], sizes = [2, 32], strides = [1, 1]} : vector<2x256xf32> to vector<2x32xf32>
    %790 = vector.extract_strided_slice %783 {offsets = [0, 160], sizes = [2, 32], strides = [1, 1]} : vector<2x256xf32> to vector<2x32xf32>
    %791 = vector.extract_strided_slice %784 {offsets = [0, 192], sizes = [2, 32], strides = [1, 1]} : vector<2x256xf32> to vector<2x32xf32>
    %792 = vector.extract_strided_slice %783 {offsets = [0, 224], sizes = [2, 32], strides = [1, 1]} : vector<2x256xf32> to vector<2x32xf32>
    %793 = arith.mulf %786, %763 : vector<2x32xf32>
    %794 = arith.mulf %785, %787 : vector<2x32xf32>
    %795 = arith.addf %793, %794 : vector<2x32xf32>
    %796 = arith.mulf %790, %766 : vector<2x32xf32>
    %797 = arith.mulf %789, %791 : vector<2x32xf32>
    %798 = arith.addf %796, %797 : vector<2x32xf32>
    %799 = math.tanh %795 : vector<2x32xf32>
    %800 = arith.mulf %788, %799 : vector<2x32xf32>
    %801 = math.tanh %798 : vector<2x32xf32>
    %802 = arith.mulf %792, %801 : vector<2x32xf32>
    %803 = tpu.concatenate %800, %802 in 1 : vector<2x32xf32>, vector<2x32xf32> -> vector<2x64xf32>
    %804 = vector.extract_strided_slice %608 {offsets = [0, 6, 0], sizes = [2, 1, 128], strides = [1, 1, 1]} : vector<2x8x256xf32> to vector<2x1x128xf32>
    %805 = vector.shape_cast %804 : vector<2x1x128xf32> to vector<2x128xf32>
    %806 = vector.extract_strided_slice %608 {offsets = [0, 1, 128], sizes = [2, 1, 128], strides = [1, 1, 1]} : vector<2x8x256xf32> to vector<2x1x128xf32>
    %807 = vector.shape_cast %806 : vector<2x1x128xf32> to vector<2x128xf32>
    %808 = tpu.concatenate %805, %807 in 1 : vector<2x128xf32>, vector<2x128xf32> -> vector<2x256xf32>
    %cst_77 = arith.constant dense<0.000000e+00> : vector<2x256xf32>
    %809 = tpu.matmul %803, %603, %cst_77 {dimension_numbers = #tpu.dot_dimension_numbers<[1], [0], [0], [1], [0, 0, 1, 1], [], []>} : vector<2x64xf32>, vector<64x256xf32>, vector<2x256xf32> -> vector<2x256xf32>
    %810 = arith.addf %808, %809 : vector<2x256xf32>
    %811 = arith.negf %810 : vector<2x256xf32>
    %812 = math.exp %811 : vector<2x256xf32>
    %cst_78 = arith.constant 1.000000e+00 : f32
    %813 = vector.broadcast %cst_78 : f32 to vector<2x256xf32>
    %814 = arith.addf %813, %812 : vector<2x256xf32>
    %815 = arith.divf %813, %814 : vector<2x256xf32>
    %816 = math.tanh %810 : vector<2x256xf32>
    %817 = vector.extract_strided_slice %815 {offsets = [0, 0], sizes = [2, 32], strides = [1, 1]} : vector<2x256xf32> to vector<2x32xf32>
    %818 = vector.extract_strided_slice %815 {offsets = [0, 32], sizes = [2, 32], strides = [1, 1]} : vector<2x256xf32> to vector<2x32xf32>
    %819 = vector.extract_strided_slice %816 {offsets = [0, 64], sizes = [2, 32], strides = [1, 1]} : vector<2x256xf32> to vector<2x32xf32>
    %820 = vector.extract_strided_slice %815 {offsets = [0, 96], sizes = [2, 32], strides = [1, 1]} : vector<2x256xf32> to vector<2x32xf32>
    %821 = vector.extract_strided_slice %815 {offsets = [0, 128], sizes = [2, 32], strides = [1, 1]} : vector<2x256xf32> to vector<2x32xf32>
    %822 = vector.extract_strided_slice %815 {offsets = [0, 160], sizes = [2, 32], strides = [1, 1]} : vector<2x256xf32> to vector<2x32xf32>
    %823 = vector.extract_strided_slice %816 {offsets = [0, 192], sizes = [2, 32], strides = [1, 1]} : vector<2x256xf32> to vector<2x32xf32>
    %824 = vector.extract_strided_slice %815 {offsets = [0, 224], sizes = [2, 32], strides = [1, 1]} : vector<2x256xf32> to vector<2x32xf32>
    %825 = arith.mulf %818, %795 : vector<2x32xf32>
    %826 = arith.mulf %817, %819 : vector<2x32xf32>
    %827 = arith.addf %825, %826 : vector<2x32xf32>
    %828 = arith.mulf %822, %798 : vector<2x32xf32>
    %829 = arith.mulf %821, %823 : vector<2x32xf32>
    %830 = arith.addf %828, %829 : vector<2x32xf32>
    %831 = math.tanh %827 : vector<2x32xf32>
    %832 = arith.mulf %820, %831 : vector<2x32xf32>
    %833 = math.tanh %830 : vector<2x32xf32>
    %834 = arith.mulf %824, %833 : vector<2x32xf32>
    %835 = tpu.concatenate %832, %834 in 1 : vector<2x32xf32>, vector<2x32xf32> -> vector<2x64xf32>
    %836 = vector.extract_strided_slice %608 {offsets = [0, 7, 0], sizes = [2, 1, 128], strides = [1, 1, 1]} : vector<2x8x256xf32> to vector<2x1x128xf32>
    %837 = vector.shape_cast %836 : vector<2x1x128xf32> to vector<2x128xf32>
    %838 = vector.extract_strided_slice %608 {offsets = [0, 0, 128], sizes = [2, 1, 128], strides = [1, 1, 1]} : vector<2x8x256xf32> to vector<2x1x128xf32>
    %839 = vector.shape_cast %838 : vector<2x1x128xf32> to vector<2x128xf32>
    %840 = tpu.concatenate %837, %839 in 1 : vector<2x128xf32>, vector<2x128xf32> -> vector<2x256xf32>
    %cst_79 = arith.constant dense<0.000000e+00> : vector<2x256xf32>
    %841 = tpu.matmul %835, %603, %cst_79 {dimension_numbers = #tpu.dot_dimension_numbers<[1], [0], [0], [1], [0, 0, 1, 1], [], []>} : vector<2x64xf32>, vector<64x256xf32>, vector<2x256xf32> -> vector<2x256xf32>
    %842 = arith.addf %840, %841 : vector<2x256xf32>
    %843 = arith.negf %842 : vector<2x256xf32>
    %844 = math.exp %843 : vector<2x256xf32>
    %cst_80 = arith.constant 1.000000e+00 : f32
    %845 = vector.broadcast %cst_80 : f32 to vector<2x256xf32>
    %846 = arith.addf %845, %844 : vector<2x256xf32>
    %847 = arith.divf %845, %846 : vector<2x256xf32>
    %848 = math.tanh %842 : vector<2x256xf32>
    %849 = vector.extract_strided_slice %847 {offsets = [0, 0], sizes = [2, 32], strides = [1, 1]} : vector<2x256xf32> to vector<2x32xf32>
    %850 = vector.extract_strided_slice %847 {offsets = [0, 32], sizes = [2, 32], strides = [1, 1]} : vector<2x256xf32> to vector<2x32xf32>
    %851 = vector.extract_strided_slice %848 {offsets = [0, 64], sizes = [2, 32], strides = [1, 1]} : vector<2x256xf32> to vector<2x32xf32>
    %852 = vector.extract_strided_slice %847 {offsets = [0, 96], sizes = [2, 32], strides = [1, 1]} : vector<2x256xf32> to vector<2x32xf32>
    %853 = vector.extract_strided_slice %847 {offsets = [0, 128], sizes = [2, 32], strides = [1, 1]} : vector<2x256xf32> to vector<2x32xf32>
    %854 = vector.extract_strided_slice %847 {offsets = [0, 160], sizes = [2, 32], strides = [1, 1]} : vector<2x256xf32> to vector<2x32xf32>
    %855 = vector.extract_strided_slice %848 {offsets = [0, 192], sizes = [2, 32], strides = [1, 1]} : vector<2x256xf32> to vector<2x32xf32>
    %856 = vector.extract_strided_slice %847 {offsets = [0, 224], sizes = [2, 32], strides = [1, 1]} : vector<2x256xf32> to vector<2x32xf32>
    %857 = arith.mulf %850, %827 : vector<2x32xf32>
    %858 = arith.mulf %849, %851 : vector<2x32xf32>
    %859 = arith.addf %857, %858 : vector<2x32xf32>
    %860 = arith.mulf %854, %830 : vector<2x32xf32>
    %861 = arith.mulf %853, %855 : vector<2x32xf32>
    %862 = arith.addf %860, %861 : vector<2x32xf32>
    %863 = math.tanh %859 : vector<2x32xf32>
    %864 = arith.mulf %852, %863 : vector<2x32xf32>
    %865 = math.tanh %862 : vector<2x32xf32>
    %866 = arith.mulf %856, %865 : vector<2x32xf32>
    %867 = vector.shape_cast %640 : vector<2x32xf32> to vector<2x1x32xf32>
    %868 = vector.shape_cast %672 : vector<2x32xf32> to vector<2x1x32xf32>
    %869 = vector.shape_cast %704 : vector<2x32xf32> to vector<2x1x32xf32>
    %870 = vector.shape_cast %736 : vector<2x32xf32> to vector<2x1x32xf32>
    %871 = vector.shape_cast %768 : vector<2x32xf32> to vector<2x1x32xf32>
    %872 = vector.shape_cast %800 : vector<2x32xf32> to vector<2x1x32xf32>
    %873 = vector.shape_cast %832 : vector<2x32xf32> to vector<2x1x32xf32>
    %874 = vector.shape_cast %864 : vector<2x32xf32> to vector<2x1x32xf32>
    %875 = tpu.concatenate %867, %868, %869, %870, %871, %872, %873, %874 in 1 : vector<2x1x32xf32>, vector<2x1x32xf32>, vector<2x1x32xf32>, vector<2x1x32xf32>, vector<2x1x32xf32>, vector<2x1x32xf32>, vector<2x1x32xf32>, vector<2x1x32xf32> -> vector<2x8x32xf32>
    %876 = vector.shape_cast %866 : vector<2x32xf32> to vector<2x1x32xf32>
    %877 = vector.shape_cast %834 : vector<2x32xf32> to vector<2x1x32xf32>
    %878 = vector.shape_cast %802 : vector<2x32xf32> to vector<2x1x32xf32>
    %879 = vector.shape_cast %770 : vector<2x32xf32> to vector<2x1x32xf32>
    %880 = vector.shape_cast %738 : vector<2x32xf32> to vector<2x1x32xf32>
    %881 = vector.shape_cast %706 : vector<2x32xf32> to vector<2x1x32xf32>
    %882 = vector.shape_cast %674 : vector<2x32xf32> to vector<2x1x32xf32>
    %883 = vector.shape_cast %642 : vector<2x32xf32> to vector<2x1x32xf32>
    %884 = tpu.concatenate %876, %877, %878, %879, %880, %881, %882, %883 in 1 : vector<2x1x32xf32>, vector<2x1x32xf32>, vector<2x1x32xf32>, vector<2x1x32xf32>, vector<2x1x32xf32>, vector<2x1x32xf32>, vector<2x1x32xf32>, vector<2x1x32xf32> -> vector<2x8x32xf32>
    %885 = tpu.concatenate %875, %884 in 2 : vector<2x8x32xf32>, vector<2x8x32xf32> -> vector<2x8x64xf32>
    %c440 = arith.constant 440 : index
    %c0_81 = arith.constant 0 : index
    %886 = vector.load %arg1[%c440, %c0_81] : memref<608x256xf32, #tpu.memory_space<vmem>>, vector<1x64xf32>
    %c448 = arith.constant 448 : index
    %c0_82 = arith.constant 0 : index
    %887 = vector.load %arg1[%c448, %c0_82] : memref<608x256xf32, #tpu.memory_space<vmem>>, vector<1x1xf32>
    %888 = vector.shape_cast %886 : vector<1x64xf32> to vector<1x1x64xf32>
    %889 = vector.broadcast %888 : vector<1x1x64xf32> to vector<2x8x64xf32>
    %890 = arith.mulf %885, %889 : vector<2x8x64xf32>
    %cst_83 = arith.constant dense<0.000000e+00> : vector<2x8xf32>
    %891 = vector.multi_reduction <add>, %890, %cst_83 [2] : vector<2x8x64xf32> to vector<2x8xf32>
    %892 = vector.shape_cast %891 : vector<2x8xf32> to vector<2x8x1xf32>
    %893 = vector.shape_cast %887 : vector<1x1xf32> to vector<1x1x1xf32>
    %894 = vector.broadcast %893 : vector<1x1x1xf32> to vector<2x8x1xf32>
    %895 = arith.addf %892, %894 : vector<2x8x1xf32>
    %cst_84 = arith.constant dense<0xFF800000> : vector<2x1xf32>
    %896 = vector.multi_reduction <maximumf>, %895, %cst_84 [1] : vector<2x8x1xf32> to vector<2x1xf32>
    %cst_85 = arith.constant 0xFF800000 : f32
    %897 = vector.broadcast %cst_85 : f32 to vector<2x1xf32>
    %898 = arith.maximumf %897, %896 : vector<2x1xf32>
    %899 = vector.shape_cast %898 : vector<2x1xf32> to vector<2x1x1xf32>
    %900 = vector.broadcast %899 : vector<2x1x1xf32> to vector<2x8x1xf32>
    %901 = arith.subf %895, %900 : vector<2x8x1xf32>
    %902 = math.exp %901 : vector<2x8x1xf32>
    %cst_86 = arith.constant dense<0.000000e+00> : vector<2x1xf32>
    %903 = vector.multi_reduction <add>, %902, %cst_86 [1] : vector<2x8x1xf32> to vector<2x1xf32>
    %904 = vector.shape_cast %903 : vector<2x1xf32> to vector<2x1x1xf32>
    %905 = vector.broadcast %904 : vector<2x1x1xf32> to vector<2x8x1xf32>
    %906 = arith.divf %902, %905 : vector<2x8x1xf32>
    %907 = vector.broadcast %906 : vector<2x8x1xf32> to vector<2x8x64xf32>
    %908 = arith.mulf %885, %907 : vector<2x8x64xf32>
    %cst_87 = arith.constant dense<0.000000e+00> : vector<2x64xf32>
    %909 = vector.multi_reduction <add>, %908, %cst_87 [1] : vector<2x8x64xf32> to vector<2x64xf32>
    %cst_88 = arith.constant dense<0.000000e+00> : vector<2xf32>
    %910 = vector.multi_reduction <add>, %909, %cst_88 [1] : vector<2x64xf32> to vector<2xf32>
    %911 = vector.shape_cast %910 : vector<2xf32> to vector<2x1xf32>
    %cst_89 = arith.constant 6.400000e+01 : f32
    %912 = vector.broadcast %cst_89 : f32 to vector<2x1xf32>
    %913 = arith.divf %911, %912 : vector<2x1xf32>
    %914 = vector.broadcast %913 : vector<2x1xf32> to vector<2x64xf32>
    %915 = arith.subf %909, %914 : vector<2x64xf32>
    %916 = arith.mulf %915, %915 : vector<2x64xf32>
    %cst_90 = arith.constant dense<0.000000e+00> : vector<2xf32>
    %917 = vector.multi_reduction <add>, %916, %cst_90 [1] : vector<2x64xf32> to vector<2xf32>
    %918 = vector.shape_cast %917 : vector<2xf32> to vector<2x1xf32>
    %cst_91 = arith.constant 6.400000e+01 : f32
    %919 = vector.broadcast %cst_91 : f32 to vector<2x1xf32>
    %920 = arith.divf %918, %919 : vector<2x1xf32>
    %921 = vector.broadcast %913 : vector<2x1xf32> to vector<2x64xf32>
    %922 = arith.subf %909, %921 : vector<2x64xf32>
    %cst_92 = arith.constant 9.99999974E-6 : f32
    %923 = vector.broadcast %cst_92 : f32 to vector<2x1xf32>
    %924 = arith.addf %920, %923 : vector<2x1xf32>
    %925 = math.rsqrt %924 : vector<2x1xf32>
    %926 = vector.broadcast %925 : vector<2x1xf32> to vector<2x64xf32>
    %927 = arith.mulf %922, %926 : vector<2x64xf32>
    %c456 = arith.constant 456 : index
    %c0_93 = arith.constant 0 : index
    %928 = vector.load %arg1[%c456, %c0_93] : memref<608x256xf32, #tpu.memory_space<vmem>>, vector<1x64xf32>
    %929 = vector.broadcast %928 : vector<1x64xf32> to vector<2x64xf32>
    %930 = arith.mulf %927, %929 : vector<2x64xf32>
    %c464 = arith.constant 464 : index
    %c0_94 = arith.constant 0 : index
    %931 = vector.load %arg1[%c464, %c0_94] : memref<608x256xf32, #tpu.memory_space<vmem>>, vector<1x64xf32>
    %932 = vector.broadcast %931 : vector<1x64xf32> to vector<2x64xf32>
    %933 = arith.addf %930, %932 : vector<2x64xf32>
    %c472 = arith.constant 472 : index
    %c0_95 = arith.constant 0 : index
    %934 = vector.load %arg1[%c472, %c0_95] : memref<608x256xf32, #tpu.memory_space<vmem>>, vector<64x32xf32>
    %cst_96 = arith.constant dense<0.000000e+00> : vector<2x32xf32>
    %935 = tpu.matmul %933, %934, %cst_96 {dimension_numbers = #tpu.dot_dimension_numbers<[1], [0], [0], [1], [0, 0, 1, 1], [], []>} : vector<2x64xf32>, vector<64x32xf32>, vector<2x32xf32> -> vector<2x32xf32>
    %c536 = arith.constant 536 : index
    %c0_97 = arith.constant 0 : index
    %936 = vector.load %arg1[%c536, %c0_97] : memref<608x256xf32, #tpu.memory_space<vmem>>, vector<1x32xf32>
    %937 = vector.broadcast %936 : vector<1x32xf32> to vector<2x32xf32>
    %938 = arith.addf %935, %937 : vector<2x32xf32>
    %939 = arith.mulf %938, %938 : vector<2x32xf32>
    %940 = arith.mulf %938, %939 : vector<2x32xf32>
    %cst_98 = arith.constant 4.471500e-02 : f32
    %941 = vector.broadcast %cst_98 : f32 to vector<2x32xf32>
    %942 = arith.mulf %941, %940 : vector<2x32xf32>
    %943 = arith.addf %938, %942 : vector<2x32xf32>
    %cst_99 = arith.constant 0.797884583 : f32
    %944 = vector.broadcast %cst_99 : f32 to vector<2x32xf32>
    %945 = arith.mulf %944, %943 : vector<2x32xf32>
    %946 = math.tanh %945 : vector<2x32xf32>
    %cst_100 = arith.constant 1.000000e+00 : f32
    %947 = vector.broadcast %cst_100 : f32 to vector<2x32xf32>
    %948 = arith.addf %947, %946 : vector<2x32xf32>
    %cst_101 = arith.constant 5.000000e-01 : f32
    %949 = vector.broadcast %cst_101 : f32 to vector<2x32xf32>
    %950 = arith.mulf %949, %948 : vector<2x32xf32>
    %951 = arith.mulf %938, %950 : vector<2x32xf32>
    %c544 = arith.constant 544 : index
    %c0_102 = arith.constant 0 : index
    %952 = vector.load %arg1[%c544, %c0_102] : memref<608x256xf32, #tpu.memory_space<vmem>>, vector<32x16xf32>
    %cst_103 = arith.constant dense<0.000000e+00> : vector<2x16xf32>
    %953 = tpu.matmul %951, %952, %cst_103 {dimension_numbers = #tpu.dot_dimension_numbers<[1], [0], [0], [1], [0, 0, 1, 1], [], []>} : vector<2x32xf32>, vector<32x16xf32>, vector<2x16xf32> -> vector<2x16xf32>
    %c576 = arith.constant 576 : index
    %c0_104 = arith.constant 0 : index
    %954 = vector.load %arg1[%c576, %c0_104] : memref<608x256xf32, #tpu.memory_space<vmem>>, vector<1x16xf32>
    %955 = vector.broadcast %954 : vector<1x16xf32> to vector<2x16xf32>
    %956 = arith.addf %953, %955 : vector<2x16xf32>
    %957 = arith.mulf %956, %956 : vector<2x16xf32>
    %958 = arith.mulf %956, %957 : vector<2x16xf32>
    %cst_105 = arith.constant 4.471500e-02 : f32
    %959 = vector.broadcast %cst_105 : f32 to vector<2x16xf32>
    %960 = arith.mulf %959, %958 : vector<2x16xf32>
    %961 = arith.addf %956, %960 : vector<2x16xf32>
    %cst_106 = arith.constant 0.797884583 : f32
    %962 = vector.broadcast %cst_106 : f32 to vector<2x16xf32>
    %963 = arith.mulf %962, %961 : vector<2x16xf32>
    %964 = math.tanh %963 : vector<2x16xf32>
    %cst_107 = arith.constant 1.000000e+00 : f32
    %965 = vector.broadcast %cst_107 : f32 to vector<2x16xf32>
    %966 = arith.addf %965, %964 : vector<2x16xf32>
    %cst_108 = arith.constant 5.000000e-01 : f32
    %967 = vector.broadcast %cst_108 : f32 to vector<2x16xf32>
    %968 = arith.mulf %967, %966 : vector<2x16xf32>
    %969 = arith.mulf %956, %968 : vector<2x16xf32>
    %c584 = arith.constant 584 : index
    %c0_109 = arith.constant 0 : index
    %970 = vector.load %arg1[%c584, %c0_109] : memref<608x256xf32, #tpu.memory_space<vmem>>, vector<16x3xf32>
    %cst_110 = arith.constant dense<0.000000e+00> : vector<2x3xf32>
    %971 = tpu.matmul %969, %970, %cst_110 {dimension_numbers = #tpu.dot_dimension_numbers<[1], [0], [0], [1], [0, 0, 1, 1], [], []>} : vector<2x16xf32>, vector<16x3xf32>, vector<2x3xf32> -> vector<2x3xf32>
    %c600 = arith.constant 600 : index
    %c0_111 = arith.constant 0 : index
    %972 = vector.load %arg1[%c600, %c0_111] : memref<608x256xf32, #tpu.memory_space<vmem>>, vector<1x3xf32>
    %973 = vector.broadcast %972 : vector<1x3xf32> to vector<2x3xf32>
    %974 = arith.addf %971, %973 : vector<2x3xf32>
    %c0_112 = arith.constant 0 : index
    %c0_113 = arith.constant 0 : index
    %975 = vector.load %arg2[%c0_112, %c0_113] : memref<2x3xf32, #tpu.memory_space<vmem>>, vector<2x3xf32>
    tpu.vector_store %arg2[%c0_112, %c0_113], %974 {strides = array<i32>} : memref<2x3xf32, #tpu.memory_space<vmem>>, vector<2x3xf32>,
    return
  }
}

</mosaic_0001>

<llo_original>
// kernel: _lambda_.1
$region0: #{_lambda_.1}
  #allocation0 [shape = 'u32[]', space=smem, size = 0x4, offset = 0x4, fixed_abs, tag = 'smem constant byte address 0x4 - core index']
  #allocation1 [shape = 'u32[72,128]{1,0:T(1,128)}', space=vmem, size = 0x9000, scoped, tag = 'internal scratch']
  %s0 = inlined_call_operand.vmem [shape: f32[2,8,4], index: 0, kind: input, shape index: {}]
  %s1 = inlined_call_operand.hbm [shape: f32[608,256], index: 1, kind: input, shape index: {}]
  %s2 = inlined_call_operand.hbm [shape: f32[2,3], index: 2, kind: output, shape index: {}]
  %s3 = sld [smem:[#allocation0]]
  $region22: #{_lambda_.1} parent=0
    _
  %s5 = ssub.s32 1, %s3
  %s6 = scalar_select 0, %s5, %s3
  $region1: #{_lambda_.1} parent=0
    #allocation2 [shape = 'u8[622592]{0}', space=vmem, size = 0x98000, scoped, tag = 'input window, operand 1, single buffered']
    #allocation3 [shape = 's32[1]{0}', space=sflag, size = 0x4, scoped, tag = 'scoped memory for _lambda_.1']
    #allocation4 [shape = 's32[1]{0}', space=sflag, size = 0x4, scoped, tag = 'scoped memory for _lambda_.1']
    #allocation5 [shape = 'u8[1024]{0}', space=vmem, size = 0x400, scoped, tag = 'output window, operand 0, single buffered']
    %7 = vsyncpa [#allocation3], 0
    %8 = vsyncpa [#allocation4], 0
    // Predicated region
    $region2: #{_lambda_.1} parent=1 // pred_check
      _
    $region3: #{_lambda_.1} parent=1 // pred_check_branch
      %10 = sbr.rel (0) target = $region5
    $region4: #{_lambda_.1} parent=1 // pred_region
      _
    $region5: #{_lambda_.1} parent=1 // pred_fallthru
      _
    // Predicated region
    $region6: #{_lambda_.1} parent=1 // pred_check
      _
    $region7: #{_lambda_.1} parent=1 // pred_check_branch
      %12 = sbr.rel (0) target = $region9
    $region8: #{_lambda_.1} parent=1 // pred_region
      %14 = vsyncadd [#allocation3], 0
      %s15 = sshll.u32 %s1, 4
      %s16 = int_to_ptr.hbm [resolvable:$true] %s15
      %s17 = sshll.u32 [#allocation2], 4
      %s18 = int_to_ptr.vmem [resolvable:$true] %s17
      %23 = dma.hbm_to_vmem [thread:$0]  %s16, 19456, %s18, [#allocation3], 256, 256, 16
    $region9: #{_lambda_.1} parent=1 // pred_fallthru
      _
    // Predicated region
    $region10: #{_lambda_.1} parent=1 // pred_check
      _
    $region11: #{_lambda_.1} parent=1 // pred_check_branch
      %25 = sbr.rel (0) target = $region13
    $region12: #{_lambda_.1} parent=1 // pred_region
      %27 = dma.done [#allocation3], 19456
    $region13: #{_lambda_.1} parent=1 // pred_fallthru
      _
    %v28 = vld [vmem:[%s0] sm:$0xff]
    %v29 = vld [vmem:[%s0 + $0x8] sm:$0xff]
    %v30 = vld [vmem:[#allocation2] sm:$0xff]
    %v31 = vld [vmem:[#allocation2 + $0x10] sm:$0xf]
    %v32 = vld [vmem:[#allocation2 + $0x20] ss:$0 sm:$0xff]
    %v35 = vrot.slane %v28, 7
    %v36 = vrot.slane %v29, 7
    %vm39 = vcmask 1040384
    %v40 = vsel %vm39, 0.0, %v35
    %v41 = vsel %vm39, 0.0, %v36
    %v42 = vsel %vm39, %v35, 0.0
    %v43 = vsel %vm39, %v36, 0.0
    %vm48 = vcmask 1046528
    %v49 = vrot.slane %v40, 1
    %v50 = vrot.slane %v42, 1
    %v51 = vsel %vm48, %v49, %v50
    %v52 = vrot.slane %v41, 1
    %v53 = vrot.slane %v43, 1
    %v54 = vsel %vm48, %v52, %v53
    %55 = vrot.lane.b32.xlu0 %v51, 4
    %v56 = vpop.permute.xlu0 %55
    %57 = vrot.lane.b32.xlu0 %v54, 4
    %v58 = vpop.permute.xlu0 %57
    %vm61 = vcmask 1045504
    %v62 = vrot.slane %v40, 2
    %v63 = vrot.slane %v42, 2
    %v64 = vsel %vm61, %v62, %v63
    %v65 = vrot.slane %v41, 2
    %v66 = vrot.slane %v43, 2
    %v67 = vsel %vm61, %v65, %v66
    %68 = vrot.lane.b32.xlu0 %v64, 8
    %v69 = vpop.permute.xlu0 %68
    %70 = vrot.lane.b32.xlu0 %v67, 8
    %v71 = vpop.permute.xlu0 %70
    %vm74 = vcmask 31744
    %v75 = vsel %vm74, %v40, %v56
    %v76 = vsel %vm74, %v41, %v58
    %vm77 = vcmask 64512
    %v78 = vsel %vm77, %v75, %v69
    %v79 = vsel %vm77, %v76, %v71
    %vm80 = vcmask 97280
    %v82 = vsel %vm80, %v78, 0
    %v85 = vsel %vm80, %v79, 0
    %vm87 = vcmask 1043456
    %v89 = vsel %vm87, %v31, 0
    %91 = vmatpush.msra.mxu0 0.0
    %92 = vmatpush.msra.mxu0 0.0
    %93 = vmatpush.msra.mxu0 0.0
    %94 = vmatpush.msra.mxu0 0.0
    %95 = vmatpush.msra.mxu0 0.0
    %96 = vmatpush.msra.mxu0 0.0
    %97 = vmatpush.msra.mxu0 0.0
    %98 = vmatpush.msra.mxu0 0.0
    %99 = vmatpush.msra.mxu0 0.0
    %100 = vmatpush.msra.mxu0 0.0
    %101 = vmatpush.msra.mxu0 0.0
    %102 = vmatpush.msra.mxu0 0.0
    %103 = vmatpush.msra.mxu0 0.0
    %104 = vmatpush.msra.mxu0 0.0
    %105 = vmatpush.msra.mxu0 %v89
    %106 = vmatpush.msra.mxu0 %v30
    %107 = vmatmul.f32.gmra.mxu0 %v82
    %v108 = vpop.f32.mrf.mxu0
    %v109 = vadd.f32 %v32, %v108
    %110 = vmatmul.f32.gmra.mxu0 %v85
    %v111 = vpop.f32.mrf.mxu0
    %v112 = vadd.f32 %v32, %v111
    %113 = vdwg.mxu0
    %v114 = vmax.f32 %v109, 0.0
    %v115 = vmax.f32 %v112, 0.0
    %v116 = vld [vmem:[#allocation2 + $0x30] sm:$0xff]
    %v117 = vld [vmem:[#allocation2 + $0x40] sm:$0xff]
    %v118 = vld [vmem:[#allocation2 + $0x50] sm:$0xff]
    %v119 = vld [vmem:[#allocation2 + $0x60] sm:$0xff]
    %v120 = vld [vmem:[#allocation2 + $0x70] sm:$0xff]
    %v121 = vld [vmem:[#allocation2 + $0x80] sm:$0xff]
    %v122 = vld [vmem:[#allocation2 + $0x90] ss:$0 sm:$0xff]
    %v125 = vrot.slane %v114, 7
    %v126 = vrot.slane %v115, 7
    %v129 = vsel %vm39, 0.0, %v125
    %v130 = vsel %vm39, 0.0, %v126
    %v131 = vsel %vm39, %v125, 0.0
    %v132 = vsel %vm39, %v126, 0.0
    %v137 = vrot.slane %v129, 1
    %v138 = vrot.slane %v131, 1
    %v139 = vsel %vm48, %v137, %v138
    %v140 = vrot.slane %v130, 1
    %v141 = vrot.slane %v132, 1
    %v142 = vsel %vm48, %v140, %v141
    %143 = vrot.lane.b32.xlu0 %v139, 16
    %v144 = vpop.permute.xlu0 %143
    %145 = vrot.lane.b32.xlu0 %v142, 16
    %v146 = vpop.permute.xlu0 %145
    %v149 = vrot.slane %v129, 2
    %v150 = vrot.slane %v131, 2
    %v151 = vsel %vm61, %v149, %v150
    %v152 = vrot.slane %v130, 2
    %v153 = vrot.slane %v132, 2
    %v154 = vsel %vm61, %v152, %v153
    %155 = vrot.lane.b32.xlu0 %v151, 32
    %v156 = vpop.permute.xlu0 %155
    %157 = vrot.lane.b32.xlu0 %v154, 32
    %v158 = vpop.permute.xlu0 %157
    %vm161 = vcmask 130048
    %v162 = vsel %vm161, %v129, %v144
    %v163 = vsel %vm161, %v130, %v146
    %vm164 = vcmask 261120
    %v165 = vsel %vm164, %v162, %v156
    %v166 = vsel %vm164, %v163, %v158
    %vm167 = vcmask 392192
    %v169 = vsel %vm167, %v165, 0
    %v172 = vsel %vm167, %v166, 0
    %174 = vmatpush.msra.mxu0 0.0
    %175 = vmatpush.msra.mxu0 0.0
    %176 = vmatpush.msra.mxu0 0.0
    %177 = vmatpush.msra.mxu0 0.0
    %178 = vmatpush.msra.mxu0 0.0
    %179 = vmatpush.msra.mxu0 0.0
    %180 = vmatpush.msra.mxu0 0.0
    %181 = vmatpush.msra.mxu0 0.0
    %182 = vmatpush.msra.mxu0 0.0
    %183 = vmatpush.msra.mxu0 0.0
    %184 = vmatpush.msra.mxu0 %v121
    %185 = vmatpush.msra.mxu0 %v120
    %186 = vmatpush.msra.mxu0 %v119
    %187 = vmatpush.msra.mxu0 %v118
    %188 = vmatpush.msra.mxu0 %v117
    %189 = vmatpush.msra.mxu0 %v116
    %190 = vmatmul.f32.gmra.mxu0 %v169
    %v191 = vpop.f32.mrf.mxu0
    %v192 = vadd.f32 %v122, %v191
    %193 = vmatmul.f32.gmra.mxu0 %v172
    %v194 = vpop.f32.mrf.mxu0
    %v195 = vadd.f32 %v122, %v194
    %196 = vdwg.mxu0
    %v197 = vmax.f32 %v192, 0.0
    %v198 = vmax.f32 %v195, 0.0
    %v199 = vld [vmem:[#allocation2 + $0xa0] sm:$0xff]
    %v200 = vld [vmem:[#allocation2 + $0xa8] sm:$0xff]
    %v201 = vld [vmem:[#allocation2 + $0xb0] sm:$0xff]
    %v202 = vld [vmem:[#allocation2 + $0xb8] sm:$0xff]
    %s203 = scalar_lea.vmem [#allocation2], 192
    %v204 = vld [vmem:[%s203] ss:$8 sm:$0x3]
    %v205 = vld [vmem:[#allocation2 + $0xd0] sm:$0xff]
    %v206 = vld [vmem:[#allocation2 + $0xd8] sm:$0xff]
    %v207 = vld [vmem:[#allocation2 + $0xe0] sm:$0xff]
    %v208 = vld [vmem:[#allocation2 + $0xe8] sm:$0xff]
    %v209 = vld [vmem:[#allocation2 + $0xf0] sm:$0xff]
    %v210 = vld [vmem:[#allocation2 + $0xf8] sm:$0xff]
    %v211 = vld [vmem:[#allocation2 + $0x100] sm:$0xff]
    %v212 = vld [vmem:[#allocation2 + $0x108] sm:$0xff]
    %v213 = vld [vmem:[#allocation2 + $0x110] sm:$0xff]
    %v214 = vld [vmem:[#allocation2 + $0x118] sm:$0xff]
    %v215 = vld [vmem:[#allocation2 + $0x120] sm:$0xff]
    %v216 = vld [vmem:[#allocation2 + $0x128] sm:$0xff]
    %v217 = vld [vmem:[#allocation2 + $0x130] sm:$0xff]
    %v218 = vld [vmem:[#allocation2 + $0x138] sm:$0xff]
    %v219 = vld [vmem:[#allocation2 + $0x140] sm:$0xff]
    %v220 = vld [vmem:[#allocation2 + $0x148] sm:$0xff]
    %v222 = vperm.slane %v204, 0
    %v223 = vperm.slane %v204, 1
    %v227 = vsel %vm161, %v197, 0
    %v230 = vsel %vm161, %v198, 0
    %232 = vmatpush.msra.mxu0 0.0
    %233 = vmatpush.msra.mxu0 0.0
    %234 = vmatpush.msra.mxu0 0.0
    %235 = vmatpush.msra.mxu0 0.0
    %236 = vmatpush.msra.mxu0 0.0
    %237 = vmatpush.msra.mxu0 0.0
    %238 = vmatpush.msra.mxu0 0.0
    %239 = vmatpush.msra.mxu0 0.0
    %240 = vmatpush.msra.mxu0 0.0
    %241 = vmatpush.msra.mxu0 0.0
    %242 = vmatpush.msra.mxu0 0.0
    %243 = vmatpush.msra.mxu0 0.0
    %244 = vmatpush.msra.mxu0 0.0
    %245 = vmatpush.msra.mxu0 0.0
    %246 = vmatpush.msra.mxu0 %v201
    %247 = vmatpush.msra.mxu0 %v199
    %248 = vmatmul.f32.gmra.mxu0 %v227
    %v249 = vpop.f32.mrf.mxu0
    %v250 = vadd.f32 %v222, %v249
    %251 = vmatmul.f32.gmra.mxu0 %v230
    %v252 = vpop.f32.mrf.mxu0
    %v253 = vadd.f32 %v222, %v252
    %254 = vdwg.mxu0
    %255 = vmatpush.msra.mxu0 0.0
    %256 = vmatpush.msra.mxu0 0.0
    %257 = vmatpush.msra.mxu0 0.0
    %258 = vmatpush.msra.mxu0 0.0
    %259 = vmatpush.msra.mxu0 0.0
    %260 = vmatpush.msra.mxu0 0.0
    %261 = vmatpush.msra.mxu0 0.0
    %262 = vmatpush.msra.mxu0 0.0
    %263 = vmatpush.msra.mxu0 0.0
    %264 = vmatpush.msra.mxu0 0.0
    %265 = vmatpush.msra.mxu0 0.0
    %266 = vmatpush.msra.mxu0 0.0
    %267 = vmatpush.msra.mxu0 0.0
    %268 = vmatpush.msra.mxu0 0.0
    %269 = vmatpush.msra.mxu0 %v202
    %270 = vmatpush.msra.mxu0 %v200
    %271 = vmatmul.f32.gmra.mxu0 %v227
    %v272 = vpop.f32.mrf.mxu0
    %v273 = vadd.f32 %v223, %v272
    %274 = vmatmul.f32.gmra.mxu0 %v230
    %v275 = vpop.f32.mrf.mxu0
    %v276 = vadd.f32 %v223, %v275
    %277 = vdwg.mxu0
    %v280 = vrot.slane %v253, 7
    %vm281 = vcmask 1041409
    %v282 = vsel %vm281, %v280, %v250
    %v286 = vrot.slane %v273, 7
    %v287 = vrot.slane %v276, 6
    %v288 = vsel %vm281, %v287, %v286
    %vm290 = vcmask 523264
    %v292 = vsel %vm290, 0.0, 0
    %294 = vmatpush.msra.mxu0 0.0
    %295 = vmatpush.msra.mxu0 0.0
    %296 = vmatpush.msra.mxu0 0.0
    %297 = vmatpush.msra.mxu0 0.0
    %298 = vmatpush.msra.mxu0 0.0
    %299 = vmatpush.msra.mxu0 0.0
    %300 = vmatpush.msra.mxu0 0.0
    %301 = vmatpush.msra.mxu0 0.0
    %302 = vmatpush.msra.mxu0 %v219
    %303 = vmatpush.msra.mxu0 %v217
    %304 = vmatpush.msra.mxu0 %v215
    %305 = vmatpush.msra.mxu0 %v213
    %306 = vmatpush.msra.mxu0 %v211
    %307 = vmatpush.msra.mxu0 %v209
    %308 = vmatpush.msra.mxu0 %v207
    %309 = vmatpush.msra.mxu0 %v205
    %310 = vmatmul.f32.gmra.mxu0 %v292
    %v311 = vpop.f32.mrf.mxu0
    %v312 = vadd.f32 0.0, %v311
    %313 = vdwg.mxu0
    %314 = vmatpush.msra.mxu0 0.0
    %315 = vmatpush.msra.mxu0 0.0
    %316 = vmatpush.msra.mxu0 0.0
    %317 = vmatpush.msra.mxu0 0.0
    %318 = vmatpush.msra.mxu0 0.0
    %319 = vmatpush.msra.mxu0 0.0
    %320 = vmatpush.msra.mxu0 0.0
    %321 = vmatpush.msra.mxu0 0.0
    %322 = vmatpush.msra.mxu0 %v220
    %323 = vmatpush.msra.mxu0 %v218
    %324 = vmatpush.msra.mxu0 %v216
    %325 = vmatpush.msra.mxu0 %v214
    %326 = vmatpush.msra.mxu0 %v212
    %327 = vmatpush.msra.mxu0 %v210
    %328 = vmatpush.msra.mxu0 %v208
    %329 = vmatpush.msra.mxu0 %v206
    %330 = vmatmul.f32.gmra.mxu0 %v292
    %v331 = vpop.f32.mrf.mxu0
    %v332 = vadd.f32 0.0, %v331
    %333 = vdwg.mxu0
    %v334 = vadd.f32 %v282, %v312
    %v335 = vadd.f32 %v288, %v332
    %v336 = vxor.u32 %v334, 2147483648
    %v337 = vxor.u32 %v335, 2147483648
    %v338 = vmul.f32 %v336, 1.442695
    %v339 = vpow.pop %v338
    %v340 = vmul.f32 %v337, 1.442695
    %v341 = vpow.pop %v340
    %v342 = vadd.f32 %v339, 1.0
    %v343 = vadd.f32 %v341, 1.0
    %v344 = vrcp.pop %v342
    %v345 = vmul.f32 %v342, %v344
    %v346 = vsub.f32 1.0, %v345
    %v347 = vmul.f32 %v344, %v346
    %v348 = vadd.f32 %v344, %v347
    %vm349 = vweird.f32 %v342
    %vm350 = vweird.f32 %v344
    %vm351 = vmor %vm349, %vm350
    %v352 = vsel %vm351, %v344, %v348
    %v353 = vand.u32 2147483647, %v342
    %vm354 = vcmp.eq.f32.partialorder %v353, 8.507059e+37
    %v355 = vand.u32 %v342, 2147483648
    %v356 = vor.u32 1.1754944e-38, %v355
    %v357 = vsel %vm354, %v356, %v352
    %v358 = vmul.f32 1.0, %v357
    %v359 = vrcp.pop %v343
    %v360 = vmul.f32 %v343, %v359
    %v361 = vsub.f32 1.0, %v360
    %v362 = vmul.f32 %v359, %v361
    %v363 = vadd.f32 %v359, %v362
    %vm364 = vweird.f32 %v343
    %vm365 = vweird.f32 %v359
    %vm366 = vmor %vm364, %vm365
    %v367 = vsel %vm366, %v359, %v363
    %v368 = vand.u32 2147483647, %v343
    %vm369 = vcmp.eq.f32.partialorder %v368, 8.507059e+37
    %v370 = vand.u32 %v343, 2147483648
    %v371 = vor.u32 1.1754944e-38, %v370
    %v372 = vsel %vm369, %v371, %v367
    %v373 = vmul.f32 1.0, %v372
    %v374 = vtanh.pop %v334
    %v375 = vtanh.pop %v335
    %v376 = vmul.f32 %v358, 0.0
    %378 = vrot.lane.b32.xlu0 %v374, 64
    %v379 = vpop.permute.xlu0 %378
    %v381 = vmul.f32 %v358, %v379
    %383 = vrot.lane.b32.xlu0 %v381, 32
    %v384 = vpop.permute.xlu0 %383
    %v386 = vadd.f32 %v376, %v384
    %v387 = vmul.f32 %v373, 0.0
    %389 = vrot.lane.b32.xlu0 %v375, 64
    %v390 = vpop.permute.xlu0 %389
    %v392 = vmul.f32 %v373, %v390
    %394 = vrot.lane.b32.xlu0 %v392, 32
    %v395 = vpop.permute.xlu0 %394
    %v397 = vadd.f32 %v387, %v395
    %v398 = vtanh.pop %v386
    %400 = vrot.lane.b32.xlu0 %v398, 64
    %v401 = vpop.permute.xlu0 %400
    %v403 = vmul.f32 %v358, %v401
    %v404 = vtanh.pop %v397
    %406 = vrot.lane.b32.xlu0 %v404, 64
    %v407 = vpop.permute.xlu0 %406
    %v409 = vmul.f32 %v373, %v407
    %411 = vrot.lane.b32.xlu0 %v403, 32
    %v412 = vpop.permute.xlu0 %411
    %415 = vrot.lane.b32.xlu0 %v409, 64
    %v416 = vpop.permute.xlu0 %415
    %v418 = vsel %vm164, %v412, %v416
    %vm419 = vcmask 1042434
    %v420 = vsel %vm419, %v280, %v250
    %v422 = vrot.slane %v273, 5
    %v423 = vrot.slane %v276, 4
    %v424 = vsel %vm419, %v423, %v422
    %v427 = vsel %vm290, %v418, 0
    %429 = vmatpush.msra.mxu0 0.0
    %430 = vmatpush.msra.mxu0 0.0
    %431 = vmatpush.msra.mxu0 0.0
    %432 = vmatpush.msra.mxu0 0.0
    %433 = vmatpush.msra.mxu0 0.0
    %434 = vmatpush.msra.mxu0 0.0
    %435 = vmatpush.msra.mxu0 0.0
    %436 = vmatpush.msra.mxu0 0.0
    %437 = vmatpush.msra.mxu0 %v219
    %438 = vmatpush.msra.mxu0 %v217
    %439 = vmatpush.msra.mxu0 %v215
    %440 = vmatpush.msra.mxu0 %v213
    %441 = vmatpush.msra.mxu0 %v211
    %442 = vmatpush.msra.mxu0 %v209
    %443 = vmatpush.msra.mxu0 %v207
    %444 = vmatpush.msra.mxu0 %v205
    %445 = vmatmul.f32.gmra.mxu0 %v427
    %v446 = vpop.f32.mrf.mxu0
    %v447 = vadd.f32 0.0, %v446
    %448 = vdwg.mxu0
    %449 = vmatpush.msra.mxu0 0.0
    %450 = vmatpush.msra.mxu0 0.0
    %451 = vmatpush.msra.mxu0 0.0
    %452 = vmatpush.msra.mxu0 0.0
    %453 = vmatpush.msra.mxu0 0.0
    %454 = vmatpush.msra.mxu0 0.0
    %455 = vmatpush.msra.mxu0 0.0
    %456 = vmatpush.msra.mxu0 0.0
    %457 = vmatpush.msra.mxu0 %v220
    %458 = vmatpush.msra.mxu0 %v218
    %459 = vmatpush.msra.mxu0 %v216
    %460 = vmatpush.msra.mxu0 %v214
    %461 = vmatpush.msra.mxu0 %v212
    %462 = vmatpush.msra.mxu0 %v210
    %463 = vmatpush.msra.mxu0 %v208
    %464 = vmatpush.msra.mxu0 %v206
    %465 = vmatmul.f32.gmra.mxu0 %v427
    %v466 = vpop.f32.mrf.mxu0
    %v467 = vadd.f32 0.0, %v466
    %468 = vdwg.mxu0
    %v471 = vrot.slane %v447, 7
    %v472 = vrot.slane %v467, 7
    %v475 = vadd.f32 %v420, %v471
    %v476 = vadd.f32 %v424, %v472
    %v477 = vxor.u32 %v475, 2147483648
    %v478 = vxor.u32 %v476, 2147483648
    %v479 = vmul.f32 %v477, 1.442695
    %v480 = vpow.pop %v479
    %v481 = vmul.f32 %v478, 1.442695
    %v482 = vpow.pop %v481
    %v483 = vadd.f32 %v480, 1.0
    %v484 = vadd.f32 %v482, 1.0
    %v485 = vrcp.pop %v483
    %v486 = vmul.f32 %v483, %v485
    %v487 = vsub.f32 1.0, %v486
    %v488 = vmul.f32 %v485, %v487
    %v489 = vadd.f32 %v485, %v488
    %vm490 = vweird.f32 %v483
    %vm491 = vweird.f32 %v485
    %vm492 = vmor %vm490, %vm491
    %v493 = vsel %vm492, %v485, %v489
    %v494 = vand.u32 2147483647, %v483
    %vm495 = vcmp.eq.f32.partialorder %v494, 8.507059e+37
    %v496 = vand.u32 %v483, 2147483648
    %v497 = vor.u32 1.1754944e-38, %v496
    %v498 = vsel %vm495, %v497, %v493
    %v499 = vmul.f32 1.0, %v498
    %v500 = vrcp.pop %v484
    %v501 = vmul.f32 %v484, %v500
    %v502 = vsub.f32 1.0, %v501
    %v503 = vmul.f32 %v500, %v502
    %v504 = vadd.f32 %v500, %v503
    %vm505 = vweird.f32 %v484
    %vm506 = vweird.f32 %v500
    %vm507 = vmor %vm505, %vm506
    %v508 = vsel %vm507, %v500, %v504
    %v509 = vand.u32 2147483647, %v484
    %vm510 = vcmp.eq.f32.partialorder %v509, 8.507059e+37
    %v511 = vand.u32 %v484, 2147483648
    %v512 = vor.u32 1.1754944e-38, %v511
    %v513 = vsel %vm510, %v512, %v508
    %v514 = vmul.f32 1.0, %v513
    %v515 = vtanh.pop %v475
    %v516 = vtanh.pop %v476
    %v518 = vrot.slane %v386, 7
    %v520 = vmul.f32 %v499, %v518
    %522 = vrot.lane.b32.xlu0 %v515, 64
    %v523 = vpop.permute.xlu0 %522
    %v525 = vmul.f32 %v499, %v523
    %527 = vrot.lane.b32.xlu0 %v525, 32
    %v528 = vpop.permute.xlu0 %527
    %v530 = vadd.f32 %v520, %v528
    %v532 = vrot.slane %v397, 7
    %v534 = vmul.f32 %v514, %v532
    %536 = vrot.lane.b32.xlu0 %v516, 64
    %v537 = vpop.permute.xlu0 %536
    %v539 = vmul.f32 %v514, %v537
    %541 = vrot.lane.b32.xlu0 %v539, 32
    %v542 = vpop.permute.xlu0 %541
    %v544 = vadd.f32 %v534, %v542
    %v545 = vtanh.pop %v530
    %547 = vrot.lane.b32.xlu0 %v545, 64
    %v548 = vpop.permute.xlu0 %547
    %v550 = vmul.f32 %v499, %v548
    %v551 = vtanh.pop %v544
    %553 = vrot.lane.b32.xlu0 %v551, 64
    %v554 = vpop.permute.xlu0 %553
    %v556 = vmul.f32 %v514, %v554
    %558 = vrot.lane.b32.xlu0 %v550, 32
    %v559 = vpop.permute.xlu0 %558
    %562 = vrot.lane.b32.xlu0 %v556, 64
    %v563 = vpop.permute.xlu0 %562
    %v565 = vsel %vm164, %v559, %v563
    %vm566 = vcmask 1043459
    %v567 = vsel %vm566, %v280, %v250
    %v569 = vrot.slane %v273, 3
    %v570 = vrot.slane %v276, 2
    %v571 = vsel %vm566, %v570, %v569
    %v574 = vrot.slane %v565, 1
    %v575 = vsel %vm290, %v574, 0
    %577 = vmatpush.msra.mxu0 0.0
    %578 = vmatpush.msra.mxu0 0.0
    %579 = vmatpush.msra.mxu0 0.0
    %580 = vmatpush.msra.mxu0 0.0
    %581 = vmatpush.msra.mxu0 0.0
    %582 = vmatpush.msra.mxu0 0.0
    %583 = vmatpush.msra.mxu0 0.0
    %584 = vmatpush.msra.mxu0 0.0
    %585 = vmatpush.msra.mxu0 %v219
    %586 = vmatpush.msra.mxu0 %v217
    %587 = vmatpush.msra.mxu0 %v215
    %588 = vmatpush.msra.mxu0 %v213
    %589 = vmatpush.msra.mxu0 %v211
    %590 = vmatpush.msra.mxu0 %v209
    %591 = vmatpush.msra.mxu0 %v207
    %592 = vmatpush.msra.mxu0 %v205
    %593 = vmatmul.f32.gmra.mxu0 %v575
    %v594 = vpop.f32.mrf.mxu0
    %v595 = vadd.f32 0.0, %v594
    %596 = vdwg.mxu0
    %597 = vmatpush.msra.mxu0 0.0
    %598 = vmatpush.msra.mxu0 0.0
    %599 = vmatpush.msra.mxu0 0.0
    %600 = vmatpush.msra.mxu0 0.0
    %601 = vmatpush.msra.mxu0 0.0
    %602 = vmatpush.msra.mxu0 0.0
    %603 = vmatpush.msra.mxu0 0.0
    %604 = vmatpush.msra.mxu0 0.0
    %605 = vmatpush.msra.mxu0 %v220
    %606 = vmatpush.msra.mxu0 %v218
    %607 = vmatpush.msra.mxu0 %v216
    %608 = vmatpush.msra.mxu0 %v214
    %609 = vmatpush.msra.mxu0 %v212
    %610 = vmatpush.msra.mxu0 %v210
    %611 = vmatpush.msra.mxu0 %v208
    %612 = vmatpush.msra.mxu0 %v206
    %613 = vmatmul.f32.gmra.mxu0 %v575
    %v614 = vpop.f32.mrf.mxu0
    %v615 = vadd.f32 0.0, %v614
    %616 = vdwg.mxu0
    %v619 = vrot.slane %v595, 6
    %v620 = vrot.slane %v615, 6
    %v623 = vadd.f32 %v567, %v619
    %v624 = vadd.f32 %v571, %v620
    %v625 = vxor.u32 %v623, 2147483648
    %v626 = vxor.u32 %v624, 2147483648
    %v627 = vmul.f32 %v625, 1.442695
    %v628 = vpow.pop %v627
    %v629 = vmul.f32 %v626, 1.442695
    %v630 = vpow.pop %v629
    %v631 = vadd.f32 %v628, 1.0
    %v632 = vadd.f32 %v630, 1.0
    %v633 = vrcp.pop %v631
    %v634 = vmul.f32 %v631, %v633
    %v635 = vsub.f32 1.0, %v634
    %v636 = vmul.f32 %v633, %v635
    %v637 = vadd.f32 %v633, %v636
    %vm638 = vweird.f32 %v631
    %vm639 = vweird.f32 %v633
    %vm640 = vmor %vm638, %vm639
    %v641 = vsel %vm640, %v633, %v637
    %v642 = vand.u32 2147483647, %v631
    %vm643 = vcmp.eq.f32.partialorder %v642, 8.507059e+37
    %v644 = vand.u32 %v631, 2147483648
    %v645 = vor.u32 1.1754944e-38, %v644
    %v646 = vsel %vm643, %v645, %v641
    %v647 = vmul.f32 1.0, %v646
    %v648 = vrcp.pop %v632
    %v649 = vmul.f32 %v632, %v648
    %v650 = vsub.f32 1.0, %v649
    %v651 = vmul.f32 %v648, %v650
    %v652 = vadd.f32 %v648, %v651
    %vm653 = vweird.f32 %v632
    %vm654 = vweird.f32 %v648
    %vm655 = vmor %vm653, %vm654
    %v656 = vsel %vm655, %v648, %v652
    %v657 = vand.u32 2147483647, %v632
    %vm658 = vcmp.eq.f32.partialorder %v657, 8.507059e+37
    %v659 = vand.u32 %v632, 2147483648
    %v660 = vor.u32 1.1754944e-38, %v659
    %v661 = vsel %vm658, %v660, %v656
    %v662 = vmul.f32 1.0, %v661
    %v663 = vtanh.pop %v623
    %v664 = vtanh.pop %v624
    %v666 = vrot.slane %v530, 7
    %v668 = vmul.f32 %v647, %v666
    %670 = vrot.lane.b32.xlu0 %v663, 64
    %v671 = vpop.permute.xlu0 %670
    %v673 = vmul.f32 %v647, %v671
    %675 = vrot.lane.b32.xlu0 %v673, 32
    %v676 = vpop.permute.xlu0 %675
    %v678 = vadd.f32 %v668, %v676
    %v680 = vrot.slane %v544, 7
    %v682 = vmul.f32 %v662, %v680
    %684 = vrot.lane.b32.xlu0 %v664, 64
    %v685 = vpop.permute.xlu0 %684
    %v687 = vmul.f32 %v662, %v685
    %689 = vrot.lane.b32.xlu0 %v687, 32
    %v690 = vpop.permute.xlu0 %689
    %v692 = vadd.f32 %v682, %v690
    %v693 = vtanh.pop %v678
    %695 = vrot.lane.b32.xlu0 %v693, 64
    %v696 = vpop.permute.xlu0 %695
    %v698 = vmul.f32 %v647, %v696
    %v699 = vtanh.pop %v692
    %701 = vrot.lane.b32.xlu0 %v699, 64
    %v702 = vpop.permute.xlu0 %701
    %v704 = vmul.f32 %v662, %v702
    %706 = vrot.lane.b32.xlu0 %v698, 32
    %v707 = vpop.permute.xlu0 %706
    %710 = vrot.lane.b32.xlu0 %v704, 64
    %v711 = vpop.permute.xlu0 %710
    %v713 = vsel %vm164, %v707, %v711
    %vm714 = vcmask 1044484
    %v715 = vsel %vm714, %v280, %v250
    %v717 = vrot.slane %v273, 1
    %v718 = vsel %vm714, %v276, %v717
    %v721 = vrot.slane %v713, 2
    %v722 = vsel %vm290, %v721, 0
    %724 = vmatpush.msra.mxu0 0.0
    %725 = vmatpush.msra.mxu0 0.0
    %726 = vmatpush.msra.mxu0 0.0
    %727 = vmatpush.msra.mxu0 0.0
    %728 = vmatpush.msra.mxu0 0.0
    %729 = vmatpush.msra.mxu0 0.0
    %730 = vmatpush.msra.mxu0 0.0
    %731 = vmatpush.msra.mxu0 0.0
    %732 = vmatpush.msra.mxu0 %v219
    %733 = vmatpush.msra.mxu0 %v217
    %734 = vmatpush.msra.mxu0 %v215
    %735 = vmatpush.msra.mxu0 %v213
    %736 = vmatpush.msra.mxu0 %v211
    %737 = vmatpush.msra.mxu0 %v209
    %738 = vmatpush.msra.mxu0 %v207
    %739 = vmatpush.msra.mxu0 %v205
    %740 = vmatmul.f32.gmra.mxu0 %v722
    %v741 = vpop.f32.mrf.mxu0
    %v742 = vadd.f32 0.0, %v741
    %743 = vdwg.mxu0
    %744 = vmatpush.msra.mxu0 0.0
    %745 = vmatpush.msra.mxu0 0.0
    %746 = vmatpush.msra.mxu0 0.0
    %747 = vmatpush.msra.mxu0 0.0
    %748 = vmatpush.msra.mxu0 0.0
    %749 = vmatpush.msra.mxu0 0.0
    %750 = vmatpush.msra.mxu0 0.0
    %751 = vmatpush.msra.mxu0 0.0
    %752 = vmatpush.msra.mxu0 %v220
    %753 = vmatpush.msra.mxu0 %v218
    %754 = vmatpush.msra.mxu0 %v216
    %755 = vmatpush.msra.mxu0 %v214
    %756 = vmatpush.msra.mxu0 %v212
    %757 = vmatpush.msra.mxu0 %v210
    %758 = vmatpush.msra.mxu0 %v208
    %759 = vmatpush.msra.mxu0 %v206
    %760 = vmatmul.f32.gmra.mxu0 %v722
    %v761 = vpop.f32.mrf.mxu0
    %v762 = vadd.f32 0.0, %v761
    %763 = vdwg.mxu0
    %v766 = vrot.slane %v742, 5
    %v767 = vrot.slane %v762, 5
    %v770 = vadd.f32 %v715, %v766
    %v771 = vadd.f32 %v718, %v767
    %v772 = vxor.u32 %v770, 2147483648
    %v773 = vxor.u32 %v771, 2147483648
    %v774 = vmul.f32 %v772, 1.442695
    %v775 = vpow.pop %v774
    %v776 = vmul.f32 %v773, 1.442695
    %v777 = vpow.pop %v776
    %v778 = vadd.f32 %v775, 1.0
    %v779 = vadd.f32 %v777, 1.0
    %v780 = vrcp.pop %v778
    %v781 = vmul.f32 %v778, %v780
    %v782 = vsub.f32 1.0, %v781
    %v783 = vmul.f32 %v780, %v782
    %v784 = vadd.f32 %v780, %v783
    %vm785 = vweird.f32 %v778
    %vm786 = vweird.f32 %v780
    %vm787 = vmor %vm785, %vm786
    %v788 = vsel %vm787, %v780, %v784
    %v789 = vand.u32 2147483647, %v778
    %vm790 = vcmp.eq.f32.partialorder %v789, 8.507059e+37
    %v791 = vand.u32 %v778, 2147483648
    %v792 = vor.u32 1.1754944e-38, %v791
    %v793 = vsel %vm790, %v792, %v788
    %v794 = vmul.f32 1.0, %v793
    %v795 = vrcp.pop %v779
    %v796 = vmul.f32 %v779, %v795
    %v797 = vsub.f32 1.0, %v796
    %v798 = vmul.f32 %v795, %v797
    %v799 = vadd.f32 %v795, %v798
    %vm800 = vweird.f32 %v779
    %vm801 = vweird.f32 %v795
    %vm802 = vmor %vm800, %vm801
    %v803 = vsel %vm802, %v795, %v799
    %v804 = vand.u32 2147483647, %v779
    %vm805 = vcmp.eq.f32.partialorder %v804, 8.507059e+37
    %v806 = vand.u32 %v779, 2147483648
    %v807 = vor.u32 1.1754944e-38, %v806
    %v808 = vsel %vm805, %v807, %v803
    %v809 = vmul.f32 1.0, %v808
    %v810 = vtanh.pop %v770
    %v811 = vtanh.pop %v771
    %v813 = vrot.slane %v678, 7
    %v815 = vmul.f32 %v794, %v813
    %817 = vrot.lane.b32.xlu0 %v810, 64
    %v818 = vpop.permute.xlu0 %817
    %v820 = vmul.f32 %v794, %v818
    %822 = vrot.lane.b32.xlu0 %v820, 32
    %v823 = vpop.permute.xlu0 %822
    %v825 = vadd.f32 %v815, %v823
    %v827 = vrot.slane %v692, 7
    %v829 = vmul.f32 %v809, %v827
    %831 = vrot.lane.b32.xlu0 %v811, 64
    %v832 = vpop.permute.xlu0 %831
    %v834 = vmul.f32 %v809, %v832
    %836 = vrot.lane.b32.xlu0 %v834, 32
    %v837 = vpop.permute.xlu0 %836
    %v839 = vadd.f32 %v829, %v837
    %v840 = vtanh.pop %v825
    %842 = vrot.lane.b32.xlu0 %v840, 64
    %v843 = vpop.permute.xlu0 %842
    %v845 = vmul.f32 %v794, %v843
    %v846 = vtanh.pop %v839
    %848 = vrot.lane.b32.xlu0 %v846, 64
    %v849 = vpop.permute.xlu0 %848
    %v851 = vmul.f32 %v809, %v849
    %853 = vrot.lane.b32.xlu0 %v845, 32
    %v854 = vpop.permute.xlu0 %853
    %857 = vrot.lane.b32.xlu0 %v851, 64
    %v858 = vpop.permute.xlu0 %857
    %v860 = vsel %vm164, %v854, %v858
    %vm861 = vcmask 1045509
    %v862 = vsel %vm861, %v280, %v250
    %v864 = vsel %vm861, %v287, %v286
    %v867 = vrot.slane %v860, 3
    %v868 = vsel %vm290, %v867, 0
    %870 = vmatpush.msra.mxu0 0.0
    %871 = vmatpush.msra.mxu0 0.0
    %872 = vmatpush.msra.mxu0 0.0
    %873 = vmatpush.msra.mxu0 0.0
    %874 = vmatpush.msra.mxu0 0.0
    %875 = vmatpush.msra.mxu0 0.0
    %876 = vmatpush.msra.mxu0 0.0
    %877 = vmatpush.msra.mxu0 0.0
    %878 = vmatpush.msra.mxu0 %v219
    %879 = vmatpush.msra.mxu0 %v217
    %880 = vmatpush.msra.mxu0 %v215
    %881 = vmatpush.msra.mxu0 %v213
    %882 = vmatpush.msra.mxu0 %v211
    %883 = vmatpush.msra.mxu0 %v209
    %884 = vmatpush.msra.mxu0 %v207
    %885 = vmatpush.msra.mxu0 %v205
    %886 = vmatmul.f32.gmra.mxu0 %v868
    %v887 = vpop.f32.mrf.mxu0
    %v888 = vadd.f32 0.0, %v887
    %889 = vdwg.mxu0
    %890 = vmatpush.msra.mxu0 0.0
    %891 = vmatpush.msra.mxu0 0.0
    %892 = vmatpush.msra.mxu0 0.0
    %893 = vmatpush.msra.mxu0 0.0
    %894 = vmatpush.msra.mxu0 0.0
    %895 = vmatpush.msra.mxu0 0.0
    %896 = vmatpush.msra.mxu0 0.0
    %897 = vmatpush.msra.mxu0 0.0
    %898 = vmatpush.msra.mxu0 %v220
    %899 = vmatpush.msra.mxu0 %v218
    %900 = vmatpush.msra.mxu0 %v216
    %901 = vmatpush.msra.mxu0 %v214
    %902 = vmatpush.msra.mxu0 %v212
    %903 = vmatpush.msra.mxu0 %v210
    %904 = vmatpush.msra.mxu0 %v208
    %905 = vmatpush.msra.mxu0 %v206
    %906 = vmatmul.f32.gmra.mxu0 %v868
    %v907 = vpop.f32.mrf.mxu0
    %v908 = vadd.f32 0.0, %v907
    %909 = vdwg.mxu0
    %v912 = vrot.slane %v888, 4
    %v913 = vrot.slane %v908, 4
    %v916 = vadd.f32 %v862, %v912
    %v917 = vadd.f32 %v864, %v913
    %v918 = vxor.u32 %v916, 2147483648
    %v919 = vxor.u32 %v917, 2147483648
    %v920 = vmul.f32 %v918, 1.442695
    %v921 = vpow.pop %v920
    %v922 = vmul.f32 %v919, 1.442695
    %v923 = vpow.pop %v922
    %v924 = vadd.f32 %v921, 1.0
    %v925 = vadd.f32 %v923, 1.0
    %v926 = vrcp.pop %v924
    %v927 = vmul.f32 %v924, %v926
    %v928 = vsub.f32 1.0, %v927
    %v929 = vmul.f32 %v926, %v928
    %v930 = vadd.f32 %v926, %v929
    %vm931 = vweird.f32 %v924
    %vm932 = vweird.f32 %v926
    %vm933 = vmor %vm931, %vm932
    %v934 = vsel %vm933, %v926, %v930
    %v935 = vand.u32 2147483647, %v924
    %vm936 = vcmp.eq.f32.partialorder %v935, 8.507059e+37
    %v937 = vand.u32 %v924, 2147483648
    %v938 = vor.u32 1.1754944e-38, %v937
    %v939 = vsel %vm936, %v938, %v934
    %v940 = vmul.f32 1.0, %v939
    %v941 = vrcp.pop %v925
    %v942 = vmul.f32 %v925, %v941
    %v943 = vsub.f32 1.0, %v942
    %v944 = vmul.f32 %v941, %v943
    %v945 = vadd.f32 %v941, %v944
    %vm946 = vweird.f32 %v925
    %vm947 = vweird.f32 %v941
    %vm948 = vmor %vm946, %vm947
    %v949 = vsel %vm948, %v941, %v945
    %v950 = vand.u32 2147483647, %v925
    %vm951 = vcmp.eq.f32.partialorder %v950, 8.507059e+37
    %v952 = vand.u32 %v925, 2147483648
    %v953 = vor.u32 1.1754944e-38, %v952
    %v954 = vsel %vm951, %v953, %v949
    %v955 = vmul.f32 1.0, %v954
    %v956 = vtanh.pop %v916
    %v957 = vtanh.pop %v917
    %v959 = vrot.slane %v825, 7
    %v961 = vmul.f32 %v940, %v959
    %963 = vrot.lane.b32.xlu0 %v956, 64
    %v964 = vpop.permute.xlu0 %963
    %v966 = vmul.f32 %v940, %v964
    %968 = vrot.lane.b32.xlu0 %v966, 32
    %v969 = vpop.permute.xlu0 %968
    %v971 = vadd.f32 %v961, %v969
    %v973 = vrot.slane %v839, 7
    %v975 = vmul.f32 %v955, %v973
    %977 = vrot.lane.b32.xlu0 %v957, 64
    %v978 = vpop.permute.xlu0 %977
    %v980 = vmul.f32 %v955, %v978
    %982 = vrot.lane.b32.xlu0 %v980, 32
    %v983 = vpop.permute.xlu0 %982
    %v985 = vadd.f32 %v975, %v983
    %v986 = vtanh.pop %v971
    %988 = vrot.lane.b32.xlu0 %v986, 64
    %v989 = vpop.permute.xlu0 %988
    %v991 = vmul.f32 %v940, %v989
    %v992 = vtanh.pop %v985
    %994 = vrot.lane.b32.xlu0 %v992, 64
    %v995 = vpop.permute.xlu0 %994
    %v997 = vmul.f32 %v955, %v995
    %999 = vrot.lane.b32.xlu0 %v991, 32
    %v1000 = vpop.permute.xlu0 %999
    %1003 = vrot.lane.b32.xlu0 %v997, 64
    %v1004 = vpop.permute.xlu0 %1003
    %v1006 = vsel %vm164, %v1000, %v1004
    %vm1007 = vcmask 1046534
    %v1008 = vsel %vm1007, %v280, %v250
    %v1010 = vsel %vm1007, %v423, %v422
    %v1013 = vrot.slane %v1006, 4
    %v1014 = vsel %vm290, %v1013, 0
    %1016 = vmatpush.msra.mxu0 0.0
    %1017 = vmatpush.msra.mxu0 0.0
    %1018 = vmatpush.msra.mxu0 0.0
    %1019 = vmatpush.msra.mxu0 0.0
    %1020 = vmatpush.msra.mxu0 0.0
    %1021 = vmatpush.msra.mxu0 0.0
    %1022 = vmatpush.msra.mxu0 0.0
    %1023 = vmatpush.msra.mxu0 0.0
    %1024 = vmatpush.msra.mxu0 %v219
    %1025 = vmatpush.msra.mxu0 %v217
    %1026 = vmatpush.msra.mxu0 %v215
    %1027 = vmatpush.msra.mxu0 %v213
    %1028 = vmatpush.msra.mxu0 %v211
    %1029 = vmatpush.msra.mxu0 %v209
    %1030 = vmatpush.msra.mxu0 %v207
    %1031 = vmatpush.msra.mxu0 %v205
    %1032 = vmatmul.f32.gmra.mxu0 %v1014
    %v1033 = vpop.f32.mrf.mxu0
    %v1034 = vadd.f32 0.0, %v1033
    %1035 = vdwg.mxu0
    %1036 = vmatpush.msra.mxu0 0.0
    %1037 = vmatpush.msra.mxu0 0.0
    %1038 = vmatpush.msra.mxu0 0.0
    %1039 = vmatpush.msra.mxu0 0.0
    %1040 = vmatpush.msra.mxu0 0.0
    %1041 = vmatpush.msra.mxu0 0.0
    %1042 = vmatpush.msra.mxu0 0.0
    %1043 = vmatpush.msra.mxu0 0.0
    %1044 = vmatpush.msra.mxu0 %v220
    %1045 = vmatpush.msra.mxu0 %v218
    %1046 = vmatpush.msra.mxu0 %v216
    %1047 = vmatpush.msra.mxu0 %v214
    %1048 = vmatpush.msra.mxu0 %v212
    %1049 = vmatpush.msra.mxu0 %v210
    %1050 = vmatpush.msra.mxu0 %v208
    %1051 = vmatpush.msra.mxu0 %v206
    %1052 = vmatmul.f32.gmra.mxu0 %v1014
    %v1053 = vpop.f32.mrf.mxu0
    %v1054 = vadd.f32 0.0, %v1053
    %1055 = vdwg.mxu0
    %v1058 = vrot.slane %v1034, 3
    %v1059 = vrot.slane %v1054, 3
    %v1062 = vadd.f32 %v1008, %v1058
    %v1063 = vadd.f32 %v1010, %v1059
    %v1064 = vxor.u32 %v1062, 2147483648
    %v1065 = vxor.u32 %v1063, 2147483648
    %v1066 = vmul.f32 %v1064, 1.442695
    %v1067 = vpow.pop %v1066
    %v1068 = vmul.f32 %v1065, 1.442695
    %v1069 = vpow.pop %v1068
    %v1070 = vadd.f32 %v1067, 1.0
    %v1071 = vadd.f32 %v1069, 1.0
    %v1072 = vrcp.pop %v1070
    %v1073 = vmul.f32 %v1070, %v1072
    %v1074 = vsub.f32 1.0, %v1073
    %v1075 = vmul.f32 %v1072, %v1074
    %v1076 = vadd.f32 %v1072, %v1075
    %vm1077 = vweird.f32 %v1070
    %vm1078 = vweird.f32 %v1072
    %vm1079 = vmor %vm1077, %vm1078
    %v1080 = vsel %vm1079, %v1072, %v1076
    %v1081 = vand.u32 2147483647, %v1070
    %vm1082 = vcmp.eq.f32.partialorder %v1081, 8.507059e+37
    %v1083 = vand.u32 %v1070, 2147483648
    %v1084 = vor.u32 1.1754944e-38, %v1083
    %v1085 = vsel %vm1082, %v1084, %v1080
    %v1086 = vmul.f32 1.0, %v1085
    %v1087 = vrcp.pop %v1071
    %v1088 = vmul.f32 %v1071, %v1087
    %v1089 = vsub.f32 1.0, %v1088
    %v1090 = vmul.f32 %v1087, %v1089
    %v1091 = vadd.f32 %v1087, %v1090
    %vm1092 = vweird.f32 %v1071
    %vm1093 = vweird.f32 %v1087
    %vm1094 = vmor %vm1092, %vm1093
    %v1095 = vsel %vm1094, %v1087, %v1091
    %v1096 = vand.u32 2147483647, %v1071
    %vm1097 = vcmp.eq.f32.partialorder %v1096, 8.507059e+37
    %v1098 = vand.u32 %v1071, 2147483648
    %v1099 = vor.u32 1.1754944e-38, %v1098
    %v1100 = vsel %vm1097, %v1099, %v1095
    %v1101 = vmul.f32 1.0, %v1100
    %v1102 = vtanh.pop %v1062
    %v1103 = vtanh.pop %v1063
    %v1105 = vrot.slane %v971, 7
    %v1107 = vmul.f32 %v1086, %v1105
    %1109 = vrot.lane.b32.xlu0 %v1102, 64
    %v1110 = vpop.permute.xlu0 %1109
    %v1112 = vmul.f32 %v1086, %v1110
    %1114 = vrot.lane.b32.xlu0 %v1112, 32
    %v1115 = vpop.permute.xlu0 %1114
    %v1117 = vadd.f32 %v1107, %v1115
    %v1119 = vrot.slane %v985, 7
    %v1121 = vmul.f32 %v1101, %v1119
    %1123 = vrot.lane.b32.xlu0 %v1103, 64
    %v1124 = vpop.permute.xlu0 %1123
    %v1126 = vmul.f32 %v1101, %v1124
    %1128 = vrot.lane.b32.xlu0 %v1126, 32
    %v1129 = vpop.permute.xlu0 %1128
    %v1131 = vadd.f32 %v1121, %v1129
    %v1132 = vtanh.pop %v1117
    %1134 = vrot.lane.b32.xlu0 %v1132, 64
    %v1135 = vpop.permute.xlu0 %1134
    %v1137 = vmul.f32 %v1086, %v1135
    %v1138 = vtanh.pop %v1131
    %1140 = vrot.lane.b32.xlu0 %v1138, 64
    %v1141 = vpop.permute.xlu0 %1140
    %v1143 = vmul.f32 %v1101, %v1141
    %1145 = vrot.lane.b32.xlu0 %v1137, 32
    %v1146 = vpop.permute.xlu0 %1145
    %1149 = vrot.lane.b32.xlu0 %v1143, 64
    %v1150 = vpop.permute.xlu0 %1149
    %v1152 = vsel %vm164, %v1146, %v1150
    %vm1153 = vcmask 1047559
    %v1154 = vsel %vm1153, %v280, %v250
    %v1156 = vsel %vm1153, %v570, %v569
    %v1159 = vrot.slane %v1152, 5
    %v1160 = vsel %vm290, %v1159, 0
    %1162 = vmatpush.msra.mxu0 0.0
    %1163 = vmatpush.msra.mxu0 0.0
    %1164 = vmatpush.msra.mxu0 0.0
    %1165 = vmatpush.msra.mxu0 0.0
    %1166 = vmatpush.msra.mxu0 0.0
    %1167 = vmatpush.msra.mxu0 0.0
    %1168 = vmatpush.msra.mxu0 0.0
    %1169 = vmatpush.msra.mxu0 0.0
    %1170 = vmatpush.msra.mxu0 %v219
    %1171 = vmatpush.msra.mxu0 %v217
    %1172 = vmatpush.msra.mxu0 %v215
    %1173 = vmatpush.msra.mxu0 %v213
    %1174 = vmatpush.msra.mxu0 %v211
    %1175 = vmatpush.msra.mxu0 %v209
    %1176 = vmatpush.msra.mxu0 %v207
    %1177 = vmatpush.msra.mxu0 %v205
    %1178 = vmatmul.f32.gmra.mxu0 %v1160
    %v1179 = vpop.f32.mrf.mxu0
    %v1180 = vadd.f32 0.0, %v1179
    %1181 = vdwg.mxu0
    %1182 = vmatpush.msra.mxu0 0.0
    %1183 = vmatpush.msra.mxu0 0.0
    %1184 = vmatpush.msra.mxu0 0.0
    %1185 = vmatpush.msra.mxu0 0.0
    %1186 = vmatpush.msra.mxu0 0.0
    %1187 = vmatpush.msra.mxu0 0.0
    %1188 = vmatpush.msra.mxu0 0.0
    %1189 = vmatpush.msra.mxu0 0.0
    %1190 = vmatpush.msra.mxu0 %v220
    %1191 = vmatpush.msra.mxu0 %v218
    %1192 = vmatpush.msra.mxu0 %v216
    %1193 = vmatpush.msra.mxu0 %v214
    %1194 = vmatpush.msra.mxu0 %v212
    %1195 = vmatpush.msra.mxu0 %v210
    %1196 = vmatpush.msra.mxu0 %v208
    %1197 = vmatpush.msra.mxu0 %v206
    %1198 = vmatmul.f32.gmra.mxu0 %v1160
    %v1199 = vpop.f32.mrf.mxu0
    %v1200 = vadd.f32 0.0, %v1199
    %1201 = vdwg.mxu0
    %v1204 = vrot.slane %v1180, 2
    %v1205 = vrot.slane %v1200, 2
    %v1208 = vadd.f32 %v1154, %v1204
    %v1209 = vadd.f32 %v1156, %v1205
    %v1210 = vxor.u32 %v1208, 2147483648
    %v1211 = vxor.u32 %v1209, 2147483648
    %v1212 = vmul.f32 %v1210, 1.442695
    %v1213 = vpow.pop %v1212
    %v1214 = vmul.f32 %v1211, 1.442695
    %v1215 = vpow.pop %v1214
    %v1216 = vadd.f32 %v1213, 1.0
    %v1217 = vadd.f32 %v1215, 1.0
    %v1218 = vrcp.pop %v1216
    %v1219 = vmul.f32 %v1216, %v1218
    %v1220 = vsub.f32 1.0, %v1219
    %v1221 = vmul.f32 %v1218, %v1220
    %v1222 = vadd.f32 %v1218, %v1221
    %vm1223 = vweird.f32 %v1216
    %vm1224 = vweird.f32 %v1218
    %vm1225 = vmor %vm1223, %vm1224
    %v1226 = vsel %vm1225, %v1218, %v1222
    %v1227 = vand.u32 2147483647, %v1216
    %vm1228 = vcmp.eq.f32.partialorder %v1227, 8.507059e+37
    %v1229 = vand.u32 %v1216, 2147483648
    %v1230 = vor.u32 1.1754944e-38, %v1229
    %v1231 = vsel %vm1228, %v1230, %v1226
    %v1232 = vmul.f32 1.0, %v1231
    %v1233 = vrcp.pop %v1217
    %v1234 = vmul.f32 %v1217, %v1233
    %v1235 = vsub.f32 1.0, %v1234
    %v1236 = vmul.f32 %v1233, %v1235
    %v1237 = vadd.f32 %v1233, %v1236
    %vm1238 = vweird.f32 %v1217
    %vm1239 = vweird.f32 %v1233
    %vm1240 = vmor %vm1238, %vm1239
    %v1241 = vsel %vm1240, %v1233, %v1237
    %v1242 = vand.u32 2147483647, %v1217
    %vm1243 = vcmp.eq.f32.partialorder %v1242, 8.507059e+37
    %v1244 = vand.u32 %v1217, 2147483648
    %v1245 = vor.u32 1.1754944e-38, %v1244
    %v1246 = vsel %vm1243, %v1245, %v1241
    %v1247 = vmul.f32 1.0, %v1246
    %v1248 = vtanh.pop %v1208
    %v1249 = vtanh.pop %v1209
    %v1251 = vrot.slane %v1117, 7
    %v1253 = vmul.f32 %v1232, %v1251
    %1255 = vrot.lane.b32.xlu0 %v1248, 64
    %v1256 = vpop.permute.xlu0 %1255
    %v1258 = vmul.f32 %v1232, %v1256
    %1260 = vrot.lane.b32.xlu0 %v1258, 32
    %v1261 = vpop.permute.xlu0 %1260
    %v1263 = vadd.f32 %v1253, %v1261
    %v1265 = vrot.slane %v1131, 7
    %v1267 = vmul.f32 %v1247, %v1265
    %1269 = vrot.lane.b32.xlu0 %v1249, 64
    %v1270 = vpop.permute.xlu0 %1269
    %v1272 = vmul.f32 %v1247, %v1270
    %1274 = vrot.lane.b32.xlu0 %v1272, 32
    %v1275 = vpop.permute.xlu0 %1274
    %v1277 = vadd.f32 %v1267, %v1275
    %v1278 = vtanh.pop %v1263
    %1280 = vrot.lane.b32.xlu0 %v1278, 64
    %v1281 = vpop.permute.xlu0 %1280
    %v1283 = vmul.f32 %v1232, %v1281
    %v1284 = vtanh.pop %v1277
    %1286 = vrot.lane.b32.xlu0 %v1284, 64
    %v1287 = vpop.permute.xlu0 %1286
    %v1289 = vmul.f32 %v1247, %v1287
    %1291 = vrot.lane.b32.xlu0 %v1283, 32
    %v1292 = vpop.permute.xlu0 %1291
    %1295 = vrot.lane.b32.xlu0 %v1289, 64
    %v1296 = vpop.permute.xlu0 %1295
    %v1298 = vsel %vm164, %v1292, %v1296
    %v1304 = vrot.slane %v1298, 6
    %v1305 = vsel %vm290, %v1304, 0
    %1307 = vmatpush.msra.mxu0 0.0
    %1308 = vmatpush.msra.mxu0 0.0
    %1309 = vmatpush.msra.mxu0 0.0
    %1310 = vmatpush.msra.mxu0 0.0
    %1311 = vmatpush.msra.mxu0 0.0
    %1312 = vmatpush.msra.mxu0 0.0
    %1313 = vmatpush.msra.mxu0 0.0
    %1314 = vmatpush.msra.mxu0 0.0
    %1315 = vmatpush.msra.mxu0 %v219
    %1316 = vmatpush.msra.mxu0 %v217
    %1317 = vmatpush.msra.mxu0 %v215
    %1318 = vmatpush.msra.mxu0 %v213
    %1319 = vmatpush.msra.mxu0 %v211
    %1320 = vmatpush.msra.mxu0 %v209
    %1321 = vmatpush.msra.mxu0 %v207
    %1322 = vmatpush.msra.mxu0 %v205
    %1323 = vmatmul.f32.gmra.mxu0 %v1305
    %v1324 = vpop.f32.mrf.mxu0
    %v1325 = vadd.f32 0.0, %v1324
    %1326 = vdwg.mxu0
    %1327 = vmatpush.msra.mxu0 0.0
    %1328 = vmatpush.msra.mxu0 0.0
    %1329 = vmatpush.msra.mxu0 0.0
    %1330 = vmatpush.msra.mxu0 0.0
    %1331 = vmatpush.msra.mxu0 0.0
    %1332 = vmatpush.msra.mxu0 0.0
    %1333 = vmatpush.msra.mxu0 0.0
    %1334 = vmatpush.msra.mxu0 0.0
    %1335 = vmatpush.msra.mxu0 %v220
    %1336 = vmatpush.msra.mxu0 %v218
    %1337 = vmatpush.msra.mxu0 %v216
    %1338 = vmatpush.msra.mxu0 %v214
    %1339 = vmatpush.msra.mxu0 %v212
    %1340 = vmatpush.msra.mxu0 %v210
    %1341 = vmatpush.msra.mxu0 %v208
    %1342 = vmatpush.msra.mxu0 %v206
    %1343 = vmatmul.f32.gmra.mxu0 %v1305
    %v1344 = vpop.f32.mrf.mxu0
    %v1345 = vadd.f32 0.0, %v1344
    %1346 = vdwg.mxu0
    %v1349 = vrot.slane %v1325, 1
    %v1350 = vrot.slane %v1345, 1
    %v1353 = vadd.f32 %v250, %v1349
    %v1354 = vadd.f32 %v717, %v1350
    %v1355 = vadd.f32 %v280, %v1349
    %v1356 = vadd.f32 %v276, %v1350
    %v1357 = vxor.u32 %v1353, 2147483648
    %v1358 = vxor.u32 %v1354, 2147483648
    %v1359 = vxor.u32 %v1355, 2147483648
    %v1360 = vxor.u32 %v1356, 2147483648
    %v1361 = vmul.f32 %v1357, 1.442695
    %v1362 = vpow.pop %v1361
    %v1363 = vmul.f32 %v1358, 1.442695
    %v1364 = vpow.pop %v1363
    %v1365 = vmul.f32 %v1359, 1.442695
    %v1366 = vpow.pop %v1365
    %v1367 = vmul.f32 %v1360, 1.442695
    %v1368 = vpow.pop %v1367
    %v1369 = vadd.f32 %v1362, 1.0
    %v1370 = vadd.f32 %v1364, 1.0
    %v1371 = vadd.f32 %v1366, 1.0
    %v1372 = vadd.f32 %v1368, 1.0
    %v1373 = vrcp.pop %v1369
    %v1374 = vmul.f32 %v1369, %v1373
    %v1375 = vsub.f32 1.0, %v1374
    %v1376 = vmul.f32 %v1373, %v1375
    %v1377 = vadd.f32 %v1373, %v1376
    %vm1378 = vweird.f32 %v1369
    %vm1379 = vweird.f32 %v1373
    %vm1380 = vmor %vm1378, %vm1379
    %v1381 = vsel %vm1380, %v1373, %v1377
    %v1382 = vand.u32 2147483647, %v1369
    %vm1383 = vcmp.eq.f32.partialorder %v1382, 8.507059e+37
    %v1384 = vand.u32 %v1369, 2147483648
    %v1385 = vor.u32 1.1754944e-38, %v1384
    %v1386 = vsel %vm1383, %v1385, %v1381
    %v1387 = vmul.f32 1.0, %v1386
    %v1388 = vrcp.pop %v1370
    %v1389 = vmul.f32 %v1370, %v1388
    %v1390 = vsub.f32 1.0, %v1389
    %v1391 = vmul.f32 %v1388, %v1390
    %v1392 = vadd.f32 %v1388, %v1391
    %vm1393 = vweird.f32 %v1370
    %vm1394 = vweird.f32 %v1388
    %vm1395 = vmor %vm1393, %vm1394
    %v1396 = vsel %vm1395, %v1388, %v1392
    %v1397 = vand.u32 2147483647, %v1370
    %vm1398 = vcmp.eq.f32.partialorder %v1397, 8.507059e+37
    %v1399 = vand.u32 %v1370, 2147483648
    %v1400 = vor.u32 1.1754944e-38, %v1399
    %v1401 = vsel %vm1398, %v1400, %v1396
    %v1402 = vmul.f32 1.0, %v1401
    %v1403 = vrcp.pop %v1371
    %v1404 = vmul.f32 %v1371, %v1403
    %v1405 = vsub.f32 1.0, %v1404
    %v1406 = vmul.f32 %v1403, %v1405
    %v1407 = vadd.f32 %v1403, %v1406
    %vm1408 = vweird.f32 %v1371
    %vm1409 = vweird.f32 %v1403
    %vm1410 = vmor %vm1408, %vm1409
    %v1411 = vsel %vm1410, %v1403, %v1407
    %v1412 = vand.u32 2147483647, %v1371
    %vm1413 = vcmp.eq.f32.partialorder %v1412, 8.507059e+37
    %v1414 = vand.u32 %v1371, 2147483648
    %v1415 = vor.u32 1.1754944e-38, %v1414
    %v1416 = vsel %vm1413, %v1415, %v1411
    %v1417 = vmul.f32 1.0, %v1416
    %v1418 = vrcp.pop %v1372
    %v1419 = vmul.f32 %v1372, %v1418
    %v1420 = vsub.f32 1.0, %v1419
    %v1421 = vmul.f32 %v1418, %v1420
    %v1422 = vadd.f32 %v1418, %v1421
    %vm1423 = vweird.f32 %v1372
    %vm1424 = vweird.f32 %v1418
    %vm1425 = vmor %vm1423, %vm1424
    %v1426 = vsel %vm1425, %v1418, %v1422
    %v1427 = vand.u32 2147483647, %v1372
    %vm1428 = vcmp.eq.f32.partialorder %v1427, 8.507059e+37
    %v1429 = vand.u32 %v1372, 2147483648
    %v1430 = vor.u32 1.1754944e-38, %v1429
    %v1431 = vsel %vm1428, %v1430, %v1426
    %v1432 = vmul.f32 1.0, %v1431
    %v1433 = vtanh.pop %v1353
    %v1434 = vtanh.pop %v1354
    %v1435 = vtanh.pop %v1355
    %v1436 = vtanh.pop %v1356
    %v1438 = vrot.slane %v1263, 7
    %v1440 = vmul.f32 %v1387, %v1438
    %v1441 = vmul.f32 %v1417, %v1438
    %1444 = vrot.lane.b32.xlu0 %v1433, 64
    %v1445 = vpop.permute.xlu0 %1444
    %1446 = vrot.lane.b32.xlu0 %v1435, 64
    %v1447 = vpop.permute.xlu0 %1446
    %v1450 = vmul.f32 %v1387, %v1445
    %v1451 = vmul.f32 %v1417, %v1447
    %1454 = vrot.lane.b32.xlu0 %v1450, 32
    %v1455 = vpop.permute.xlu0 %1454
    %1456 = vrot.lane.b32.xlu0 %v1451, 32
    %v1457 = vpop.permute.xlu0 %1456
    %v1460 = vadd.f32 %v1440, %v1455
    %v1461 = vadd.f32 %v1441, %v1457
    %v1463 = vrot.slane %v1277, 7
    %v1465 = vmul.f32 %v1402, %v1463
    %v1466 = vmul.f32 %v1432, %v1463
    %1469 = vrot.lane.b32.xlu0 %v1434, 64
    %v1470 = vpop.permute.xlu0 %1469
    %1471 = vrot.lane.b32.xlu0 %v1436, 64
    %v1472 = vpop.permute.xlu0 %1471
    %v1475 = vmul.f32 %v1402, %v1470
    %v1476 = vmul.f32 %v1432, %v1472
    %1479 = vrot.lane.b32.xlu0 %v1475, 32
    %v1480 = vpop.permute.xlu0 %1479
    %1481 = vrot.lane.b32.xlu0 %v1476, 32
    %v1482 = vpop.permute.xlu0 %1481
    %v1485 = vadd.f32 %v1465, %v1480
    %v1486 = vadd.f32 %v1466, %v1482
    %v1487 = vtanh.pop %v1460
    %v1488 = vtanh.pop %v1461
    %1491 = vrot.lane.b32.xlu0 %v1487, 64
    %v1492 = vpop.permute.xlu0 %1491
    %1493 = vrot.lane.b32.xlu0 %v1488, 64
    %v1494 = vpop.permute.xlu0 %1493
    %v1497 = vmul.f32 %v1387, %v1492
    %v1498 = vmul.f32 %v1417, %v1494
    %v1499 = vtanh.pop %v1485
    %v1500 = vtanh.pop %v1486
    %1503 = vrot.lane.b32.xlu0 %v1499, 64
    %v1504 = vpop.permute.xlu0 %1503
    %1505 = vrot.lane.b32.xlu0 %v1500, 64
    %v1506 = vpop.permute.xlu0 %1505
    %v1509 = vmul.f32 %v1402, %v1504
    %v1510 = vmul.f32 %v1432, %v1506
    %v1511 = vrot.slane %v403, 1
    %1513 = vst [vmem:[#allocation1] sm:$0xff] %v550
    %s1514 = scalar_lea.vmem [#allocation1], 1
    %v1515 = vld [vmem:[%s1514] ss:$9 sm:$0xff]
    %s1516 = scalar_lea.vmem [#allocation1], 2
    %v1517 = vld [vmem:[%s1516] ss:$9 sm:$0xff]
    %1518 = vst [vmem:[#allocation1] sm:$0xff] %v698
    %s1519 = scalar_lea.vmem [#allocation1], 2
    %v1520 = vld [vmem:[%s1519] ss:$9 sm:$0xff]
    %s1521 = scalar_lea.vmem [#allocation1], 3
    %v1522 = vld [vmem:[%s1521] ss:$9 sm:$0xff]
    %1523 = vst [vmem:[#allocation1] sm:$0xff] %v845
    %s1524 = scalar_lea.vmem [#allocation1], 3
    %v1525 = vld [vmem:[%s1524] ss:$9 sm:$0xff]
    %s1526 = scalar_lea.vmem [#allocation1], 4
    %v1527 = vld [vmem:[%s1526] ss:$9 sm:$0xff]
    %1528 = vst [vmem:[#allocation1] sm:$0xff] %v991
    %s1529 = scalar_lea.vmem [#allocation1], 4
    %v1530 = vld [vmem:[%s1529] ss:$9 sm:$0xff]
    %s1531 = scalar_lea.vmem [#allocation1], 5
    %v1532 = vld [vmem:[%s1531] ss:$9 sm:$0xff]
    %1533 = vst [vmem:[#allocation1] sm:$0xff] %v1137
    %s1534 = scalar_lea.vmem [#allocation1], 5
    %v1535 = vld [vmem:[%s1534] ss:$9 sm:$0xff]
    %s1536 = scalar_lea.vmem [#allocation1], 6
    %v1537 = vld [vmem:[%s1536] ss:$9 sm:$0xff]
    %1538 = vst [vmem:[#allocation1] sm:$0xff] %v1283
    %s1539 = scalar_lea.vmem [#allocation1], 6
    %v1540 = vld [vmem:[%s1539] ss:$9 sm:$0xff]
    %s1541 = scalar_lea.vmem [#allocation1], 7
    %v1542 = vld [vmem:[%s1541] ss:$9 sm:$0xff]
    %1545 = vst [vmem:[#allocation1] sm:$0xff] %v1497
    %s1546 = scalar_lea.vmem [#allocation1], 7
    %v1547 = vld [vmem:[%s1546] ss:$9 sm:$0xff]
    %1548 = vst [vmem:[#allocation1] sm:$0xff] %v1498
    %v1549 = vld [vmem:[#allocation1] ss:$9 sm:$0xff]
    %v1550 = vperm.slane %v1515, 0
    %v1551 = vperm.slane %v1517, 0
    %v1554 = vperm.slane %v1520, 0
    %v1555 = vperm.slane %v1522, 0
    %v1558 = vperm.slane %v1525, 0
    %v1559 = vperm.slane %v1527, 0
    %v1562 = vperm.slane %v1530, 0
    %v1563 = vperm.slane %v1532, 0
    %v1566 = vperm.slane %v1535, 0
    %v1567 = vperm.slane %v1537, 0
    %v1570 = vperm.slane %v1540, 0
    %v1571 = vperm.slane %v1542, 0
    %v1574 = vperm.slane %v1547, 0
    %v1575 = vperm.slane %v1549, 0
    %v1578 = vsel %vm39, %v403, %v1550
    %v1579 = vsel %vm39, %v1511, %v1551
    %vm1580 = vcmask 1041408
    %v1581 = vsel %vm1580, %v1578, %v1554
    %v1582 = vsel %vm1580, %v1579, %v1555
    %vm1583 = vcmask 1042432
    %v1584 = vsel %vm1583, %v1581, %v1558
    %v1585 = vsel %vm1583, %v1582, %v1559
    %v1586 = vsel %vm87, %v1584, %v1562
    %v1587 = vsel %vm87, %v1585, %v1563
    %vm1588 = vcmask 1044480
    %v1589 = vsel %vm1588, %v1586, %v1566
    %v1590 = vsel %vm1588, %v1587, %v1567
    %v1591 = vsel %vm61, %v1589, %v1570
    %v1592 = vsel %vm61, %v1590, %v1571
    %v1593 = vsel %vm48, %v1591, %v1574
    %v1594 = vsel %vm48, %v1592, %v1575
    %1597 = vst [vmem:[#allocation1] sm:$0xff] %v1509
    %s1598 = scalar_lea.vmem [#allocation1], 7
    %v1599 = vld [vmem:[%s1598] ss:$9 sm:$0xff]
    %1600 = vst [vmem:[#allocation1] sm:$0xff] %v1510
    %v1601 = vld [vmem:[#allocation1] ss:$9 sm:$0xff]
    %1604 = vst [vmem:[#allocation1] sm:$0xff] %v1289
    %s1605 = scalar_lea.vmem [#allocation1], 6
    %v1606 = vld [vmem:[%s1605] ss:$9 sm:$0xff]
    %s1607 = scalar_lea.vmem [#allocation1], 7
    %v1608 = vld [vmem:[%s1607] ss:$9 sm:$0xff]
    %1609 = vst [vmem:[#allocation1] sm:$0xff] %v1143
    %s1610 = scalar_lea.vmem [#allocation1], 5
    %v1611 = vld [vmem:[%s1610] ss:$9 sm:$0xff]
    %s1612 = scalar_lea.vmem [#allocation1], 6
    %v1613 = vld [vmem:[%s1612] ss:$9 sm:$0xff]
    %1614 = vst [vmem:[#allocation1] sm:$0xff] %v997
    %s1615 = scalar_lea.vmem [#allocation1], 4
    %v1616 = vld [vmem:[%s1615] ss:$9 sm:$0xff]
    %s1617 = scalar_lea.vmem [#allocation1], 5
    %v1618 = vld [vmem:[%s1617] ss:$9 sm:$0xff]
    %1619 = vst [vmem:[#allocation1] sm:$0xff] %v851
    %s1620 = scalar_lea.vmem [#allocation1], 3
    %v1621 = vld [vmem:[%s1620] ss:$9 sm:$0xff]
    %s1622 = scalar_lea.vmem [#allocation1], 4
    %v1623 = vld [vmem:[%s1622] ss:$9 sm:$0xff]
    %1624 = vst [vmem:[#allocation1] sm:$0xff] %v704
    %s1625 = scalar_lea.vmem [#allocation1], 2
    %v1626 = vld [vmem:[%s1625] ss:$9 sm:$0xff]
    %s1627 = scalar_lea.vmem [#allocation1], 3
    %v1628 = vld [vmem:[%s1627] ss:$9 sm:$0xff]
    %1629 = vst [vmem:[#allocation1] sm:$0xff] %v556
    %s1630 = scalar_lea.vmem [#allocation1], 1
    %v1631 = vld [vmem:[%s1630] ss:$9 sm:$0xff]
    %s1632 = scalar_lea.vmem [#allocation1], 2
    %v1633 = vld [vmem:[%s1632] ss:$9 sm:$0xff]
    %v1634 = vrot.slane %v409, 1
    %v1635 = vperm.slane %v1606, 0
    %v1636 = vperm.slane %v1608, 0
    %v1639 = vperm.slane %v1611, 0
    %v1640 = vperm.slane %v1613, 0
    %v1643 = vperm.slane %v1616, 0
    %v1644 = vperm.slane %v1618, 0
    %v1647 = vperm.slane %v1621, 0
    %v1648 = vperm.slane %v1623, 0
    %v1651 = vperm.slane %v1626, 0
    %v1652 = vperm.slane %v1628, 0
    %v1655 = vperm.slane %v1631, 0
    %v1656 = vperm.slane %v1633, 0
    %v1659 = vperm.slane %v409, 0
    %v1660 = vperm.slane %v1634, 0
    %v1663 = vsel %vm39, %v1599, %v1635
    %v1664 = vsel %vm39, %v1601, %v1636
    %v1665 = vsel %vm1580, %v1663, %v1639
    %v1666 = vsel %vm1580, %v1664, %v1640
    %v1667 = vsel %vm1583, %v1665, %v1643
    %v1668 = vsel %vm1583, %v1666, %v1644
    %v1669 = vsel %vm87, %v1667, %v1647
    %v1670 = vsel %vm87, %v1668, %v1648
    %v1671 = vsel %vm1588, %v1669, %v1651
    %v1672 = vsel %vm1588, %v1670, %v1652
    %v1673 = vsel %vm61, %v1671, %v1655
    %v1674 = vsel %vm61, %v1672, %v1656
    %v1675 = vsel %vm48, %v1673, %v1659
    %v1676 = vsel %vm48, %v1674, %v1660
    %1679 = vrot.lane.b32.xlu0 %v1593, 32
    %v1680 = vpop.permute.xlu0 %1679
    %1681 = vrot.lane.b32.xlu0 %v1594, 32
    %v1682 = vpop.permute.xlu0 %1681
    %1687 = vrot.lane.b32.xlu0 %v1675, 64
    %v1688 = vpop.permute.xlu0 %1687
    %1689 = vrot.lane.b32.xlu0 %v1676, 64
    %v1690 = vpop.permute.xlu0 %1689
    %v1693 = vsel %vm164, %v1680, %v1688
    %v1694 = vsel %vm164, %v1682, %v1690
    %v1695 = vld [vmem:[#allocation2 + $0x150] sm:$0xff]
    %v1696 = vld [vmem:[#allocation2 + $0x158] sm:$0xff]
    %v1697 = vld [vmem:[#allocation2 + $0x160] sm:$0xff]
    %v1698 = vld [vmem:[#allocation2 + $0x168] sm:$0xff]
    %v1699 = vld [vmem:[#allocation2 + $0x170] sm:$0xff]
    %v1700 = vld [vmem:[#allocation2 + $0x178] sm:$0xff]
    %v1701 = vld [vmem:[#allocation2 + $0x180] sm:$0xff]
    %v1702 = vld [vmem:[#allocation2 + $0x188] sm:$0xff]
    %v1703 = vld [vmem:[#allocation2 + $0x190] sm:$0xff]
    %v1704 = vld [vmem:[#allocation2 + $0x198] sm:$0xff]
    %v1705 = vld [vmem:[#allocation2 + $0x1a0] sm:$0xff]
    %v1706 = vld [vmem:[#allocation2 + $0x1a8] sm:$0xff]
    %v1707 = vld [vmem:[#allocation2 + $0x1b0] sm:$0xff]
    %v1708 = vld [vmem:[#allocation2 + $0x1b8] sm:$0xff]
    %v1709 = vld [vmem:[#allocation2 + $0x1c0] sm:$0xff]
    %v1710 = vld [vmem:[#allocation2 + $0x1c8] sm:$0xff]
    %s1711 = scalar_lea.vmem [#allocation2], 464
    %v1712 = vld [vmem:[%s1711] ss:$8 sm:$0x3]
    %v1713 = vld [vmem:[#allocation2 + $0x1e0] sm:$0xff]
    %v1714 = vld [vmem:[#allocation2 + $0x1e8] sm:$0xff]
    %v1715 = vld [vmem:[#allocation2 + $0x1f0] sm:$0xff]
    %v1716 = vld [vmem:[#allocation2 + $0x1f8] sm:$0xff]
    %v1717 = vld [vmem:[#allocation2 + $0x200] sm:$0xff]
    %v1718 = vld [vmem:[#allocation2 + $0x208] sm:$0xff]
    %v1719 = vld [vmem:[#allocation2 + $0x210] sm:$0xff]
    %v1720 = vld [vmem:[#allocation2 + $0x218] sm:$0xff]
    %v1721 = vld [vmem:[#allocation2 + $0x220] sm:$0xff]
    %v1722 = vld [vmem:[#allocation2 + $0x228] sm:$0xff]
    %v1723 = vld [vmem:[#allocation2 + $0x230] sm:$0xff]
    %v1724 = vld [vmem:[#allocation2 + $0x238] sm:$0xff]
    %v1725 = vld [vmem:[#allocation2 + $0x240] sm:$0xff]
    %v1726 = vld [vmem:[#allocation2 + $0x248] sm:$0xff]
    %v1727 = vld [vmem:[#allocation2 + $0x250] sm:$0xff]
    %v1728 = vld [vmem:[#allocation2 + $0x258] sm:$0xff]
    %v1730 = vperm.slane %v1712, 0
    %v1731 = vperm.slane %v1712, 1
    %v1735 = vsel %vm290, %v1693, 0
    %v1738 = vsel %vm290, %v1694, 0
    %1740 = vmatpush.msra.mxu0 0.0
    %1741 = vmatpush.msra.mxu0 0.0
    %1742 = vmatpush.msra.mxu0 0.0
    %1743 = vmatpush.msra.mxu0 0.0
    %1744 = vmatpush.msra.mxu0 0.0
    %1745 = vmatpush.msra.mxu0 0.0
    %1746 = vmatpush.msra.mxu0 0.0
    %1747 = vmatpush.msra.mxu0 0.0
    %1748 = vmatpush.msra.mxu0 %v1709
    %1749 = vmatpush.msra.mxu0 %v1707
    %1750 = vmatpush.msra.mxu0 %v1705
    %1751 = vmatpush.msra.mxu0 %v1703
    %1752 = vmatpush.msra.mxu0 %v1701
    %1753 = vmatpush.msra.mxu0 %v1699
    %1754 = vmatpush.msra.mxu0 %v1697
    %1755 = vmatpush.msra.mxu0 %v1695
    %1756 = vmatmul.f32.gmra.mxu0 %v1735
    %v1757 = vpop.f32.mrf.mxu0
    %v1758 = vadd.f32 %v1730, %v1757
    %1759 = vmatmul.f32.gmra.mxu0 %v1738
    %v1760 = vpop.f32.mrf.mxu0
    %v1761 = vadd.f32 %v1730, %v1760
    %1762 = vdwg.mxu0
    %1763 = vmatpush.msra.mxu0 0.0
    %1764 = vmatpush.msra.mxu0 0.0
    %1765 = vmatpush.msra.mxu0 0.0
    %1766 = vmatpush.msra.mxu0 0.0
    %1767 = vmatpush.msra.mxu0 0.0
    %1768 = vmatpush.msra.mxu0 0.0
    %1769 = vmatpush.msra.mxu0 0.0
    %1770 = vmatpush.msra.mxu0 0.0
    %1771 = vmatpush.msra.mxu0 %v1710
    %1772 = vmatpush.msra.mxu0 %v1708
    %1773 = vmatpush.msra.mxu0 %v1706
    %1774 = vmatpush.msra.mxu0 %v1704
    %1775 = vmatpush.msra.mxu0 %v1702
    %1776 = vmatpush.msra.mxu0 %v1700
    %1777 = vmatpush.msra.mxu0 %v1698
    %1778 = vmatpush.msra.mxu0 %v1696
    %1779 = vmatmul.f32.gmra.mxu0 %v1735
    %v1780 = vpop.f32.mrf.mxu0
    %v1781 = vadd.f32 %v1731, %v1780
    %1782 = vmatmul.f32.gmra.mxu0 %v1738
    %v1783 = vpop.f32.mrf.mxu0
    %v1784 = vadd.f32 %v1731, %v1783
    %1785 = vdwg.mxu0
    %v1788 = vrot.slane %v1761, 7
    %v1789 = vsel %vm281, %v1788, %v1758
    %v1793 = vrot.slane %v1781, 7
    %v1794 = vrot.slane %v1784, 6
    %v1795 = vsel %vm281, %v1794, %v1793
    %1797 = vmatpush.msra.mxu0 0.0
    %1798 = vmatpush.msra.mxu0 0.0
    %1799 = vmatpush.msra.mxu0 0.0
    %1800 = vmatpush.msra.mxu0 0.0
    %1801 = vmatpush.msra.mxu0 0.0
    %1802 = vmatpush.msra.mxu0 0.0
    %1803 = vmatpush.msra.mxu0 0.0
    %1804 = vmatpush.msra.mxu0 0.0
    %1805 = vmatpush.msra.mxu0 %v1727
    %1806 = vmatpush.msra.mxu0 %v1725
    %1807 = vmatpush.msra.mxu0 %v1723
    %1808 = vmatpush.msra.mxu0 %v1721
    %1809 = vmatpush.msra.mxu0 %v1719
    %1810 = vmatpush.msra.mxu0 %v1717
    %1811 = vmatpush.msra.mxu0 %v1715
    %1812 = vmatpush.msra.mxu0 %v1713
    %1813 = vmatmul.f32.gmra.mxu0 %v292
    %v1814 = vpop.f32.mrf.mxu0
    %v1815 = vadd.f32 0.0, %v1814
    %1816 = vdwg.mxu0
    %1817 = vmatpush.msra.mxu0 0.0
    %1818 = vmatpush.msra.mxu0 0.0
    %1819 = vmatpush.msra.mxu0 0.0
    %1820 = vmatpush.msra.mxu0 0.0
    %1821 = vmatpush.msra.mxu0 0.0
    %1822 = vmatpush.msra.mxu0 0.0
    %1823 = vmatpush.msra.mxu0 0.0
    %1824 = vmatpush.msra.mxu0 0.0
    %1825 = vmatpush.msra.mxu0 %v1728
    %1826 = vmatpush.msra.mxu0 %v1726
    %1827 = vmatpush.msra.mxu0 %v1724
    %1828 = vmatpush.msra.mxu0 %v1722
    %1829 = vmatpush.msra.mxu0 %v1720
    %1830 = vmatpush.msra.mxu0 %v1718
    %1831 = vmatpush.msra.mxu0 %v1716
    %1832 = vmatpush.msra.mxu0 %v1714
    %1833 = vmatmul.f32.gmra.mxu0 %v292
    %v1834 = vpop.f32.mrf.mxu0
    %v1835 = vadd.f32 0.0, %v1834
    %1836 = vdwg.mxu0
    %v1837 = vadd.f32 %v1789, %v1815
    %v1838 = vadd.f32 %v1795, %v1835
    %v1839 = vxor.u32 %v1837, 2147483648
    %v1840 = vxor.u32 %v1838, 2147483648
    %v1841 = vmul.f32 %v1839, 1.442695
    %v1842 = vpow.pop %v1841
    %v1843 = vmul.f32 %v1840, 1.442695
    %v1844 = vpow.pop %v1843
    %v1845 = vadd.f32 %v1842, 1.0
    %v1846 = vadd.f32 %v1844, 1.0
    %v1847 = vrcp.pop %v1845
    %v1848 = vmul.f32 %v1845, %v1847
    %v1849 = vsub.f32 1.0, %v1848
    %v1850 = vmul.f32 %v1847, %v1849
    %v1851 = vadd.f32 %v1847, %v1850
    %vm1852 = vweird.f32 %v1845
    %vm1853 = vweird.f32 %v1847
    %vm1854 = vmor %vm1852, %vm1853
    %v1855 = vsel %vm1854, %v1847, %v1851
    %v1856 = vand.u32 2147483647, %v1845
    %vm1857 = vcmp.eq.f32.partialorder %v1856, 8.507059e+37
    %v1858 = vand.u32 %v1845, 2147483648
    %v1859 = vor.u32 1.1754944e-38, %v1858
    %v1860 = vsel %vm1857, %v1859, %v1855
    %v1861 = vmul.f32 1.0, %v1860
    %v1862 = vrcp.pop %v1846
    %v1863 = vmul.f32 %v1846, %v1862
    %v1864 = vsub.f32 1.0, %v1863
    %v1865 = vmul.f32 %v1862, %v1864
    %v1866 = vadd.f32 %v1862, %v1865
    %vm1867 = vweird.f32 %v1846
    %vm1868 = vweird.f32 %v1862
    %vm1869 = vmor %vm1867, %vm1868
    %v1870 = vsel %vm1869, %v1862, %v1866
    %v1871 = vand.u32 2147483647, %v1846
    %vm1872 = vcmp.eq.f32.partialorder %v1871, 8.507059e+37
    %v1873 = vand.u32 %v1846, 2147483648
    %v1874 = vor.u32 1.1754944e-38, %v1873
    %v1875 = vsel %vm1872, %v1874, %v1870
    %v1876 = vmul.f32 1.0, %v1875
    %v1877 = vtanh.pop %v1837
    %v1878 = vtanh.pop %v1838
    %v1879 = vmul.f32 %v1861, 0.0
    %1881 = vrot.lane.b32.xlu0 %v1877, 64
    %v1882 = vpop.permute.xlu0 %1881
    %v1884 = vmul.f32 %v1861, %v1882
    %1886 = vrot.lane.b32.xlu0 %v1884, 32
    %v1887 = vpop.permute.xlu0 %1886
    %v1889 = vadd.f32 %v1879, %v1887
    %v1890 = vmul.f32 %v1876, 0.0
    %1892 = vrot.lane.b32.xlu0 %v1878, 64
    %v1893 = vpop.permute.xlu0 %1892
    %v1895 = vmul.f32 %v1876, %v1893
    %1897 = vrot.lane.b32.xlu0 %v1895, 32
    %v1898 = vpop.permute.xlu0 %1897
    %v1900 = vadd.f32 %v1890, %v1898
    %v1901 = vtanh.pop %v1889
    %1903 = vrot.lane.b32.xlu0 %v1901, 64
    %v1904 = vpop.permute.xlu0 %1903
    %v1906 = vmul.f32 %v1861, %v1904
    %v1907 = vtanh.pop %v1900
    %1909 = vrot.lane.b32.xlu0 %v1907, 64
    %v1910 = vpop.permute.xlu0 %1909
    %v1912 = vmul.f32 %v1876, %v1910
    %1914 = vrot.lane.b32.xlu0 %v1906, 32
    %v1915 = vpop.permute.xlu0 %1914
    %1918 = vrot.lane.b32.xlu0 %v1912, 64
    %v1919 = vpop.permute.xlu0 %1918
    %v1921 = vsel %vm164, %v1915, %v1919
    %v1922 = vsel %vm419, %v1788, %v1758
    %v1924 = vrot.slane %v1781, 5
    %v1925 = vrot.slane %v1784, 4
    %v1926 = vsel %vm419, %v1925, %v1924
    %v1929 = vsel %vm290, %v1921, 0
    %1931 = vmatpush.msra.mxu0 0.0
    %1932 = vmatpush.msra.mxu0 0.0
    %1933 = vmatpush.msra.mxu0 0.0
    %1934 = vmatpush.msra.mxu0 0.0
    %1935 = vmatpush.msra.mxu0 0.0
    %1936 = vmatpush.msra.mxu0 0.0
    %1937 = vmatpush.msra.mxu0 0.0
    %1938 = vmatpush.msra.mxu0 0.0
    %1939 = vmatpush.msra.mxu0 %v1727
    %1940 = vmatpush.msra.mxu0 %v1725
    %1941 = vmatpush.msra.mxu0 %v1723
    %1942 = vmatpush.msra.mxu0 %v1721
    %1943 = vmatpush.msra.mxu0 %v1719
    %1944 = vmatpush.msra.mxu0 %v1717
    %1945 = vmatpush.msra.mxu0 %v1715
    %1946 = vmatpush.msra.mxu0 %v1713
    %1947 = vmatmul.f32.gmra.mxu0 %v1929
    %v1948 = vpop.f32.mrf.mxu0
    %v1949 = vadd.f32 0.0, %v1948
    %1950 = vdwg.mxu0
    %1951 = vmatpush.msra.mxu0 0.0
    %1952 = vmatpush.msra.mxu0 0.0
    %1953 = vmatpush.msra.mxu0 0.0
    %1954 = vmatpush.msra.mxu0 0.0
    %1955 = vmatpush.msra.mxu0 0.0
    %1956 = vmatpush.msra.mxu0 0.0
    %1957 = vmatpush.msra.mxu0 0.0
    %1958 = vmatpush.msra.mxu0 0.0
    %1959 = vmatpush.msra.mxu0 %v1728
    %1960 = vmatpush.msra.mxu0 %v1726
    %1961 = vmatpush.msra.mxu0 %v1724
    %1962 = vmatpush.msra.mxu0 %v1722
    %1963 = vmatpush.msra.mxu0 %v1720
    %1964 = vmatpush.msra.mxu0 %v1718
    %1965 = vmatpush.msra.mxu0 %v1716
    %1966 = vmatpush.msra.mxu0 %v1714
    %1967 = vmatmul.f32.gmra.mxu0 %v1929
    %v1968 = vpop.f32.mrf.mxu0
    %v1969 = vadd.f32 0.0, %v1968
    %1970 = vdwg.mxu0
    %v1973 = vrot.slane %v1949, 7
    %v1974 = vrot.slane %v1969, 7
    %v1977 = vadd.f32 %v1922, %v1973
    %v1978 = vadd.f32 %v1926, %v1974
    %v1979 = vxor.u32 %v1977, 2147483648
    %v1980 = vxor.u32 %v1978, 2147483648
    %v1981 = vmul.f32 %v1979, 1.442695
    %v1982 = vpow.pop %v1981
    %v1983 = vmul.f32 %v1980, 1.442695
    %v1984 = vpow.pop %v1983
    %v1985 = vadd.f32 %v1982, 1.0
    %v1986 = vadd.f32 %v1984, 1.0
    %v1987 = vrcp.pop %v1985
    %v1988 = vmul.f32 %v1985, %v1987
    %v1989 = vsub.f32 1.0, %v1988
    %v1990 = vmul.f32 %v1987, %v1989
    %v1991 = vadd.f32 %v1987, %v1990
    %vm1992 = vweird.f32 %v1985
    %vm1993 = vweird.f32 %v1987
    %vm1994 = vmor %vm1992, %vm1993
    %v1995 = vsel %vm1994, %v1987, %v1991
    %v1996 = vand.u32 2147483647, %v1985
    %vm1997 = vcmp.eq.f32.partialorder %v1996, 8.507059e+37
    %v1998 = vand.u32 %v1985, 2147483648
    %v1999 = vor.u32 1.1754944e-38, %v1998
    %v2000 = vsel %vm1997, %v1999, %v1995
    %v2001 = vmul.f32 1.0, %v2000
    %v2002 = vrcp.pop %v1986
    %v2003 = vmul.f32 %v1986, %v2002
    %v2004 = vsub.f32 1.0, %v2003
    %v2005 = vmul.f32 %v2002, %v2004
    %v2006 = vadd.f32 %v2002, %v2005
    %vm2007 = vweird.f32 %v1986
    %vm2008 = vweird.f32 %v2002
    %vm2009 = vmor %vm2007, %vm2008
    %v2010 = vsel %vm2009, %v2002, %v2006
    %v2011 = vand.u32 2147483647, %v1986
    %vm2012 = vcmp.eq.f32.partialorder %v2011, 8.507059e+37
    %v2013 = vand.u32 %v1986, 2147483648
    %v2014 = vor.u32 1.1754944e-38, %v2013
    %v2015 = vsel %vm2012, %v2014, %v2010
    %v2016 = vmul.f32 1.0, %v2015
    %v2017 = vtanh.pop %v1977
    %v2018 = vtanh.pop %v1978
    %v2020 = vrot.slane %v1889, 7
    %v2022 = vmul.f32 %v2001, %v2020
    %2024 = vrot.lane.b32.xlu0 %v2017, 64
    %v2025 = vpop.permute.xlu0 %2024
    %v2027 = vmul.f32 %v2001, %v2025
    %2029 = vrot.lane.b32.xlu0 %v2027, 32
    %v2030 = vpop.permute.xlu0 %2029
    %v2032 = vadd.f32 %v2022, %v2030
    %v2034 = vrot.slane %v1900, 7
    %v2036 = vmul.f32 %v2016, %v2034
    %2038 = vrot.lane.b32.xlu0 %v2018, 64
    %v2039 = vpop.permute.xlu0 %2038
    %v2041 = vmul.f32 %v2016, %v2039
    %2043 = vrot.lane.b32.xlu0 %v2041, 32
    %v2044 = vpop.permute.xlu0 %2043
    %v2046 = vadd.f32 %v2036, %v2044
    %v2047 = vtanh.pop %v2032
    %2049 = vrot.lane.b32.xlu0 %v2047, 64
    %v2050 = vpop.permute.xlu0 %2049
    %v2052 = vmul.f32 %v2001, %v2050
    %v2053 = vtanh.pop %v2046
    %2055 = vrot.lane.b32.xlu0 %v2053, 64
    %v2056 = vpop.permute.xlu0 %2055
    %v2058 = vmul.f32 %v2016, %v2056
    %2060 = vrot.lane.b32.xlu0 %v2052, 32
    %v2061 = vpop.permute.xlu0 %2060
    %2064 = vrot.lane.b32.xlu0 %v2058, 64
    %v2065 = vpop.permute.xlu0 %2064
    %v2067 = vsel %vm164, %v2061, %v2065
    %v2068 = vsel %vm566, %v1788, %v1758
    %v2070 = vrot.slane %v1781, 3
    %v2071 = vrot.slane %v1784, 2
    %v2072 = vsel %vm566, %v2071, %v2070
    %v2075 = vrot.slane %v2067, 1
    %v2076 = vsel %vm290, %v2075, 0
    %2078 = vmatpush.msra.mxu0 0.0
    %2079 = vmatpush.msra.mxu0 0.0
    %2080 = vmatpush.msra.mxu0 0.0
    %2081 = vmatpush.msra.mxu0 0.0
    %2082 = vmatpush.msra.mxu0 0.0
    %2083 = vmatpush.msra.mxu0 0.0
    %2084 = vmatpush.msra.mxu0 0.0
    %2085 = vmatpush.msra.mxu0 0.0
    %2086 = vmatpush.msra.mxu0 %v1727
    %2087 = vmatpush.msra.mxu0 %v1725
    %2088 = vmatpush.msra.mxu0 %v1723
    %2089 = vmatpush.msra.mxu0 %v1721
    %2090 = vmatpush.msra.mxu0 %v1719
    %2091 = vmatpush.msra.mxu0 %v1717
    %2092 = vmatpush.msra.mxu0 %v1715
    %2093 = vmatpush.msra.mxu0 %v1713
    %2094 = vmatmul.f32.gmra.mxu0 %v2076
    %v2095 = vpop.f32.mrf.mxu0
    %v2096 = vadd.f32 0.0, %v2095
    %2097 = vdwg.mxu0
    %2098 = vmatpush.msra.mxu0 0.0
    %2099 = vmatpush.msra.mxu0 0.0
    %2100 = vmatpush.msra.mxu0 0.0
    %2101 = vmatpush.msra.mxu0 0.0
    %2102 = vmatpush.msra.mxu0 0.0
    %2103 = vmatpush.msra.mxu0 0.0
    %2104 = vmatpush.msra.mxu0 0.0
    %2105 = vmatpush.msra.mxu0 0.0
    %2106 = vmatpush.msra.mxu0 %v1728
    %2107 = vmatpush.msra.mxu0 %v1726
    %2108 = vmatpush.msra.mxu0 %v1724
    %2109 = vmatpush.msra.mxu0 %v1722
    %2110 = vmatpush.msra.mxu0 %v1720
    %2111 = vmatpush.msra.mxu0 %v1718
    %2112 = vmatpush.msra.mxu0 %v1716
    %2113 = vmatpush.msra.mxu0 %v1714
    %2114 = vmatmul.f32.gmra.mxu0 %v2076
    %v2115 = vpop.f32.mrf.mxu0
    %v2116 = vadd.f32 0.0, %v2115
    %2117 = vdwg.mxu0
    %v2120 = vrot.slane %v2096, 6
    %v2121 = vrot.slane %v2116, 6
    %v2124 = vadd.f32 %v2068, %v2120
    %v2125 = vadd.f32 %v2072, %v2121
    %v2126 = vxor.u32 %v2124, 2147483648
    %v2127 = vxor.u32 %v2125, 2147483648
    %v2128 = vmul.f32 %v2126, 1.442695
    %v2129 = vpow.pop %v2128
    %v2130 = vmul.f32 %v2127, 1.442695
    %v2131 = vpow.pop %v2130
    %v2132 = vadd.f32 %v2129, 1.0
    %v2133 = vadd.f32 %v2131, 1.0
    %v2134 = vrcp.pop %v2132
    %v2135 = vmul.f32 %v2132, %v2134
    %v2136 = vsub.f32 1.0, %v2135
    %v2137 = vmul.f32 %v2134, %v2136
    %v2138 = vadd.f32 %v2134, %v2137
    %vm2139 = vweird.f32 %v2132
    %vm2140 = vweird.f32 %v2134
    %vm2141 = vmor %vm2139, %vm2140
    %v2142 = vsel %vm2141, %v2134, %v2138
    %v2143 = vand.u32 2147483647, %v2132
    %vm2144 = vcmp.eq.f32.partialorder %v2143, 8.507059e+37
    %v2145 = vand.u32 %v2132, 2147483648
    %v2146 = vor.u32 1.1754944e-38, %v2145
    %v2147 = vsel %vm2144, %v2146, %v2142
    %v2148 = vmul.f32 1.0, %v2147
    %v2149 = vrcp.pop %v2133
    %v2150 = vmul.f32 %v2133, %v2149
    %v2151 = vsub.f32 1.0, %v2150
    %v2152 = vmul.f32 %v2149, %v2151
    %v2153 = vadd.f32 %v2149, %v2152
    %vm2154 = vweird.f32 %v2133
    %vm2155 = vweird.f32 %v2149
    %vm2156 = vmor %vm2154, %vm2155
    %v2157 = vsel %vm2156, %v2149, %v2153
    %v2158 = vand.u32 2147483647, %v2133
    %vm2159 = vcmp.eq.f32.partialorder %v2158, 8.507059e+37
    %v2160 = vand.u32 %v2133, 2147483648
    %v2161 = vor.u32 1.1754944e-38, %v2160
    %v2162 = vsel %vm2159, %v2161, %v2157
    %v2163 = vmul.f32 1.0, %v2162
    %v2164 = vtanh.pop %v2124
    %v2165 = vtanh.pop %v2125
    %v2167 = vrot.slane %v2032, 7
    %v2169 = vmul.f32 %v2148, %v2167
    %2171 = vrot.lane.b32.xlu0 %v2164, 64
    %v2172 = vpop.permute.xlu0 %2171
    %v2174 = vmul.f32 %v2148, %v2172
    %2176 = vrot.lane.b32.xlu0 %v2174, 32
    %v2177 = vpop.permute.xlu0 %2176
    %v2179 = vadd.f32 %v2169, %v2177
    %v2181 = vrot.slane %v2046, 7
    %v2183 = vmul.f32 %v2163, %v2181
    %2185 = vrot.lane.b32.xlu0 %v2165, 64
    %v2186 = vpop.permute.xlu0 %2185
    %v2188 = vmul.f32 %v2163, %v2186
    %2190 = vrot.lane.b32.xlu0 %v2188, 32
    %v2191 = vpop.permute.xlu0 %2190
    %v2193 = vadd.f32 %v2183, %v2191
    %v2194 = vtanh.pop %v2179
    %2196 = vrot.lane.b32.xlu0 %v2194, 64
    %v2197 = vpop.permute.xlu0 %2196
    %v2199 = vmul.f32 %v2148, %v2197
    %v2200 = vtanh.pop %v2193
    %2202 = vrot.lane.b32.xlu0 %v2200, 64
    %v2203 = vpop.permute.xlu0 %2202
    %v2205 = vmul.f32 %v2163, %v2203
    %2207 = vrot.lane.b32.xlu0 %v2199, 32
    %v2208 = vpop.permute.xlu0 %2207
    %2211 = vrot.lane.b32.xlu0 %v2205, 64
    %v2212 = vpop.permute.xlu0 %2211
    %v2214 = vsel %vm164, %v2208, %v2212
    %v2215 = vsel %vm714, %v1788, %v1758
    %v2217 = vrot.slane %v1781, 1
    %v2218 = vsel %vm714, %v1784, %v2217
    %v2221 = vrot.slane %v2214, 2
    %v2222 = vsel %vm290, %v2221, 0
    %2224 = vmatpush.msra.mxu0 0.0
    %2225 = vmatpush.msra.mxu0 0.0
    %2226 = vmatpush.msra.mxu0 0.0
    %2227 = vmatpush.msra.mxu0 0.0
    %2228 = vmatpush.msra.mxu0 0.0
    %2229 = vmatpush.msra.mxu0 0.0
    %2230 = vmatpush.msra.mxu0 0.0
    %2231 = vmatpush.msra.mxu0 0.0
    %2232 = vmatpush.msra.mxu0 %v1727
    %2233 = vmatpush.msra.mxu0 %v1725
    %2234 = vmatpush.msra.mxu0 %v1723
    %2235 = vmatpush.msra.mxu0 %v1721
    %2236 = vmatpush.msra.mxu0 %v1719
    %2237 = vmatpush.msra.mxu0 %v1717
    %2238 = vmatpush.msra.mxu0 %v1715
    %2239 = vmatpush.msra.mxu0 %v1713
    %2240 = vmatmul.f32.gmra.mxu0 %v2222
    %v2241 = vpop.f32.mrf.mxu0
    %v2242 = vadd.f32 0.0, %v2241
    %2243 = vdwg.mxu0
    %2244 = vmatpush.msra.mxu0 0.0
    %2245 = vmatpush.msra.mxu0 0.0
    %2246 = vmatpush.msra.mxu0 0.0
    %2247 = vmatpush.msra.mxu0 0.0
    %2248 = vmatpush.msra.mxu0 0.0
    %2249 = vmatpush.msra.mxu0 0.0
    %2250 = vmatpush.msra.mxu0 0.0
    %2251 = vmatpush.msra.mxu0 0.0
    %2252 = vmatpush.msra.mxu0 %v1728
    %2253 = vmatpush.msra.mxu0 %v1726
    %2254 = vmatpush.msra.mxu0 %v1724
    %2255 = vmatpush.msra.mxu0 %v1722
    %2256 = vmatpush.msra.mxu0 %v1720
    %2257 = vmatpush.msra.mxu0 %v1718
    %2258 = vmatpush.msra.mxu0 %v1716
    %2259 = vmatpush.msra.mxu0 %v1714
    %2260 = vmatmul.f32.gmra.mxu0 %v2222
    %v2261 = vpop.f32.mrf.mxu0
    %v2262 = vadd.f32 0.0, %v2261
    %2263 = vdwg.mxu0
    %v2266 = vrot.slane %v2242, 5
    %v2267 = vrot.slane %v2262, 5
    %v2270 = vadd.f32 %v2215, %v2266
    %v2271 = vadd.f32 %v2218, %v2267
    %v2272 = vxor.u32 %v2270, 2147483648
    %v2273 = vxor.u32 %v2271, 2147483648
    %v2274 = vmul.f32 %v2272, 1.442695
    %v2275 = vpow.pop %v2274
    %v2276 = vmul.f32 %v2273, 1.442695
    %v2277 = vpow.pop %v2276
    %v2278 = vadd.f32 %v2275, 1.0
    %v2279 = vadd.f32 %v2277, 1.0
    %v2280 = vrcp.pop %v2278
    %v2281 = vmul.f32 %v2278, %v2280
    %v2282 = vsub.f32 1.0, %v2281
    %v2283 = vmul.f32 %v2280, %v2282
    %v2284 = vadd.f32 %v2280, %v2283
    %vm2285 = vweird.f32 %v2278
    %vm2286 = vweird.f32 %v2280
    %vm2287 = vmor %vm2285, %vm2286
    %v2288 = vsel %vm2287, %v2280, %v2284
    %v2289 = vand.u32 2147483647, %v2278
    %vm2290 = vcmp.eq.f32.partialorder %v2289, 8.507059e+37
    %v2291 = vand.u32 %v2278, 2147483648
    %v2292 = vor.u32 1.1754944e-38, %v2291
    %v2293 = vsel %vm2290, %v2292, %v2288
    %v2294 = vmul.f32 1.0, %v2293
    %v2295 = vrcp.pop %v2279
    %v2296 = vmul.f32 %v2279, %v2295
    %v2297 = vsub.f32 1.0, %v2296
    %v2298 = vmul.f32 %v2295, %v2297
    %v2299 = vadd.f32 %v2295, %v2298
    %vm2300 = vweird.f32 %v2279
    %vm2301 = vweird.f32 %v2295
    %vm2302 = vmor %vm2300, %vm2301
    %v2303 = vsel %vm2302, %v2295, %v2299
    %v2304 = vand.u32 2147483647, %v2279
    %vm2305 = vcmp.eq.f32.partialorder %v2304, 8.507059e+37
    %v2306 = vand.u32 %v2279, 2147483648
    %v2307 = vor.u32 1.1754944e-38, %v2306
    %v2308 = vsel %vm2305, %v2307, %v2303
    %v2309 = vmul.f32 1.0, %v2308
    %v2310 = vtanh.pop %v2270
    %v2311 = vtanh.pop %v2271
    %v2313 = vrot.slane %v2179, 7
    %v2315 = vmul.f32 %v2294, %v2313
    %2317 = vrot.lane.b32.xlu0 %v2310, 64
    %v2318 = vpop.permute.xlu0 %2317
    %v2320 = vmul.f32 %v2294, %v2318
    %2322 = vrot.lane.b32.xlu0 %v2320, 32
    %v2323 = vpop.permute.xlu0 %2322
    %v2325 = vadd.f32 %v2315, %v2323
    %v2327 = vrot.slane %v2193, 7
    %v2329 = vmul.f32 %v2309, %v2327
    %2331 = vrot.lane.b32.xlu0 %v2311, 64
    %v2332 = vpop.permute.xlu0 %2331
    %v2334 = vmul.f32 %v2309, %v2332
    %2336 = vrot.lane.b32.xlu0 %v2334, 32
    %v2337 = vpop.permute.xlu0 %2336
    %v2339 = vadd.f32 %v2329, %v2337
    %v2340 = vtanh.pop %v2325
    %2342 = vrot.lane.b32.xlu0 %v2340, 64
    %v2343 = vpop.permute.xlu0 %2342
    %v2345 = vmul.f32 %v2294, %v2343
    %v2346 = vtanh.pop %v2339
    %2348 = vrot.lane.b32.xlu0 %v2346, 64
    %v2349 = vpop.permute.xlu0 %2348
    %v2351 = vmul.f32 %v2309, %v2349
    %2353 = vrot.lane.b32.xlu0 %v2345, 32
    %v2354 = vpop.permute.xlu0 %2353
    %2357 = vrot.lane.b32.xlu0 %v2351, 64
    %v2358 = vpop.permute.xlu0 %2357
    %v2360 = vsel %vm164, %v2354, %v2358
    %v2361 = vsel %vm861, %v1788, %v1758
    %v2363 = vsel %vm861, %v1794, %v1793
    %v2366 = vrot.slane %v2360, 3
    %v2367 = vsel %vm290, %v2366, 0
    %2369 = vmatpush.msra.mxu0 0.0
    %2370 = vmatpush.msra.mxu0 0.0
    %2371 = vmatpush.msra.mxu0 0.0
    %2372 = vmatpush.msra.mxu0 0.0
    %2373 = vmatpush.msra.mxu0 0.0
    %2374 = vmatpush.msra.mxu0 0.0
    %2375 = vmatpush.msra.mxu0 0.0
    %2376 = vmatpush.msra.mxu0 0.0
    %2377 = vmatpush.msra.mxu0 %v1727
    %2378 = vmatpush.msra.mxu0 %v1725
    %2379 = vmatpush.msra.mxu0 %v1723
    %2380 = vmatpush.msra.mxu0 %v1721
    %2381 = vmatpush.msra.mxu0 %v1719
    %2382 = vmatpush.msra.mxu0 %v1717
    %2383 = vmatpush.msra.mxu0 %v1715
    %2384 = vmatpush.msra.mxu0 %v1713
    %2385 = vmatmul.f32.gmra.mxu0 %v2367
    %v2386 = vpop.f32.mrf.mxu0
    %v2387 = vadd.f32 0.0, %v2386
    %2388 = vdwg.mxu0
    %2389 = vmatpush.msra.mxu0 0.0
    %2390 = vmatpush.msra.mxu0 0.0
    %2391 = vmatpush.msra.mxu0 0.0
    %2392 = vmatpush.msra.mxu0 0.0
    %2393 = vmatpush.msra.mxu0 0.0
    %2394 = vmatpush.msra.mxu0 0.0
    %2395 = vmatpush.msra.mxu0 0.0
    %2396 = vmatpush.msra.mxu0 0.0
    %2397 = vmatpush.msra.mxu0 %v1728
    %2398 = vmatpush.msra.mxu0 %v1726
    %2399 = vmatpush.msra.mxu0 %v1724
    %2400 = vmatpush.msra.mxu0 %v1722
    %2401 = vmatpush.msra.mxu0 %v1720
    %2402 = vmatpush.msra.mxu0 %v1718
    %2403 = vmatpush.msra.mxu0 %v1716
    %2404 = vmatpush.msra.mxu0 %v1714
    %2405 = vmatmul.f32.gmra.mxu0 %v2367
    %v2406 = vpop.f32.mrf.mxu0
    %v2407 = vadd.f32 0.0, %v2406
    %2408 = vdwg.mxu0
    %v2411 = vrot.slane %v2387, 4
    %v2412 = vrot.slane %v2407, 4
    %v2415 = vadd.f32 %v2361, %v2411
    %v2416 = vadd.f32 %v2363, %v2412
    %v2417 = vxor.u32 %v2415, 2147483648
    %v2418 = vxor.u32 %v2416, 2147483648
    %v2419 = vmul.f32 %v2417, 1.442695
    %v2420 = vpow.pop %v2419
    %v2421 = vmul.f32 %v2418, 1.442695
    %v2422 = vpow.pop %v2421
    %v2423 = vadd.f32 %v2420, 1.0
    %v2424 = vadd.f32 %v2422, 1.0
    %v2425 = vrcp.pop %v2423
    %v2426 = vmul.f32 %v2423, %v2425
    %v2427 = vsub.f32 1.0, %v2426
    %v2428 = vmul.f32 %v2425, %v2427
    %v2429 = vadd.f32 %v2425, %v2428
    %vm2430 = vweird.f32 %v2423
    %vm2431 = vweird.f32 %v2425
    %vm2432 = vmor %vm2430, %vm2431
    %v2433 = vsel %vm2432, %v2425, %v2429
    %v2434 = vand.u32 2147483647, %v2423
    %vm2435 = vcmp.eq.f32.partialorder %v2434, 8.507059e+37
    %v2436 = vand.u32 %v2423, 2147483648
    %v2437 = vor.u32 1.1754944e-38, %v2436
    %v2438 = vsel %vm2435, %v2437, %v2433
    %v2439 = vmul.f32 1.0, %v2438
    %v2440 = vrcp.pop %v2424
    %v2441 = vmul.f32 %v2424, %v2440
    %v2442 = vsub.f32 1.0, %v2441
    %v2443 = vmul.f32 %v2440, %v2442
    %v2444 = vadd.f32 %v2440, %v2443
    %vm2445 = vweird.f32 %v2424
    %vm2446 = vweird.f32 %v2440
    %vm2447 = vmor %vm2445, %vm2446
    %v2448 = vsel %vm2447, %v2440, %v2444
    %v2449 = vand.u32 2147483647, %v2424
    %vm2450 = vcmp.eq.f32.partialorder %v2449, 8.507059e+37
    %v2451 = vand.u32 %v2424, 2147483648
    %v2452 = vor.u32 1.1754944e-38, %v2451
    %v2453 = vsel %vm2450, %v2452, %v2448
    %v2454 = vmul.f32 1.0, %v2453
    %v2455 = vtanh.pop %v2415
    %v2456 = vtanh.pop %v2416
    %v2458 = vrot.slane %v2325, 7
    %v2460 = vmul.f32 %v2439, %v2458
    %2462 = vrot.lane.b32.xlu0 %v2455, 64
    %v2463 = vpop.permute.xlu0 %2462
    %v2465 = vmul.f32 %v2439, %v2463
    %2467 = vrot.lane.b32.xlu0 %v2465, 32
    %v2468 = vpop.permute.xlu0 %2467
    %v2470 = vadd.f32 %v2460, %v2468
    %v2472 = vrot.slane %v2339, 7
    %v2474 = vmul.f32 %v2454, %v2472
    %2476 = vrot.lane.b32.xlu0 %v2456, 64
    %v2477 = vpop.permute.xlu0 %2476
    %v2479 = vmul.f32 %v2454, %v2477
    %2481 = vrot.lane.b32.xlu0 %v2479, 32
    %v2482 = vpop.permute.xlu0 %2481
    %v2484 = vadd.f32 %v2474, %v2482
    %v2485 = vtanh.pop %v2470
    %2487 = vrot.lane.b32.xlu0 %v2485, 64
    %v2488 = vpop.permute.xlu0 %2487
    %v2490 = vmul.f32 %v2439, %v2488
    %v2491 = vtanh.pop %v2484
    %2493 = vrot.lane.b32.xlu0 %v2491, 64
    %v2494 = vpop.permute.xlu0 %2493
    %v2496 = vmul.f32 %v2454, %v2494
    %2498 = vrot.lane.b32.xlu0 %v2490, 32
    %v2499 = vpop.permute.xlu0 %2498
    %2502 = vrot.lane.b32.xlu0 %v2496, 64
    %v2503 = vpop.permute.xlu0 %2502
    %v2505 = vsel %vm164, %v2499, %v2503
    %v2506 = vsel %vm1007, %v1788, %v1758
    %v2508 = vsel %vm1007, %v1925, %v1924
    %v2511 = vrot.slane %v2505, 4
    %v2512 = vsel %vm290, %v2511, 0
    %2514 = vmatpush.msra.mxu0 0.0
    %2515 = vmatpush.msra.mxu0 0.0
    %2516 = vmatpush.msra.mxu0 0.0
    %2517 = vmatpush.msra.mxu0 0.0
    %2518 = vmatpush.msra.mxu0 0.0
    %2519 = vmatpush.msra.mxu0 0.0
    %2520 = vmatpush.msra.mxu0 0.0
    %2521 = vmatpush.msra.mxu0 0.0
    %2522 = vmatpush.msra.mxu0 %v1727
    %2523 = vmatpush.msra.mxu0 %v1725
    %2524 = vmatpush.msra.mxu0 %v1723
    %2525 = vmatpush.msra.mxu0 %v1721
    %2526 = vmatpush.msra.mxu0 %v1719
    %2527 = vmatpush.msra.mxu0 %v1717
    %2528 = vmatpush.msra.mxu0 %v1715
    %2529 = vmatpush.msra.mxu0 %v1713
    %2530 = vmatmul.f32.gmra.mxu0 %v2512
    %v2531 = vpop.f32.mrf.mxu0
    %v2532 = vadd.f32 0.0, %v2531
    %2533 = vdwg.mxu0
    %2534 = vmatpush.msra.mxu0 0.0
    %2535 = vmatpush.msra.mxu0 0.0
    %2536 = vmatpush.msra.mxu0 0.0
    %2537 = vmatpush.msra.mxu0 0.0
    %2538 = vmatpush.msra.mxu0 0.0
    %2539 = vmatpush.msra.mxu0 0.0
    %2540 = vmatpush.msra.mxu0 0.0
    %2541 = vmatpush.msra.mxu0 0.0
    %2542 = vmatpush.msra.mxu0 %v1728
    %2543 = vmatpush.msra.mxu0 %v1726
    %2544 = vmatpush.msra.mxu0 %v1724
    %2545 = vmatpush.msra.mxu0 %v1722
    %2546 = vmatpush.msra.mxu0 %v1720
    %2547 = vmatpush.msra.mxu0 %v1718
    %2548 = vmatpush.msra.mxu0 %v1716
    %2549 = vmatpush.msra.mxu0 %v1714
    %2550 = vmatmul.f32.gmra.mxu0 %v2512
    %v2551 = vpop.f32.mrf.mxu0
    %v2552 = vadd.f32 0.0, %v2551
    %2553 = vdwg.mxu0
    %v2556 = vrot.slane %v2532, 3
    %v2557 = vrot.slane %v2552, 3
    %v2560 = vadd.f32 %v2506, %v2556
    %v2561 = vadd.f32 %v2508, %v2557
    %v2562 = vxor.u32 %v2560, 2147483648
    %v2563 = vxor.u32 %v2561, 2147483648
    %v2564 = vmul.f32 %v2562, 1.442695
    %v2565 = vpow.pop %v2564
    %v2566 = vmul.f32 %v2563, 1.442695
    %v2567 = vpow.pop %v2566
    %v2568 = vadd.f32 %v2565, 1.0
    %v2569 = vadd.f32 %v2567, 1.0
    %v2570 = vrcp.pop %v2568
    %v2571 = vmul.f32 %v2568, %v2570
    %v2572 = vsub.f32 1.0, %v2571
    %v2573 = vmul.f32 %v2570, %v2572
    %v2574 = vadd.f32 %v2570, %v2573
    %vm2575 = vweird.f32 %v2568
    %vm2576 = vweird.f32 %v2570
    %vm2577 = vmor %vm2575, %vm2576
    %v2578 = vsel %vm2577, %v2570, %v2574
    %v2579 = vand.u32 2147483647, %v2568
    %vm2580 = vcmp.eq.f32.partialorder %v2579, 8.507059e+37
    %v2581 = vand.u32 %v2568, 2147483648
    %v2582 = vor.u32 1.1754944e-38, %v2581
    %v2583 = vsel %vm2580, %v2582, %v2578
    %v2584 = vmul.f32 1.0, %v2583
    %v2585 = vrcp.pop %v2569
    %v2586 = vmul.f32 %v2569, %v2585
    %v2587 = vsub.f32 1.0, %v2586
    %v2588 = vmul.f32 %v2585, %v2587
    %v2589 = vadd.f32 %v2585, %v2588
    %vm2590 = vweird.f32 %v2569
    %vm2591 = vweird.f32 %v2585
    %vm2592 = vmor %vm2590, %vm2591
    %v2593 = vsel %vm2592, %v2585, %v2589
    %v2594 = vand.u32 2147483647, %v2569
    %vm2595 = vcmp.eq.f32.partialorder %v2594, 8.507059e+37
    %v2596 = vand.u32 %v2569, 2147483648
    %v2597 = vor.u32 1.1754944e-38, %v2596
    %v2598 = vsel %vm2595, %v2597, %v2593
    %v2599 = vmul.f32 1.0, %v2598
    %v2600 = vtanh.pop %v2560
    %v2601 = vtanh.pop %v2561
    %v2603 = vrot.slane %v2470, 7
    %v2605 = vmul.f32 %v2584, %v2603
    %2607 = vrot.lane.b32.xlu0 %v2600, 64
    %v2608 = vpop.permute.xlu0 %2607
    %v2610 = vmul.f32 %v2584, %v2608
    %2612 = vrot.lane.b32.xlu0 %v2610, 32
    %v2613 = vpop.permute.xlu0 %2612
    %v2615 = vadd.f32 %v2605, %v2613
    %v2617 = vrot.slane %v2484, 7
    %v2619 = vmul.f32 %v2599, %v2617
    %2621 = vrot.lane.b32.xlu0 %v2601, 64
    %v2622 = vpop.permute.xlu0 %2621
    %v2624 = vmul.f32 %v2599, %v2622
    %2626 = vrot.lane.b32.xlu0 %v2624, 32
    %v2627 = vpop.permute.xlu0 %2626
    %v2629 = vadd.f32 %v2619, %v2627
    %v2630 = vtanh.pop %v2615
    %2632 = vrot.lane.b32.xlu0 %v2630, 64
    %v2633 = vpop.permute.xlu0 %2632
    %v2635 = vmul.f32 %v2584, %v2633
    %v2636 = vtanh.pop %v2629
    %2638 = vrot.lane.b32.xlu0 %v2636, 64
    %v2639 = vpop.permute.xlu0 %2638
    %v2641 = vmul.f32 %v2599, %v2639
    %2643 = vrot.lane.b32.xlu0 %v2635, 32
    %v2644 = vpop.permute.xlu0 %2643
    %2647 = vrot.lane.b32.xlu0 %v2641, 64
    %v2648 = vpop.permute.xlu0 %2647
    %v2650 = vsel %vm164, %v2644, %v2648
    %v2651 = vsel %vm1153, %v1788, %v1758
    %v2653 = vsel %vm1153, %v2071, %v2070
    %v2656 = vrot.slane %v2650, 5
    %v2657 = vsel %vm290, %v2656, 0
    %2659 = vmatpush.msra.mxu0 0.0
    %2660 = vmatpush.msra.mxu0 0.0
    %2661 = vmatpush.msra.mxu0 0.0
    %2662 = vmatpush.msra.mxu0 0.0
    %2663 = vmatpush.msra.mxu0 0.0
    %2664 = vmatpush.msra.mxu0 0.0
    %2665 = vmatpush.msra.mxu0 0.0
    %2666 = vmatpush.msra.mxu0 0.0
    %2667 = vmatpush.msra.mxu0 %v1727
    %2668 = vmatpush.msra.mxu0 %v1725
    %2669 = vmatpush.msra.mxu0 %v1723
    %2670 = vmatpush.msra.mxu0 %v1721
    %2671 = vmatpush.msra.mxu0 %v1719
    %2672 = vmatpush.msra.mxu0 %v1717
    %2673 = vmatpush.msra.mxu0 %v1715
    %2674 = vmatpush.msra.mxu0 %v1713
    %2675 = vmatmul.f32.gmra.mxu0 %v2657
    %v2676 = vpop.f32.mrf.mxu0
    %v2677 = vadd.f32 0.0, %v2676
    %2678 = vdwg.mxu0
    %2679 = vmatpush.msra.mxu0 0.0
    %2680 = vmatpush.msra.mxu0 0.0
    %2681 = vmatpush.msra.mxu0 0.0
    %2682 = vmatpush.msra.mxu0 0.0
    %2683 = vmatpush.msra.mxu0 0.0
    %2684 = vmatpush.msra.mxu0 0.0
    %2685 = vmatpush.msra.mxu0 0.0
    %2686 = vmatpush.msra.mxu0 0.0
    %2687 = vmatpush.msra.mxu0 %v1728
    %2688 = vmatpush.msra.mxu0 %v1726
    %2689 = vmatpush.msra.mxu0 %v1724
    %2690 = vmatpush.msra.mxu0 %v1722
    %2691 = vmatpush.msra.mxu0 %v1720
    %2692 = vmatpush.msra.mxu0 %v1718
    %2693 = vmatpush.msra.mxu0 %v1716
    %2694 = vmatpush.msra.mxu0 %v1714
    %2695 = vmatmul.f32.gmra.mxu0 %v2657
    %v2696 = vpop.f32.mrf.mxu0
    %v2697 = vadd.f32 0.0, %v2696
    %2698 = vdwg.mxu0
    %v2701 = vrot.slane %v2677, 2
    %v2702 = vrot.slane %v2697, 2
    %v2705 = vadd.f32 %v2651, %v2701
    %v2706 = vadd.f32 %v2653, %v2702
    %v2707 = vxor.u32 %v2705, 2147483648
    %v2708 = vxor.u32 %v2706, 2147483648
    %v2709 = vmul.f32 %v2707, 1.442695
    %v2710 = vpow.pop %v2709
    %v2711 = vmul.f32 %v2708, 1.442695
    %v2712 = vpow.pop %v2711
    %v2713 = vadd.f32 %v2710, 1.0
    %v2714 = vadd.f32 %v2712, 1.0
    %v2715 = vrcp.pop %v2713
    %v2716 = vmul.f32 %v2713, %v2715
    %v2717 = vsub.f32 1.0, %v2716
    %v2718 = vmul.f32 %v2715, %v2717
    %v2719 = vadd.f32 %v2715, %v2718
    %vm2720 = vweird.f32 %v2713
    %vm2721 = vweird.f32 %v2715
    %vm2722 = vmor %vm2720, %vm2721
    %v2723 = vsel %vm2722, %v2715, %v2719
    %v2724 = vand.u32 2147483647, %v2713
    %vm2725 = vcmp.eq.f32.partialorder %v2724, 8.507059e+37
    %v2726 = vand.u32 %v2713, 2147483648
    %v2727 = vor.u32 1.1754944e-38, %v2726
    %v2728 = vsel %vm2725, %v2727, %v2723
    %v2729 = vmul.f32 1.0, %v2728
    %v2730 = vrcp.pop %v2714
    %v2731 = vmul.f32 %v2714, %v2730
    %v2732 = vsub.f32 1.0, %v2731
    %v2733 = vmul.f32 %v2730, %v2732
    %v2734 = vadd.f32 %v2730, %v2733
    %vm2735 = vweird.f32 %v2714
    %vm2736 = vweird.f32 %v2730
    %vm2737 = vmor %vm2735, %vm2736
    %v2738 = vsel %vm2737, %v2730, %v2734
    %v2739 = vand.u32 2147483647, %v2714
    %vm2740 = vcmp.eq.f32.partialorder %v2739, 8.507059e+37
    %v2741 = vand.u32 %v2714, 2147483648
    %v2742 = vor.u32 1.1754944e-38, %v2741
    %v2743 = vsel %vm2740, %v2742, %v2738
    %v2744 = vmul.f32 1.0, %v2743
    %v2745 = vtanh.pop %v2705
    %v2746 = vtanh.pop %v2706
    %v2748 = vrot.slane %v2615, 7
    %v2750 = vmul.f32 %v2729, %v2748
    %2752 = vrot.lane.b32.xlu0 %v2745, 64
    %v2753 = vpop.permute.xlu0 %2752
    %v2755 = vmul.f32 %v2729, %v2753
    %2757 = vrot.lane.b32.xlu0 %v2755, 32
    %v2758 = vpop.permute.xlu0 %2757
    %v2760 = vadd.f32 %v2750, %v2758
    %v2762 = vrot.slane %v2629, 7
    %v2764 = vmul.f32 %v2744, %v2762
    %2766 = vrot.lane.b32.xlu0 %v2746, 64
    %v2767 = vpop.permute.xlu0 %2766
    %v2769 = vmul.f32 %v2744, %v2767
    %2771 = vrot.lane.b32.xlu0 %v2769, 32
    %v2772 = vpop.permute.xlu0 %2771
    %v2774 = vadd.f32 %v2764, %v2772
    %v2775 = vtanh.pop %v2760
    %2777 = vrot.lane.b32.xlu0 %v2775, 64
    %v2778 = vpop.permute.xlu0 %2777
    %v2780 = vmul.f32 %v2729, %v2778
    %v2781 = vtanh.pop %v2774
    %2783 = vrot.lane.b32.xlu0 %v2781, 64
    %v2784 = vpop.permute.xlu0 %2783
    %v2786 = vmul.f32 %v2744, %v2784
    %2788 = vrot.lane.b32.xlu0 %v2780, 32
    %v2789 = vpop.permute.xlu0 %2788
    %2792 = vrot.lane.b32.xlu0 %v2786, 64
    %v2793 = vpop.permute.xlu0 %2792
    %v2795 = vsel %vm164, %v2789, %v2793
    %v2801 = vrot.slane %v2795, 6
    %v2802 = vsel %vm290, %v2801, 0
    %2804 = vmatpush.msra.mxu0 0.0
    %2805 = vmatpush.msra.mxu0 0.0
    %2806 = vmatpush.msra.mxu0 0.0
    %2807 = vmatpush.msra.mxu0 0.0
    %2808 = vmatpush.msra.mxu0 0.0
    %2809 = vmatpush.msra.mxu0 0.0
    %2810 = vmatpush.msra.mxu0 0.0
    %2811 = vmatpush.msra.mxu0 0.0
    %2812 = vmatpush.msra.mxu0 %v1727
    %2813 = vmatpush.msra.mxu0 %v1725
    %2814 = vmatpush.msra.mxu0 %v1723
    %2815 = vmatpush.msra.mxu0 %v1721
    %2816 = vmatpush.msra.mxu0 %v1719
    %2817 = vmatpush.msra.mxu0 %v1717
    %2818 = vmatpush.msra.mxu0 %v1715
    %2819 = vmatpush.msra.mxu0 %v1713
    %2820 = vmatmul.f32.gmra.mxu0 %v2802
    %v2821 = vpop.f32.mrf.mxu0
    %v2822 = vadd.f32 0.0, %v2821
    %2823 = vdwg.mxu0
    %2824 = vmatpush.msra.mxu0 0.0
    %2825 = vmatpush.msra.mxu0 0.0
    %2826 = vmatpush.msra.mxu0 0.0
    %2827 = vmatpush.msra.mxu0 0.0
    %2828 = vmatpush.msra.mxu0 0.0
    %2829 = vmatpush.msra.mxu0 0.0
    %2830 = vmatpush.msra.mxu0 0.0
    %2831 = vmatpush.msra.mxu0 0.0
    %2832 = vmatpush.msra.mxu0 %v1728
    %2833 = vmatpush.msra.mxu0 %v1726
    %2834 = vmatpush.msra.mxu0 %v1724
    %2835 = vmatpush.msra.mxu0 %v1722
    %2836 = vmatpush.msra.mxu0 %v1720
    %2837 = vmatpush.msra.mxu0 %v1718
    %2838 = vmatpush.msra.mxu0 %v1716
    %2839 = vmatpush.msra.mxu0 %v1714
    %2840 = vmatmul.f32.gmra.mxu0 %v2802
    %v2841 = vpop.f32.mrf.mxu0
    %v2842 = vadd.f32 0.0, %v2841
    %2843 = vdwg.mxu0
    %v2846 = vrot.slane %v2822, 1
    %v2847 = vrot.slane %v2842, 1
    %v2850 = vadd.f32 %v1758, %v2846
    %v2851 = vadd.f32 %v2217, %v2847
    %v2852 = vadd.f32 %v1788, %v2846
    %v2853 = vadd.f32 %v1784, %v2847
    %v2854 = vxor.u32 %v2850, 2147483648
    %v2855 = vxor.u32 %v2851, 2147483648
    %v2856 = vxor.u32 %v2852, 2147483648
    %v2857 = vxor.u32 %v2853, 2147483648
    %v2858 = vmul.f32 %v2854, 1.442695
    %v2859 = vpow.pop %v2858
    %v2860 = vmul.f32 %v2855, 1.442695
    %v2861 = vpow.pop %v2860
    %v2862 = vmul.f32 %v2856, 1.442695
    %v2863 = vpow.pop %v2862
    %v2864 = vmul.f32 %v2857, 1.442695
    %v2865 = vpow.pop %v2864
    %v2866 = vadd.f32 %v2859, 1.0
    %v2867 = vadd.f32 %v2861, 1.0
    %v2868 = vadd.f32 %v2863, 1.0
    %v2869 = vadd.f32 %v2865, 1.0
    %v2870 = vrcp.pop %v2866
    %v2871 = vmul.f32 %v2866, %v2870
    %v2872 = vsub.f32 1.0, %v2871
    %v2873 = vmul.f32 %v2870, %v2872
    %v2874 = vadd.f32 %v2870, %v2873
    %vm2875 = vweird.f32 %v2866
    %vm2876 = vweird.f32 %v2870
    %vm2877 = vmor %vm2875, %vm2876
    %v2878 = vsel %vm2877, %v2870, %v2874
    %v2879 = vand.u32 2147483647, %v2866
    %vm2880 = vcmp.eq.f32.partialorder %v2879, 8.507059e+37
    %v2881 = vand.u32 %v2866, 2147483648
    %v2882 = vor.u32 1.1754944e-38, %v2881
    %v2883 = vsel %vm2880, %v2882, %v2878
    %v2884 = vmul.f32 1.0, %v2883
    %v2885 = vrcp.pop %v2867
    %v2886 = vmul.f32 %v2867, %v2885
    %v2887 = vsub.f32 1.0, %v2886
    %v2888 = vmul.f32 %v2885, %v2887
    %v2889 = vadd.f32 %v2885, %v2888
    %vm2890 = vweird.f32 %v2867
    %vm2891 = vweird.f32 %v2885
    %vm2892 = vmor %vm2890, %vm2891
    %v2893 = vsel %vm2892, %v2885, %v2889
    %v2894 = vand.u32 2147483647, %v2867
    %vm2895 = vcmp.eq.f32.partialorder %v2894, 8.507059e+37
    %v2896 = vand.u32 %v2867, 2147483648
    %v2897 = vor.u32 1.1754944e-38, %v2896
    %v2898 = vsel %vm2895, %v2897, %v2893
    %v2899 = vmul.f32 1.0, %v2898
    %v2900 = vrcp.pop %v2868
    %v2901 = vmul.f32 %v2868, %v2900
    %v2902 = vsub.f32 1.0, %v2901
    %v2903 = vmul.f32 %v2900, %v2902
    %v2904 = vadd.f32 %v2900, %v2903
    %vm2905 = vweird.f32 %v2868
    %vm2906 = vweird.f32 %v2900
    %vm2907 = vmor %vm2905, %vm2906
    %v2908 = vsel %vm2907, %v2900, %v2904
    %v2909 = vand.u32 2147483647, %v2868
    %vm2910 = vcmp.eq.f32.partialorder %v2909, 8.507059e+37
    %v2911 = vand.u32 %v2868, 2147483648
    %v2912 = vor.u32 1.1754944e-38, %v2911
    %v2913 = vsel %vm2910, %v2912, %v2908
    %v2914 = vmul.f32 1.0, %v2913
    %v2915 = vrcp.pop %v2869
    %v2916 = vmul.f32 %v2869, %v2915
    %v2917 = vsub.f32 1.0, %v2916
    %v2918 = vmul.f32 %v2915, %v2917
    %v2919 = vadd.f32 %v2915, %v2918
    %vm2920 = vweird.f32 %v2869
    %vm2921 = vweird.f32 %v2915
    %vm2922 = vmor %vm2920, %vm2921
    %v2923 = vsel %vm2922, %v2915, %v2919
    %v2924 = vand.u32 2147483647, %v2869
    %vm2925 = vcmp.eq.f32.partialorder %v2924, 8.507059e+37
    %v2926 = vand.u32 %v2869, 2147483648
    %v2927 = vor.u32 1.1754944e-38, %v2926
    %v2928 = vsel %vm2925, %v2927, %v2923
    %v2929 = vmul.f32 1.0, %v2928
    %v2930 = vtanh.pop %v2850
    %v2931 = vtanh.pop %v2851
    %v2932 = vtanh.pop %v2852
    %v2933 = vtanh.pop %v2853
    %v2935 = vrot.slane %v2760, 7
    %v2937 = vmul.f32 %v2884, %v2935
    %v2938 = vmul.f32 %v2914, %v2935
    %2941 = vrot.lane.b32.xlu0 %v2930, 64
    %v2942 = vpop.permute.xlu0 %2941
    %2943 = vrot.lane.b32.xlu0 %v2932, 64
    %v2944 = vpop.permute.xlu0 %2943
    %v2947 = vmul.f32 %v2884, %v2942
    %v2948 = vmul.f32 %v2914, %v2944
    %2951 = vrot.lane.b32.xlu0 %v2947, 32
    %v2952 = vpop.permute.xlu0 %2951
    %2953 = vrot.lane.b32.xlu0 %v2948, 32
    %v2954 = vpop.permute.xlu0 %2953
    %v2957 = vadd.f32 %v2937, %v2952
    %v2958 = vadd.f32 %v2938, %v2954
    %v2960 = vrot.slane %v2774, 7
    %v2962 = vmul.f32 %v2899, %v2960
    %v2963 = vmul.f32 %v2929, %v2960
    %2966 = vrot.lane.b32.xlu0 %v2931, 64
    %v2967 = vpop.permute.xlu0 %2966
    %2968 = vrot.lane.b32.xlu0 %v2933, 64
    %v2969 = vpop.permute.xlu0 %2968
    %v2972 = vmul.f32 %v2899, %v2967
    %v2973 = vmul.f32 %v2929, %v2969
    %2976 = vrot.lane.b32.xlu0 %v2972, 32
    %v2977 = vpop.permute.xlu0 %2976
    %2978 = vrot.lane.b32.xlu0 %v2973, 32
    %v2979 = vpop.permute.xlu0 %2978
    %v2982 = vadd.f32 %v2962, %v2977
    %v2983 = vadd.f32 %v2963, %v2979
    %v2984 = vtanh.pop %v2957
    %v2985 = vtanh.pop %v2958
    %2988 = vrot.lane.b32.xlu0 %v2984, 64
    %v2989 = vpop.permute.xlu0 %2988
    %2990 = vrot.lane.b32.xlu0 %v2985, 64
    %v2991 = vpop.permute.xlu0 %2990
    %v2994 = vmul.f32 %v2884, %v2989
    %v2995 = vmul.f32 %v2914, %v2991
    %v2996 = vtanh.pop %v2982
    %v2997 = vtanh.pop %v2983
    %3000 = vrot.lane.b32.xlu0 %v2996, 64
    %v3001 = vpop.permute.xlu0 %3000
    %3002 = vrot.lane.b32.xlu0 %v2997, 64
    %v3003 = vpop.permute.xlu0 %3002
    %v3006 = vmul.f32 %v2899, %v3001
    %v3007 = vmul.f32 %v2929, %v3003
    %v3008 = vrot.slane %v1906, 1
    %3010 = vst [vmem:[#allocation1] sm:$0xff] %v2052
    %s3011 = scalar_lea.vmem [#allocation1], 1
    %v3012 = vld [vmem:[%s3011] ss:$9 sm:$0xff]
    %s3013 = scalar_lea.vmem [#allocation1], 2
    %v3014 = vld [vmem:[%s3013] ss:$9 sm:$0xff]
    %3015 = vst [vmem:[#allocation1] sm:$0xff] %v2199
    %s3016 = scalar_lea.vmem [#allocation1], 2
    %v3017 = vld [vmem:[%s3016] ss:$9 sm:$0xff]
    %s3018 = scalar_lea.vmem [#allocation1], 3
    %v3019 = vld [vmem:[%s3018] ss:$9 sm:$0xff]
    %3020 = vst [vmem:[#allocation1] sm:$0xff] %v2345
    %s3021 = scalar_lea.vmem [#allocation1], 3
    %v3022 = vld [vmem:[%s3021] ss:$9 sm:$0xff]
    %s3023 = scalar_lea.vmem [#allocation1], 4
    %v3024 = vld [vmem:[%s3023] ss:$9 sm:$0xff]
    %3025 = vst [vmem:[#allocation1] sm:$0xff] %v2490
    %s3026 = scalar_lea.vmem [#allocation1], 4
    %v3027 = vld [vmem:[%s3026] ss:$9 sm:$0xff]
    %s3028 = scalar_lea.vmem [#allocation1], 5
    %v3029 = vld [vmem:[%s3028] ss:$9 sm:$0xff]
    %3030 = vst [vmem:[#allocation1] sm:$0xff] %v2635
    %s3031 = scalar_lea.vmem [#allocation1], 5
    %v3032 = vld [vmem:[%s3031] ss:$9 sm:$0xff]
    %s3033 = scalar_lea.vmem [#allocation1], 6
    %v3034 = vld [vmem:[%s3033] ss:$9 sm:$0xff]
    %3035 = vst [vmem:[#allocation1] sm:$0xff] %v2780
    %s3036 = scalar_lea.vmem [#allocation1], 6
    %v3037 = vld [vmem:[%s3036] ss:$9 sm:$0xff]
    %s3038 = scalar_lea.vmem [#allocation1], 7
    %v3039 = vld [vmem:[%s3038] ss:$9 sm:$0xff]
    %3042 = vst [vmem:[#allocation1] sm:$0xff] %v2994
    %s3043 = scalar_lea.vmem [#allocation1], 7
    %v3044 = vld [vmem:[%s3043] ss:$9 sm:$0xff]
    %3045 = vst [vmem:[#allocation1] sm:$0xff] %v2995
    %v3046 = vld [vmem:[#allocation1] ss:$9 sm:$0xff]
    %v3047 = vperm.slane %v3012, 0
    %v3048 = vperm.slane %v3014, 0
    %v3051 = vperm.slane %v3017, 0
    %v3052 = vperm.slane %v3019, 0
    %v3055 = vperm.slane %v3022, 0
    %v3056 = vperm.slane %v3024, 0
    %v3059 = vperm.slane %v3027, 0
    %v3060 = vperm.slane %v3029, 0
    %v3063 = vperm.slane %v3032, 0
    %v3064 = vperm.slane %v3034, 0
    %v3067 = vperm.slane %v3037, 0
    %v3068 = vperm.slane %v3039, 0
    %v3071 = vperm.slane %v3044, 0
    %v3072 = vperm.slane %v3046, 0
    %v3075 = vsel %vm39, %v1906, %v3047
    %v3076 = vsel %vm39, %v3008, %v3048
    %v3077 = vsel %vm1580, %v3075, %v3051
    %v3078 = vsel %vm1580, %v3076, %v3052
    %v3079 = vsel %vm1583, %v3077, %v3055
    %v3080 = vsel %vm1583, %v3078, %v3056
    %v3081 = vsel %vm87, %v3079, %v3059
    %v3082 = vsel %vm87, %v3080, %v3060
    %v3083 = vsel %vm1588, %v3081, %v3063
    %v3084 = vsel %vm1588, %v3082, %v3064
    %v3085 = vsel %vm61, %v3083, %v3067
    %v3086 = vsel %vm61, %v3084, %v3068
    %v3087 = vsel %vm48, %v3085, %v3071
    %v3088 = vsel %vm48, %v3086, %v3072
    %3091 = vst [vmem:[#allocation1] sm:$0xff] %v3006
    %s3092 = scalar_lea.vmem [#allocation1], 7
    %v3093 = vld [vmem:[%s3092] ss:$9 sm:$0xff]
    %3094 = vst [vmem:[#allocation1] sm:$0xff] %v3007
    %v3095 = vld [vmem:[#allocation1] ss:$9 sm:$0xff]
    %3098 = vst [vmem:[#allocation1] sm:$0xff] %v2786
    %s3099 = scalar_lea.vmem [#allocation1], 6
    %v3100 = vld [vmem:[%s3099] ss:$9 sm:$0xff]
    %s3101 = scalar_lea.vmem [#allocation1], 7
    %v3102 = vld [vmem:[%s3101] ss:$9 sm:$0xff]
    %3103 = vst [vmem:[#allocation1] sm:$0xff] %v2641
    %s3104 = scalar_lea.vmem [#allocation1], 5
    %v3105 = vld [vmem:[%s3104] ss:$9 sm:$0xff]
    %s3106 = scalar_lea.vmem [#allocation1], 6
    %v3107 = vld [vmem:[%s3106] ss:$9 sm:$0xff]
    %3108 = vst [vmem:[#allocation1] sm:$0xff] %v2496
    %s3109 = scalar_lea.vmem [#allocation1], 4
    %v3110 = vld [vmem:[%s3109] ss:$9 sm:$0xff]
    %s3111 = scalar_lea.vmem [#allocation1], 5
    %v3112 = vld [vmem:[%s3111] ss:$9 sm:$0xff]
    %3113 = vst [vmem:[#allocation1] sm:$0xff] %v2351
    %s3114 = scalar_lea.vmem [#allocation1], 3
    %v3115 = vld [vmem:[%s3114] ss:$9 sm:$0xff]
    %s3116 = scalar_lea.vmem [#allocation1], 4
    %v3117 = vld [vmem:[%s3116] ss:$9 sm:$0xff]
    %3118 = vst [vmem:[#allocation1] sm:$0xff] %v2205
    %s3119 = scalar_lea.vmem [#allocation1], 2
    %v3120 = vld [vmem:[%s3119] ss:$9 sm:$0xff]
    %s3121 = scalar_lea.vmem [#allocation1], 3
    %v3122 = vld [vmem:[%s3121] ss:$9 sm:$0xff]
    %3123 = vst [vmem:[#allocation1] sm:$0xff] %v2058
    %s3124 = scalar_lea.vmem [#allocation1], 1
    %v3125 = vld [vmem:[%s3124] ss:$9 sm:$0xff]
    %s3126 = scalar_lea.vmem [#allocation1], 2
    %v3127 = vld [vmem:[%s3126] ss:$9 sm:$0xff]
    %v3128 = vrot.slane %v1912, 1
    %v3129 = vperm.slane %v3100, 0
    %v3130 = vperm.slane %v3102, 0
    %v3133 = vperm.slane %v3105, 0
    %v3134 = vperm.slane %v3107, 0
    %v3137 = vperm.slane %v3110, 0
    %v3138 = vperm.slane %v3112, 0
    %v3141 = vperm.slane %v3115, 0
    %v3142 = vperm.slane %v3117, 0
    %v3145 = vperm.slane %v3120, 0
    %v3146 = vperm.slane %v3122, 0
    %v3149 = vperm.slane %v3125, 0
    %v3150 = vperm.slane %v3127, 0
    %v3153 = vperm.slane %v1912, 0
    %v3154 = vperm.slane %v3128, 0
    %v3157 = vsel %vm39, %v3093, %v3129
    %v3158 = vsel %vm39, %v3095, %v3130
    %v3159 = vsel %vm1580, %v3157, %v3133
    %v3160 = vsel %vm1580, %v3158, %v3134
    %v3161 = vsel %vm1583, %v3159, %v3137
    %v3162 = vsel %vm1583, %v3160, %v3138
    %v3163 = vsel %vm87, %v3161, %v3141
    %v3164 = vsel %vm87, %v3162, %v3142
    %v3165 = vsel %vm1588, %v3163, %v3145
    %v3166 = vsel %vm1588, %v3164, %v3146
    %v3167 = vsel %vm61, %v3165, %v3149
    %v3168 = vsel %vm61, %v3166, %v3150
    %v3169 = vsel %vm48, %v3167, %v3153
    %v3170 = vsel %vm48, %v3168, %v3154
    %3173 = vrot.lane.b32.xlu0 %v3087, 32
    %v3174 = vpop.permute.xlu0 %3173
    %3175 = vrot.lane.b32.xlu0 %v3088, 32
    %v3176 = vpop.permute.xlu0 %3175
    %3181 = vrot.lane.b32.xlu0 %v3169, 64
    %v3182 = vpop.permute.xlu0 %3181
    %3183 = vrot.lane.b32.xlu0 %v3170, 64
    %v3184 = vpop.permute.xlu0 %3183
    %v3187 = vsel %vm164, %v3174, %v3182
    %v3188 = vsel %vm164, %v3176, %v3184
    %v3189 = vld [vmem:[#allocation2 + $0x260] sm:$0xff]
    %v3190 = vld [vmem:[#allocation2 + $0x268] sm:$0xff]
    %v3191 = vld [vmem:[#allocation2 + $0x270] sm:$0xff]
    %v3192 = vld [vmem:[#allocation2 + $0x278] sm:$0xff]
    %v3193 = vld [vmem:[#allocation2 + $0x280] sm:$0xff]
    %v3194 = vld [vmem:[#allocation2 + $0x288] sm:$0xff]
    %v3195 = vld [vmem:[#allocation2 + $0x290] sm:$0xff]
    %v3196 = vld [vmem:[#allocation2 + $0x298] sm:$0xff]
    %v3197 = vld [vmem:[#allocation2 + $0x2a0] sm:$0xff]
    %v3198 = vld [vmem:[#allocation2 + $0x2a8] sm:$0xff]
    %v3199 = vld [vmem:[#allocation2 + $0x2b0] sm:$0xff]
    %v3200 = vld [vmem:[#allocation2 + $0x2b8] sm:$0xff]
    %v3201 = vld [vmem:[#allocation2 + $0x2c0] sm:$0xff]
    %v3202 = vld [vmem:[#allocation2 + $0x2c8] sm:$0xff]
    %v3203 = vld [vmem:[#allocation2 + $0x2d0] sm:$0xff]
    %v3204 = vld [vmem:[#allocation2 + $0x2d8] sm:$0xff]
    %s3205 = scalar_lea.vmem [#allocation2], 736
    %v3206 = vld [vmem:[%s3205] ss:$8 sm:$0x3]
    %v3207 = vld [vmem:[#allocation2 + $0x2f0] sm:$0xff]
    %v3208 = vld [vmem:[#allocation2 + $0x2f8] sm:$0xff]
    %v3209 = vld [vmem:[#allocation2 + $0x300] sm:$0xff]
    %v3210 = vld [vmem:[#allocation2 + $0x308] sm:$0xff]
    %v3211 = vld [vmem:[#allocation2 + $0x310] sm:$0xff]
    %v3212 = vld [vmem:[#allocation2 + $0x318] sm:$0xff]
    %v3213 = vld [vmem:[#allocation2 + $0x320] sm:$0xff]
    %v3214 = vld [vmem:[#allocation2 + $0x328] sm:$0xff]
    %v3215 = vld [vmem:[#allocation2 + $0x330] sm:$0xff]
    %v3216 = vld [vmem:[#allocation2 + $0x338] sm:$0xff]
    %v3217 = vld [vmem:[#allocation2 + $0x340] sm:$0xff]
    %v3218 = vld [vmem:[#allocation2 + $0x348] sm:$0xff]
    %v3219 = vld [vmem:[#allocation2 + $0x350] sm:$0xff]
    %v3220 = vld [vmem:[#allocation2 + $0x358] sm:$0xff]
    %v3221 = vld [vmem:[#allocation2 + $0x360] sm:$0xff]
    %v3222 = vld [vmem:[#allocation2 + $0x368] sm:$0xff]
    %v3224 = vperm.slane %v3206, 0
    %v3225 = vperm.slane %v3206, 1
    %v3229 = vsel %vm290, %v3187, 0
    %v3232 = vsel %vm290, %v3188, 0
    %3234 = vmatpush.msra.mxu0 0.0
    %3235 = vmatpush.msra.mxu0 0.0
    %3236 = vmatpush.msra.mxu0 0.0
    %3237 = vmatpush.msra.mxu0 0.0
    %3238 = vmatpush.msra.mxu0 0.0
    %3239 = vmatpush.msra.mxu0 0.0
    %3240 = vmatpush.msra.mxu0 0.0
    %3241 = vmatpush.msra.mxu0 0.0
    %3242 = vmatpush.msra.mxu0 %v3203
    %3243 = vmatpush.msra.mxu0 %v3201
    %3244 = vmatpush.msra.mxu0 %v3199
    %3245 = vmatpush.msra.mxu0 %v3197
    %3246 = vmatpush.msra.mxu0 %v3195
    %3247 = vmatpush.msra.mxu0 %v3193
    %3248 = vmatpush.msra.mxu0 %v3191
    %3249 = vmatpush.msra.mxu0 %v3189
    %3250 = vmatmul.f32.gmra.mxu0 %v3229
    %v3251 = vpop.f32.mrf.mxu0
    %v3252 = vadd.f32 %v3224, %v3251
    %3253 = vmatmul.f32.gmra.mxu0 %v3232
    %v3254 = vpop.f32.mrf.mxu0
    %v3255 = vadd.f32 %v3224, %v3254
    %3256 = vdwg.mxu0
    %3257 = vmatpush.msra.mxu0 0.0
    %3258 = vmatpush.msra.mxu0 0.0
    %3259 = vmatpush.msra.mxu0 0.0
    %3260 = vmatpush.msra.mxu0 0.0
    %3261 = vmatpush.msra.mxu0 0.0
    %3262 = vmatpush.msra.mxu0 0.0
    %3263 = vmatpush.msra.mxu0 0.0
    %3264 = vmatpush.msra.mxu0 0.0
    %3265 = vmatpush.msra.mxu0 %v3204
    %3266 = vmatpush.msra.mxu0 %v3202
    %3267 = vmatpush.msra.mxu0 %v3200
    %3268 = vmatpush.msra.mxu0 %v3198
    %3269 = vmatpush.msra.mxu0 %v3196
    %3270 = vmatpush.msra.mxu0 %v3194
    %3271 = vmatpush.msra.mxu0 %v3192
    %3272 = vmatpush.msra.mxu0 %v3190
    %3273 = vmatmul.f32.gmra.mxu0 %v3229
    %v3274 = vpop.f32.mrf.mxu0
    %v3275 = vadd.f32 %v3225, %v3274
    %3276 = vmatmul.f32.gmra.mxu0 %v3232
    %v3277 = vpop.f32.mrf.mxu0
    %v3278 = vadd.f32 %v3225, %v3277
    %3279 = vdwg.mxu0
    %v3282 = vrot.slane %v3255, 7
    %v3283 = vsel %vm281, %v3282, %v3252
    %v3287 = vrot.slane %v3275, 7
    %v3288 = vrot.slane %v3278, 6
    %v3289 = vsel %vm281, %v3288, %v3287
    %3291 = vmatpush.msra.mxu0 0.0
    %3292 = vmatpush.msra.mxu0 0.0
    %3293 = vmatpush.msra.mxu0 0.0
    %3294 = vmatpush.msra.mxu0 0.0
    %3295 = vmatpush.msra.mxu0 0.0
    %3296 = vmatpush.msra.mxu0 0.0
    %3297 = vmatpush.msra.mxu0 0.0
    %3298 = vmatpush.msra.mxu0 0.0
    %3299 = vmatpush.msra.mxu0 %v3221
    %3300 = vmatpush.msra.mxu0 %v3219
    %3301 = vmatpush.msra.mxu0 %v3217
    %3302 = vmatpush.msra.mxu0 %v3215
    %3303 = vmatpush.msra.mxu0 %v3213
    %3304 = vmatpush.msra.mxu0 %v3211
    %3305 = vmatpush.msra.mxu0 %v3209
    %3306 = vmatpush.msra.mxu0 %v3207
    %3307 = vmatmul.f32.gmra.mxu0 %v292
    %v3308 = vpop.f32.mrf.mxu0
    %v3309 = vadd.f32 0.0, %v3308
    %3310 = vdwg.mxu0
    %3311 = vmatpush.msra.mxu0 0.0
    %3312 = vmatpush.msra.mxu0 0.0
    %3313 = vmatpush.msra.mxu0 0.0
    %3314 = vmatpush.msra.mxu0 0.0
    %3315 = vmatpush.msra.mxu0 0.0
    %3316 = vmatpush.msra.mxu0 0.0
    %3317 = vmatpush.msra.mxu0 0.0
    %3318 = vmatpush.msra.mxu0 0.0
    %3319 = vmatpush.msra.mxu0 %v3222
    %3320 = vmatpush.msra.mxu0 %v3220
    %3321 = vmatpush.msra.mxu0 %v3218
    %3322 = vmatpush.msra.mxu0 %v3216
    %3323 = vmatpush.msra.mxu0 %v3214
    %3324 = vmatpush.msra.mxu0 %v3212
    %3325 = vmatpush.msra.mxu0 %v3210
    %3326 = vmatpush.msra.mxu0 %v3208
    %3327 = vmatmul.f32.gmra.mxu0 %v292
    %v3328 = vpop.f32.mrf.mxu0
    %v3329 = vadd.f32 0.0, %v3328
    %3330 = vdwg.mxu0
    %v3331 = vadd.f32 %v3283, %v3309
    %v3332 = vadd.f32 %v3289, %v3329
    %v3333 = vxor.u32 %v3331, 2147483648
    %v3334 = vxor.u32 %v3332, 2147483648
    %v3335 = vmul.f32 %v3333, 1.442695
    %v3336 = vpow.pop %v3335
    %v3337 = vmul.f32 %v3334, 1.442695
    %v3338 = vpow.pop %v3337
    %v3339 = vadd.f32 %v3336, 1.0
    %v3340 = vadd.f32 %v3338, 1.0
    %v3341 = vrcp.pop %v3339
    %v3342 = vmul.f32 %v3339, %v3341
    %v3343 = vsub.f32 1.0, %v3342
    %v3344 = vmul.f32 %v3341, %v3343
    %v3345 = vadd.f32 %v3341, %v3344
    %vm3346 = vweird.f32 %v3339
    %vm3347 = vweird.f32 %v3341
    %vm3348 = vmor %vm3346, %vm3347
    %v3349 = vsel %vm3348, %v3341, %v3345
    %v3350 = vand.u32 2147483647, %v3339
    %vm3351 = vcmp.eq.f32.partialorder %v3350, 8.507059e+37
    %v3352 = vand.u32 %v3339, 2147483648
    %v3353 = vor.u32 1.1754944e-38, %v3352
    %v3354 = vsel %vm3351, %v3353, %v3349
    %v3355 = vmul.f32 1.0, %v3354
    %v3356 = vrcp.pop %v3340
    %v3357 = vmul.f32 %v3340, %v3356
    %v3358 = vsub.f32 1.0, %v3357
    %v3359 = vmul.f32 %v3356, %v3358
    %v3360 = vadd.f32 %v3356, %v3359
    %vm3361 = vweird.f32 %v3340
    %vm3362 = vweird.f32 %v3356
    %vm3363 = vmor %vm3361, %vm3362
    %v3364 = vsel %vm3363, %v3356, %v3360
    %v3365 = vand.u32 2147483647, %v3340
    %vm3366 = vcmp.eq.f32.partialorder %v3365, 8.507059e+37
    %v3367 = vand.u32 %v3340, 2147483648
    %v3368 = vor.u32 1.1754944e-38, %v3367
    %v3369 = vsel %vm3366, %v3368, %v3364
    %v3370 = vmul.f32 1.0, %v3369
    %v3371 = vtanh.pop %v3331
    %v3372 = vtanh.pop %v3332
    %v3373 = vmul.f32 %v3355, 0.0
    %3375 = vrot.lane.b32.xlu0 %v3371, 64
    %v3376 = vpop.permute.xlu0 %3375
    %v3378 = vmul.f32 %v3355, %v3376
    %3380 = vrot.lane.b32.xlu0 %v3378, 32
    %v3381 = vpop.permute.xlu0 %3380
    %v3383 = vadd.f32 %v3373, %v3381
    %v3384 = vmul.f32 %v3370, 0.0
    %3386 = vrot.lane.b32.xlu0 %v3372, 64
    %v3387 = vpop.permute.xlu0 %3386
    %v3389 = vmul.f32 %v3370, %v3387
    %3391 = vrot.lane.b32.xlu0 %v3389, 32
    %v3392 = vpop.permute.xlu0 %3391
    %v3394 = vadd.f32 %v3384, %v3392
    %v3395 = vtanh.pop %v3383
    %3397 = vrot.lane.b32.xlu0 %v3395, 64
    %v3398 = vpop.permute.xlu0 %3397
    %v3400 = vmul.f32 %v3355, %v3398
    %v3401 = vtanh.pop %v3394
    %3403 = vrot.lane.b32.xlu0 %v3401, 64
    %v3404 = vpop.permute.xlu0 %3403
    %v3406 = vmul.f32 %v3370, %v3404
    %3408 = vrot.lane.b32.xlu0 %v3400, 32
    %v3409 = vpop.permute.xlu0 %3408
    %3412 = vrot.lane.b32.xlu0 %v3406, 64
    %v3413 = vpop.permute.xlu0 %3412
    %v3415 = vsel %vm164, %v3409, %v3413
    %v3416 = vsel %vm419, %v3282, %v3252
    %v3418 = vrot.slane %v3275, 5
    %v3419 = vrot.slane %v3278, 4
    %v3420 = vsel %vm419, %v3419, %v3418
    %v3423 = vsel %vm290, %v3415, 0
    %3425 = vmatpush.msra.mxu0 0.0
    %3426 = vmatpush.msra.mxu0 0.0
    %3427 = vmatpush.msra.mxu0 0.0
    %3428 = vmatpush.msra.mxu0 0.0
    %3429 = vmatpush.msra.mxu0 0.0
    %3430 = vmatpush.msra.mxu0 0.0
    %3431 = vmatpush.msra.mxu0 0.0
    %3432 = vmatpush.msra.mxu0 0.0
    %3433 = vmatpush.msra.mxu0 %v3221
    %3434 = vmatpush.msra.mxu0 %v3219
    %3435 = vmatpush.msra.mxu0 %v3217
    %3436 = vmatpush.msra.mxu0 %v3215
    %3437 = vmatpush.msra.mxu0 %v3213
    %3438 = vmatpush.msra.mxu0 %v3211
    %3439 = vmatpush.msra.mxu0 %v3209
    %3440 = vmatpush.msra.mxu0 %v3207
    %3441 = vmatmul.f32.gmra.mxu0 %v3423
    %v3442 = vpop.f32.mrf.mxu0
    %v3443 = vadd.f32 0.0, %v3442
    %3444 = vdwg.mxu0
    %3445 = vmatpush.msra.mxu0 0.0
    %3446 = vmatpush.msra.mxu0 0.0
    %3447 = vmatpush.msra.mxu0 0.0
    %3448 = vmatpush.msra.mxu0 0.0
    %3449 = vmatpush.msra.mxu0 0.0
    %3450 = vmatpush.msra.mxu0 0.0
    %3451 = vmatpush.msra.mxu0 0.0
    %3452 = vmatpush.msra.mxu0 0.0
    %3453 = vmatpush.msra.mxu0 %v3222
    %3454 = vmatpush.msra.mxu0 %v3220
    %3455 = vmatpush.msra.mxu0 %v3218
    %3456 = vmatpush.msra.mxu0 %v3216
    %3457 = vmatpush.msra.mxu0 %v3214
    %3458 = vmatpush.msra.mxu0 %v3212
    %3459 = vmatpush.msra.mxu0 %v3210
    %3460 = vmatpush.msra.mxu0 %v3208
    %3461 = vmatmul.f32.gmra.mxu0 %v3423
    %v3462 = vpop.f32.mrf.mxu0
    %v3463 = vadd.f32 0.0, %v3462
    %3464 = vdwg.mxu0
    %v3467 = vrot.slane %v3443, 7
    %v3468 = vrot.slane %v3463, 7
    %v3471 = vadd.f32 %v3416, %v3467
    %v3472 = vadd.f32 %v3420, %v3468
    %v3473 = vxor.u32 %v3471, 2147483648
    %v3474 = vxor.u32 %v3472, 2147483648
    %v3475 = vmul.f32 %v3473, 1.442695
    %v3476 = vpow.pop %v3475
    %v3477 = vmul.f32 %v3474, 1.442695
    %v3478 = vpow.pop %v3477
    %v3479 = vadd.f32 %v3476, 1.0
    %v3480 = vadd.f32 %v3478, 1.0
    %v3481 = vrcp.pop %v3479
    %v3482 = vmul.f32 %v3479, %v3481
    %v3483 = vsub.f32 1.0, %v3482
    %v3484 = vmul.f32 %v3481, %v3483
    %v3485 = vadd.f32 %v3481, %v3484
    %vm3486 = vweird.f32 %v3479
    %vm3487 = vweird.f32 %v3481
    %vm3488 = vmor %vm3486, %vm3487
    %v3489 = vsel %vm3488, %v3481, %v3485
    %v3490 = vand.u32 2147483647, %v3479
    %vm3491 = vcmp.eq.f32.partialorder %v3490, 8.507059e+37
    %v3492 = vand.u32 %v3479, 2147483648
    %v3493 = vor.u32 1.1754944e-38, %v3492
    %v3494 = vsel %vm3491, %v3493, %v3489
    %v3495 = vmul.f32 1.0, %v3494
    %v3496 = vrcp.pop %v3480
    %v3497 = vmul.f32 %v3480, %v3496
    %v3498 = vsub.f32 1.0, %v3497
    %v3499 = vmul.f32 %v3496, %v3498
    %v3500 = vadd.f32 %v3496, %v3499
    %vm3501 = vweird.f32 %v3480
    %vm3502 = vweird.f32 %v3496
    %vm3503 = vmor %vm3501, %vm3502
    %v3504 = vsel %vm3503, %v3496, %v3500
    %v3505 = vand.u32 2147483647, %v3480
    %vm3506 = vcmp.eq.f32.partialorder %v3505, 8.507059e+37
    %v3507 = vand.u32 %v3480, 2147483648
    %v3508 = vor.u32 1.1754944e-38, %v3507
    %v3509 = vsel %vm3506, %v3508, %v3504
    %v3510 = vmul.f32 1.0, %v3509
    %v3511 = vtanh.pop %v3471
    %v3512 = vtanh.pop %v3472
    %v3514 = vrot.slane %v3383, 7
    %v3516 = vmul.f32 %v3495, %v3514
    %3518 = vrot.lane.b32.xlu0 %v3511, 64
    %v3519 = vpop.permute.xlu0 %3518
    %v3521 = vmul.f32 %v3495, %v3519
    %3523 = vrot.lane.b32.xlu0 %v3521, 32
    %v3524 = vpop.permute.xlu0 %3523
    %v3526 = vadd.f32 %v3516, %v3524
    %v3528 = vrot.slane %v3394, 7
    %v3530 = vmul.f32 %v3510, %v3528
    %3532 = vrot.lane.b32.xlu0 %v3512, 64
    %v3533 = vpop.permute.xlu0 %3532
    %v3535 = vmul.f32 %v3510, %v3533
    %3537 = vrot.lane.b32.xlu0 %v3535, 32
    %v3538 = vpop.permute.xlu0 %3537
    %v3540 = vadd.f32 %v3530, %v3538
    %v3541 = vtanh.pop %v3526
    %3543 = vrot.lane.b32.xlu0 %v3541, 64
    %v3544 = vpop.permute.xlu0 %3543
    %v3546 = vmul.f32 %v3495, %v3544
    %v3547 = vtanh.pop %v3540
    %3549 = vrot.lane.b32.xlu0 %v3547, 64
    %v3550 = vpop.permute.xlu0 %3549
    %v3552 = vmul.f32 %v3510, %v3550
    %3554 = vrot.lane.b32.xlu0 %v3546, 32
    %v3555 = vpop.permute.xlu0 %3554
    %3558 = vrot.lane.b32.xlu0 %v3552, 64
    %v3559 = vpop.permute.xlu0 %3558
    %v3561 = vsel %vm164, %v3555, %v3559
    %v3562 = vsel %vm566, %v3282, %v3252
    %v3564 = vrot.slane %v3275, 3
    %v3565 = vrot.slane %v3278, 2
    %v3566 = vsel %vm566, %v3565, %v3564
    %v3569 = vrot.slane %v3561, 1
    %v3570 = vsel %vm290, %v3569, 0
    %3572 = vmatpush.msra.mxu0 0.0
    %3573 = vmatpush.msra.mxu0 0.0
    %3574 = vmatpush.msra.mxu0 0.0
    %3575 = vmatpush.msra.mxu0 0.0
    %3576 = vmatpush.msra.mxu0 0.0
    %3577 = vmatpush.msra.mxu0 0.0
    %3578 = vmatpush.msra.mxu0 0.0
    %3579 = vmatpush.msra.mxu0 0.0
    %3580 = vmatpush.msra.mxu0 %v3221
    %3581 = vmatpush.msra.mxu0 %v3219
    %3582 = vmatpush.msra.mxu0 %v3217
    %3583 = vmatpush.msra.mxu0 %v3215
    %3584 = vmatpush.msra.mxu0 %v3213
    %3585 = vmatpush.msra.mxu0 %v3211
    %3586 = vmatpush.msra.mxu0 %v3209
    %3587 = vmatpush.msra.mxu0 %v3207
    %3588 = vmatmul.f32.gmra.mxu0 %v3570
    %v3589 = vpop.f32.mrf.mxu0
    %v3590 = vadd.f32 0.0, %v3589
    %3591 = vdwg.mxu0
    %3592 = vmatpush.msra.mxu0 0.0
    %3593 = vmatpush.msra.mxu0 0.0
    %3594 = vmatpush.msra.mxu0 0.0
    %3595 = vmatpush.msra.mxu0 0.0
    %3596 = vmatpush.msra.mxu0 0.0
    %3597 = vmatpush.msra.mxu0 0.0
    %3598 = vmatpush.msra.mxu0 0.0
    %3599 = vmatpush.msra.mxu0 0.0
    %3600 = vmatpush.msra.mxu0 %v3222
    %3601 = vmatpush.msra.mxu0 %v3220
    %3602 = vmatpush.msra.mxu0 %v3218
    %3603 = vmatpush.msra.mxu0 %v3216
    %3604 = vmatpush.msra.mxu0 %v3214
    %3605 = vmatpush.msra.mxu0 %v3212
    %3606 = vmatpush.msra.mxu0 %v3210
    %3607 = vmatpush.msra.mxu0 %v3208
    %3608 = vmatmul.f32.gmra.mxu0 %v3570
    %v3609 = vpop.f32.mrf.mxu0
    %v3610 = vadd.f32 0.0, %v3609
    %3611 = vdwg.mxu0
    %v3614 = vrot.slane %v3590, 6
    %v3615 = vrot.slane %v3610, 6
    %v3618 = vadd.f32 %v3562, %v3614
    %v3619 = vadd.f32 %v3566, %v3615
    %v3620 = vxor.u32 %v3618, 2147483648
    %v3621 = vxor.u32 %v3619, 2147483648
    %v3622 = vmul.f32 %v3620, 1.442695
    %v3623 = vpow.pop %v3622
    %v3624 = vmul.f32 %v3621, 1.442695
    %v3625 = vpow.pop %v3624
    %v3626 = vadd.f32 %v3623, 1.0
    %v3627 = vadd.f32 %v3625, 1.0
    %v3628 = vrcp.pop %v3626
    %v3629 = vmul.f32 %v3626, %v3628
    %v3630 = vsub.f32 1.0, %v3629
    %v3631 = vmul.f32 %v3628, %v3630
    %v3632 = vadd.f32 %v3628, %v3631
    %vm3633 = vweird.f32 %v3626
    %vm3634 = vweird.f32 %v3628
    %vm3635 = vmor %vm3633, %vm3634
    %v3636 = vsel %vm3635, %v3628, %v3632
    %v3637 = vand.u32 2147483647, %v3626
    %vm3638 = vcmp.eq.f32.partialorder %v3637, 8.507059e+37
    %v3639 = vand.u32 %v3626, 2147483648
    %v3640 = vor.u32 1.1754944e-38, %v3639
    %v3641 = vsel %vm3638, %v3640, %v3636
    %v3642 = vmul.f32 1.0, %v3641
    %v3643 = vrcp.pop %v3627
    %v3644 = vmul.f32 %v3627, %v3643
    %v3645 = vsub.f32 1.0, %v3644
    %v3646 = vmul.f32 %v3643, %v3645
    %v3647 = vadd.f32 %v3643, %v3646
    %vm3648 = vweird.f32 %v3627
    %vm3649 = vweird.f32 %v3643
    %vm3650 = vmor %vm3648, %vm3649
    %v3651 = vsel %vm3650, %v3643, %v3647
    %v3652 = vand.u32 2147483647, %v3627
    %vm3653 = vcmp.eq.f32.partialorder %v3652, 8.507059e+37
    %v3654 = vand.u32 %v3627, 2147483648
    %v3655 = vor.u32 1.1754944e-38, %v3654
    %v3656 = vsel %vm3653, %v3655, %v3651
    %v3657 = vmul.f32 1.0, %v3656
    %v3658 = vtanh.pop %v3618
    %v3659 = vtanh.pop %v3619
    %v3661 = vrot.slane %v3526, 7
    %v3663 = vmul.f32 %v3642, %v3661
    %3665 = vrot.lane.b32.xlu0 %v3658, 64
    %v3666 = vpop.permute.xlu0 %3665
    %v3668 = vmul.f32 %v3642, %v3666
    %3670 = vrot.lane.b32.xlu0 %v3668, 32
    %v3671 = vpop.permute.xlu0 %3670
    %v3673 = vadd.f32 %v3663, %v3671
    %v3675 = vrot.slane %v3540, 7
    %v3677 = vmul.f32 %v3657, %v3675
    %3679 = vrot.lane.b32.xlu0 %v3659, 64
    %v3680 = vpop.permute.xlu0 %3679
    %v3682 = vmul.f32 %v3657, %v3680
    %3684 = vrot.lane.b32.xlu0 %v3682, 32
    %v3685 = vpop.permute.xlu0 %3684
    %v3687 = vadd.f32 %v3677, %v3685
    %v3688 = vtanh.pop %v3673
    %3690 = vrot.lane.b32.xlu0 %v3688, 64
    %v3691 = vpop.permute.xlu0 %3690
    %v3693 = vmul.f32 %v3642, %v3691
    %v3694 = vtanh.pop %v3687
    %3696 = vrot.lane.b32.xlu0 %v3694, 64
    %v3697 = vpop.permute.xlu0 %3696
    %v3699 = vmul.f32 %v3657, %v3697
    %3701 = vrot.lane.b32.xlu0 %v3693, 32
    %v3702 = vpop.permute.xlu0 %3701
    %3705 = vrot.lane.b32.xlu0 %v3699, 64
    %v3706 = vpop.permute.xlu0 %3705
    %v3708 = vsel %vm164, %v3702, %v3706
    %v3709 = vsel %vm714, %v3282, %v3252
    %v3711 = vrot.slane %v3275, 1
    %v3712 = vsel %vm714, %v3278, %v3711
    %v3715 = vrot.slane %v3708, 2
    %v3716 = vsel %vm290, %v3715, 0
    %3718 = vmatpush.msra.mxu0 0.0
    %3719 = vmatpush.msra.mxu0 0.0
    %3720 = vmatpush.msra.mxu0 0.0
    %3721 = vmatpush.msra.mxu0 0.0
    %3722 = vmatpush.msra.mxu0 0.0
    %3723 = vmatpush.msra.mxu0 0.0
    %3724 = vmatpush.msra.mxu0 0.0
    %3725 = vmatpush.msra.mxu0 0.0
    %3726 = vmatpush.msra.mxu0 %v3221
    %3727 = vmatpush.msra.mxu0 %v3219
    %3728 = vmatpush.msra.mxu0 %v3217
    %3729 = vmatpush.msra.mxu0 %v3215
    %3730 = vmatpush.msra.mxu0 %v3213
    %3731 = vmatpush.msra.mxu0 %v3211
    %3732 = vmatpush.msra.mxu0 %v3209
    %3733 = vmatpush.msra.mxu0 %v3207
    %3734 = vmatmul.f32.gmra.mxu0 %v3716
    %v3735 = vpop.f32.mrf.mxu0
    %v3736 = vadd.f32 0.0, %v3735
    %3737 = vdwg.mxu0
    %3738 = vmatpush.msra.mxu0 0.0
    %3739 = vmatpush.msra.mxu0 0.0
    %3740 = vmatpush.msra.mxu0 0.0
    %3741 = vmatpush.msra.mxu0 0.0
    %3742 = vmatpush.msra.mxu0 0.0
    %3743 = vmatpush.msra.mxu0 0.0
    %3744 = vmatpush.msra.mxu0 0.0
    %3745 = vmatpush.msra.mxu0 0.0
    %3746 = vmatpush.msra.mxu0 %v3222
    %3747 = vmatpush.msra.mxu0 %v3220
    %3748 = vmatpush.msra.mxu0 %v3218
    %3749 = vmatpush.msra.mxu0 %v3216
    %3750 = vmatpush.msra.mxu0 %v3214
    %3751 = vmatpush.msra.mxu0 %v3212
    %3752 = vmatpush.msra.mxu0 %v3210
    %3753 = vmatpush.msra.mxu0 %v3208
    %3754 = vmatmul.f32.gmra.mxu0 %v3716
    %v3755 = vpop.f32.mrf.mxu0
    %v3756 = vadd.f32 0.0, %v3755
    %3757 = vdwg.mxu0
    %v3760 = vrot.slane %v3736, 5
    %v3761 = vrot.slane %v3756, 5
    %v3764 = vadd.f32 %v3709, %v3760
    %v3765 = vadd.f32 %v3712, %v3761
    %v3766 = vxor.u32 %v3764, 2147483648
    %v3767 = vxor.u32 %v3765, 2147483648
    %v3768 = vmul.f32 %v3766, 1.442695
    %v3769 = vpow.pop %v3768
    %v3770 = vmul.f32 %v3767, 1.442695
    %v3771 = vpow.pop %v3770
    %v3772 = vadd.f32 %v3769, 1.0
    %v3773 = vadd.f32 %v3771, 1.0
    %v3774 = vrcp.pop %v3772
    %v3775 = vmul.f32 %v3772, %v3774
    %v3776 = vsub.f32 1.0, %v3775
    %v3777 = vmul.f32 %v3774, %v3776
    %v3778 = vadd.f32 %v3774, %v3777
    %vm3779 = vweird.f32 %v3772
    %vm3780 = vweird.f32 %v3774
    %vm3781 = vmor %vm3779, %vm3780
    %v3782 = vsel %vm3781, %v3774, %v3778
    %v3783 = vand.u32 2147483647, %v3772
    %vm3784 = vcmp.eq.f32.partialorder %v3783, 8.507059e+37
    %v3785 = vand.u32 %v3772, 2147483648
    %v3786 = vor.u32 1.1754944e-38, %v3785
    %v3787 = vsel %vm3784, %v3786, %v3782
    %v3788 = vmul.f32 1.0, %v3787
    %v3789 = vrcp.pop %v3773
    %v3790 = vmul.f32 %v3773, %v3789
    %v3791 = vsub.f32 1.0, %v3790
    %v3792 = vmul.f32 %v3789, %v3791
    %v3793 = vadd.f32 %v3789, %v3792
    %vm3794 = vweird.f32 %v3773
    %vm3795 = vweird.f32 %v3789
    %vm3796 = vmor %vm3794, %vm3795
    %v3797 = vsel %vm3796, %v3789, %v3793
    %v3798 = vand.u32 2147483647, %v3773
    %vm3799 = vcmp.eq.f32.partialorder %v3798, 8.507059e+37
    %v3800 = vand.u32 %v3773, 2147483648
    %v3801 = vor.u32 1.1754944e-38, %v3800
    %v3802 = vsel %vm3799, %v3801, %v3797
    %v3803 = vmul.f32 1.0, %v3802
    %v3804 = vtanh.pop %v3764
    %v3805 = vtanh.pop %v3765
    %v3807 = vrot.slane %v3673, 7
    %v3809 = vmul.f32 %v3788, %v3807
    %3811 = vrot.lane.b32.xlu0 %v3804, 64
    %v3812 = vpop.permute.xlu0 %3811
    %v3814 = vmul.f32 %v3788, %v3812
    %3816 = vrot.lane.b32.xlu0 %v3814, 32
    %v3817 = vpop.permute.xlu0 %3816
    %v3819 = vadd.f32 %v3809, %v3817
    %v3821 = vrot.slane %v3687, 7
    %v3823 = vmul.f32 %v3803, %v3821
    %3825 = vrot.lane.b32.xlu0 %v3805, 64
    %v3826 = vpop.permute.xlu0 %3825
    %v3828 = vmul.f32 %v3803, %v3826
    %3830 = vrot.lane.b32.xlu0 %v3828, 32
    %v3831 = vpop.permute.xlu0 %3830
    %v3833 = vadd.f32 %v3823, %v3831
    %v3834 = vtanh.pop %v3819
    %3836 = vrot.lane.b32.xlu0 %v3834, 64
    %v3837 = vpop.permute.xlu0 %3836
    %v3839 = vmul.f32 %v3788, %v3837
    %v3840 = vtanh.pop %v3833
    %3842 = vrot.lane.b32.xlu0 %v3840, 64
    %v3843 = vpop.permute.xlu0 %3842
    %v3845 = vmul.f32 %v3803, %v3843
    %3847 = vrot.lane.b32.xlu0 %v3839, 32
    %v3848 = vpop.permute.xlu0 %3847
    %3851 = vrot.lane.b32.xlu0 %v3845, 64
    %v3852 = vpop.permute.xlu0 %3851
    %v3854 = vsel %vm164, %v3848, %v3852
    %v3855 = vsel %vm861, %v3282, %v3252
    %v3857 = vsel %vm861, %v3288, %v3287
    %v3860 = vrot.slane %v3854, 3
    %v3861 = vsel %vm290, %v3860, 0
    %3863 = vmatpush.msra.mxu0 0.0
    %3864 = vmatpush.msra.mxu0 0.0
    %3865 = vmatpush.msra.mxu0 0.0
    %3866 = vmatpush.msra.mxu0 0.0
    %3867 = vmatpush.msra.mxu0 0.0
    %3868 = vmatpush.msra.mxu0 0.0
    %3869 = vmatpush.msra.mxu0 0.0
    %3870 = vmatpush.msra.mxu0 0.0
    %3871 = vmatpush.msra.mxu0 %v3221
    %3872 = vmatpush.msra.mxu0 %v3219
    %3873 = vmatpush.msra.mxu0 %v3217
    %3874 = vmatpush.msra.mxu0 %v3215
    %3875 = vmatpush.msra.mxu0 %v3213
    %3876 = vmatpush.msra.mxu0 %v3211
    %3877 = vmatpush.msra.mxu0 %v3209
    %3878 = vmatpush.msra.mxu0 %v3207
    %3879 = vmatmul.f32.gmra.mxu0 %v3861
    %v3880 = vpop.f32.mrf.mxu0
    %v3881 = vadd.f32 0.0, %v3880
    %3882 = vdwg.mxu0
    %3883 = vmatpush.msra.mxu0 0.0
    %3884 = vmatpush.msra.mxu0 0.0
    %3885 = vmatpush.msra.mxu0 0.0
    %3886 = vmatpush.msra.mxu0 0.0
    %3887 = vmatpush.msra.mxu0 0.0
    %3888 = vmatpush.msra.mxu0 0.0
    %3889 = vmatpush.msra.mxu0 0.0
    %3890 = vmatpush.msra.mxu0 0.0
    %3891 = vmatpush.msra.mxu0 %v3222
    %3892 = vmatpush.msra.mxu0 %v3220
    %3893 = vmatpush.msra.mxu0 %v3218
    %3894 = vmatpush.msra.mxu0 %v3216
    %3895 = vmatpush.msra.mxu0 %v3214
    %3896 = vmatpush.msra.mxu0 %v3212
    %3897 = vmatpush.msra.mxu0 %v3210
    %3898 = vmatpush.msra.mxu0 %v3208
    %3899 = vmatmul.f32.gmra.mxu0 %v3861
    %v3900 = vpop.f32.mrf.mxu0
    %v3901 = vadd.f32 0.0, %v3900
    %3902 = vdwg.mxu0
    %v3905 = vrot.slane %v3881, 4
    %v3906 = vrot.slane %v3901, 4
    %v3909 = vadd.f32 %v3855, %v3905
    %v3910 = vadd.f32 %v3857, %v3906
    %v3911 = vxor.u32 %v3909, 2147483648
    %v3912 = vxor.u32 %v3910, 2147483648
    %v3913 = vmul.f32 %v3911, 1.442695
    %v3914 = vpow.pop %v3913
    %v3915 = vmul.f32 %v3912, 1.442695
    %v3916 = vpow.pop %v3915
    %v3917 = vadd.f32 %v3914, 1.0
    %v3918 = vadd.f32 %v3916, 1.0
    %v3919 = vrcp.pop %v3917
    %v3920 = vmul.f32 %v3917, %v3919
    %v3921 = vsub.f32 1.0, %v3920
    %v3922 = vmul.f32 %v3919, %v3921
    %v3923 = vadd.f32 %v3919, %v3922
    %vm3924 = vweird.f32 %v3917
    %vm3925 = vweird.f32 %v3919
    %vm3926 = vmor %vm3924, %vm3925
    %v3927 = vsel %vm3926, %v3919, %v3923
    %v3928 = vand.u32 2147483647, %v3917
    %vm3929 = vcmp.eq.f32.partialorder %v3928, 8.507059e+37
    %v3930 = vand.u32 %v3917, 2147483648
    %v3931 = vor.u32 1.1754944e-38, %v3930
    %v3932 = vsel %vm3929, %v3931, %v3927
    %v3933 = vmul.f32 1.0, %v3932
    %v3934 = vrcp.pop %v3918
    %v3935 = vmul.f32 %v3918, %v3934
    %v3936 = vsub.f32 1.0, %v3935
    %v3937 = vmul.f32 %v3934, %v3936
    %v3938 = vadd.f32 %v3934, %v3937
    %vm3939 = vweird.f32 %v3918
    %vm3940 = vweird.f32 %v3934
    %vm3941 = vmor %vm3939, %vm3940
    %v3942 = vsel %vm3941, %v3934, %v3938
    %v3943 = vand.u32 2147483647, %v3918
    %vm3944 = vcmp.eq.f32.partialorder %v3943, 8.507059e+37
    %v3945 = vand.u32 %v3918, 2147483648
    %v3946 = vor.u32 1.1754944e-38, %v3945
    %v3947 = vsel %vm3944, %v3946, %v3942
    %v3948 = vmul.f32 1.0, %v3947
    %v3949 = vtanh.pop %v3909
    %v3950 = vtanh.pop %v3910
    %v3952 = vrot.slane %v3819, 7
    %v3954 = vmul.f32 %v3933, %v3952
    %3956 = vrot.lane.b32.xlu0 %v3949, 64
    %v3957 = vpop.permute.xlu0 %3956
    %v3959 = vmul.f32 %v3933, %v3957
    %3961 = vrot.lane.b32.xlu0 %v3959, 32
    %v3962 = vpop.permute.xlu0 %3961
    %v3964 = vadd.f32 %v3954, %v3962
    %v3966 = vrot.slane %v3833, 7
    %v3968 = vmul.f32 %v3948, %v3966
    %3970 = vrot.lane.b32.xlu0 %v3950, 64
    %v3971 = vpop.permute.xlu0 %3970
    %v3973 = vmul.f32 %v3948, %v3971
    %3975 = vrot.lane.b32.xlu0 %v3973, 32
    %v3976 = vpop.permute.xlu0 %3975
    %v3978 = vadd.f32 %v3968, %v3976
    %v3979 = vtanh.pop %v3964
    %3981 = vrot.lane.b32.xlu0 %v3979, 64
    %v3982 = vpop.permute.xlu0 %3981
    %v3984 = vmul.f32 %v3933, %v3982
    %v3985 = vtanh.pop %v3978
    %3987 = vrot.lane.b32.xlu0 %v3985, 64
    %v3988 = vpop.permute.xlu0 %3987
    %v3990 = vmul.f32 %v3948, %v3988
    %3992 = vrot.lane.b32.xlu0 %v3984, 32
    %v3993 = vpop.permute.xlu0 %3992
    %3996 = vrot.lane.b32.xlu0 %v3990, 64
    %v3997 = vpop.permute.xlu0 %3996
    %v3999 = vsel %vm164, %v3993, %v3997
    %v4000 = vsel %vm1007, %v3282, %v3252
    %v4002 = vsel %vm1007, %v3419, %v3418
    %v4005 = vrot.slane %v3999, 4
    %v4006 = vsel %vm290, %v4005, 0
    %4008 = vmatpush.msra.mxu0 0.0
    %4009 = vmatpush.msra.mxu0 0.0
    %4010 = vmatpush.msra.mxu0 0.0
    %4011 = vmatpush.msra.mxu0 0.0
    %4012 = vmatpush.msra.mxu0 0.0
    %4013 = vmatpush.msra.mxu0 0.0
    %4014 = vmatpush.msra.mxu0 0.0
    %4015 = vmatpush.msra.mxu0 0.0
    %4016 = vmatpush.msra.mxu0 %v3221
    %4017 = vmatpush.msra.mxu0 %v3219
    %4018 = vmatpush.msra.mxu0 %v3217
    %4019 = vmatpush.msra.mxu0 %v3215
    %4020 = vmatpush.msra.mxu0 %v3213
    %4021 = vmatpush.msra.mxu0 %v3211
    %4022 = vmatpush.msra.mxu0 %v3209
    %4023 = vmatpush.msra.mxu0 %v3207
    %4024 = vmatmul.f32.gmra.mxu0 %v4006
    %v4025 = vpop.f32.mrf.mxu0
    %v4026 = vadd.f32 0.0, %v4025
    %4027 = vdwg.mxu0
    %4028 = vmatpush.msra.mxu0 0.0
    %4029 = vmatpush.msra.mxu0 0.0
    %4030 = vmatpush.msra.mxu0 0.0
    %4031 = vmatpush.msra.mxu0 0.0
    %4032 = vmatpush.msra.mxu0 0.0
    %4033 = vmatpush.msra.mxu0 0.0
    %4034 = vmatpush.msra.mxu0 0.0
    %4035 = vmatpush.msra.mxu0 0.0
    %4036 = vmatpush.msra.mxu0 %v3222
    %4037 = vmatpush.msra.mxu0 %v3220
    %4038 = vmatpush.msra.mxu0 %v3218
    %4039 = vmatpush.msra.mxu0 %v3216
    %4040 = vmatpush.msra.mxu0 %v3214
    %4041 = vmatpush.msra.mxu0 %v3212
    %4042 = vmatpush.msra.mxu0 %v3210
    %4043 = vmatpush.msra.mxu0 %v3208
    %4044 = vmatmul.f32.gmra.mxu0 %v4006
    %v4045 = vpop.f32.mrf.mxu0
    %v4046 = vadd.f32 0.0, %v4045
    %4047 = vdwg.mxu0
    %v4050 = vrot.slane %v4026, 3
    %v4051 = vrot.slane %v4046, 3
    %v4054 = vadd.f32 %v4000, %v4050
    %v4055 = vadd.f32 %v4002, %v4051
    %v4056 = vxor.u32 %v4054, 2147483648
    %v4057 = vxor.u32 %v4055, 2147483648
    %v4058 = vmul.f32 %v4056, 1.442695
    %v4059 = vpow.pop %v4058
    %v4060 = vmul.f32 %v4057, 1.442695
    %v4061 = vpow.pop %v4060
    %v4062 = vadd.f32 %v4059, 1.0
    %v4063 = vadd.f32 %v4061, 1.0
    %v4064 = vrcp.pop %v4062
    %v4065 = vmul.f32 %v4062, %v4064
    %v4066 = vsub.f32 1.0, %v4065
    %v4067 = vmul.f32 %v4064, %v4066
    %v4068 = vadd.f32 %v4064, %v4067
    %vm4069 = vweird.f32 %v4062
    %vm4070 = vweird.f32 %v4064
    %vm4071 = vmor %vm4069, %vm4070
    %v4072 = vsel %vm4071, %v4064, %v4068
    %v4073 = vand.u32 2147483647, %v4062
    %vm4074 = vcmp.eq.f32.partialorder %v4073, 8.507059e+37
    %v4075 = vand.u32 %v4062, 2147483648
    %v4076 = vor.u32 1.1754944e-38, %v4075
    %v4077 = vsel %vm4074, %v4076, %v4072
    %v4078 = vmul.f32 1.0, %v4077
    %v4079 = vrcp.pop %v4063
    %v4080 = vmul.f32 %v4063, %v4079
    %v4081 = vsub.f32 1.0, %v4080
    %v4082 = vmul.f32 %v4079, %v4081
    %v4083 = vadd.f32 %v4079, %v4082
    %vm4084 = vweird.f32 %v4063
    %vm4085 = vweird.f32 %v4079
    %vm4086 = vmor %vm4084, %vm4085
    %v4087 = vsel %vm4086, %v4079, %v4083
    %v4088 = vand.u32 2147483647, %v4063
    %vm4089 = vcmp.eq.f32.partialorder %v4088, 8.507059e+37
    %v4090 = vand.u32 %v4063, 2147483648
    %v4091 = vor.u32 1.1754944e-38, %v4090
    %v4092 = vsel %vm4089, %v4091, %v4087
    %v4093 = vmul.f32 1.0, %v4092
    %v4094 = vtanh.pop %v4054
    %v4095 = vtanh.pop %v4055
    %v4097 = vrot.slane %v3964, 7
    %v4099 = vmul.f32 %v4078, %v4097
    %4101 = vrot.lane.b32.xlu0 %v4094, 64
    %v4102 = vpop.permute.xlu0 %4101
    %v4104 = vmul.f32 %v4078, %v4102
    %4106 = vrot.lane.b32.xlu0 %v4104, 32
    %v4107 = vpop.permute.xlu0 %4106
    %v4109 = vadd.f32 %v4099, %v4107
    %v4111 = vrot.slane %v3978, 7
    %v4113 = vmul.f32 %v4093, %v4111
    %4115 = vrot.lane.b32.xlu0 %v4095, 64
    %v4116 = vpop.permute.xlu0 %4115
    %v4118 = vmul.f32 %v4093, %v4116
    %4120 = vrot.lane.b32.xlu0 %v4118, 32
    %v4121 = vpop.permute.xlu0 %4120
    %v4123 = vadd.f32 %v4113, %v4121
    %v4124 = vtanh.pop %v4109
    %4126 = vrot.lane.b32.xlu0 %v4124, 64
    %v4127 = vpop.permute.xlu0 %4126
    %v4129 = vmul.f32 %v4078, %v4127
    %v4130 = vtanh.pop %v4123
    %4132 = vrot.lane.b32.xlu0 %v4130, 64
    %v4133 = vpop.permute.xlu0 %4132
    %v4135 = vmul.f32 %v4093, %v4133
    %4137 = vrot.lane.b32.xlu0 %v4129, 32
    %v4138 = vpop.permute.xlu0 %4137
    %4141 = vrot.lane.b32.xlu0 %v4135, 64
    %v4142 = vpop.permute.xlu0 %4141
    %v4144 = vsel %vm164, %v4138, %v4142
    %v4145 = vsel %vm1153, %v3282, %v3252
    %v4147 = vsel %vm1153, %v3565, %v3564
    %v4150 = vrot.slane %v4144, 5
    %v4151 = vsel %vm290, %v4150, 0
    %4153 = vmatpush.msra.mxu0 0.0
    %4154 = vmatpush.msra.mxu0 0.0
    %4155 = vmatpush.msra.mxu0 0.0
    %4156 = vmatpush.msra.mxu0 0.0
    %4157 = vmatpush.msra.mxu0 0.0
    %4158 = vmatpush.msra.mxu0 0.0
    %4159 = vmatpush.msra.mxu0 0.0
    %4160 = vmatpush.msra.mxu0 0.0
    %4161 = vmatpush.msra.mxu0 %v3221
    %4162 = vmatpush.msra.mxu0 %v3219
    %4163 = vmatpush.msra.mxu0 %v3217
    %4164 = vmatpush.msra.mxu0 %v3215
    %4165 = vmatpush.msra.mxu0 %v3213
    %4166 = vmatpush.msra.mxu0 %v3211
    %4167 = vmatpush.msra.mxu0 %v3209
    %4168 = vmatpush.msra.mxu0 %v3207
    %4169 = vmatmul.f32.gmra.mxu0 %v4151
    %v4170 = vpop.f32.mrf.mxu0
    %v4171 = vadd.f32 0.0, %v4170
    %4172 = vdwg.mxu0
    %4173 = vmatpush.msra.mxu0 0.0
    %4174 = vmatpush.msra.mxu0 0.0
    %4175 = vmatpush.msra.mxu0 0.0
    %4176 = vmatpush.msra.mxu0 0.0
    %4177 = vmatpush.msra.mxu0 0.0
    %4178 = vmatpush.msra.mxu0 0.0
    %4179 = vmatpush.msra.mxu0 0.0
    %4180 = vmatpush.msra.mxu0 0.0
    %4181 = vmatpush.msra.mxu0 %v3222
    %4182 = vmatpush.msra.mxu0 %v3220
    %4183 = vmatpush.msra.mxu0 %v3218
    %4184 = vmatpush.msra.mxu0 %v3216
    %4185 = vmatpush.msra.mxu0 %v3214
    %4186 = vmatpush.msra.mxu0 %v3212
    %4187 = vmatpush.msra.mxu0 %v3210
    %4188 = vmatpush.msra.mxu0 %v3208
    %4189 = vmatmul.f32.gmra.mxu0 %v4151
    %v4190 = vpop.f32.mrf.mxu0
    %v4191 = vadd.f32 0.0, %v4190
    %4192 = vdwg.mxu0
    %v4195 = vrot.slane %v4171, 2
    %v4196 = vrot.slane %v4191, 2
    %v4199 = vadd.f32 %v4145, %v4195
    %v4200 = vadd.f32 %v4147, %v4196
    %v4201 = vxor.u32 %v4199, 2147483648
    %v4202 = vxor.u32 %v4200, 2147483648
    %v4203 = vmul.f32 %v4201, 1.442695
    %v4204 = vpow.pop %v4203
    %v4205 = vmul.f32 %v4202, 1.442695
    %v4206 = vpow.pop %v4205
    %v4207 = vadd.f32 %v4204, 1.0
    %v4208 = vadd.f32 %v4206, 1.0
    %v4209 = vrcp.pop %v4207
    %v4210 = vmul.f32 %v4207, %v4209
    %v4211 = vsub.f32 1.0, %v4210
    %v4212 = vmul.f32 %v4209, %v4211
    %v4213 = vadd.f32 %v4209, %v4212
    %vm4214 = vweird.f32 %v4207
    %vm4215 = vweird.f32 %v4209
    %vm4216 = vmor %vm4214, %vm4215
    %v4217 = vsel %vm4216, %v4209, %v4213
    %v4218 = vand.u32 2147483647, %v4207
    %vm4219 = vcmp.eq.f32.partialorder %v4218, 8.507059e+37
    %v4220 = vand.u32 %v4207, 2147483648
    %v4221 = vor.u32 1.1754944e-38, %v4220
    %v4222 = vsel %vm4219, %v4221, %v4217
    %v4223 = vmul.f32 1.0, %v4222
    %v4224 = vrcp.pop %v4208
    %v4225 = vmul.f32 %v4208, %v4224
    %v4226 = vsub.f32 1.0, %v4225
    %v4227 = vmul.f32 %v4224, %v4226
    %v4228 = vadd.f32 %v4224, %v4227
    %vm4229 = vweird.f32 %v4208
    %vm4230 = vweird.f32 %v4224
    %vm4231 = vmor %vm4229, %vm4230
    %v4232 = vsel %vm4231, %v4224, %v4228
    %v4233 = vand.u32 2147483647, %v4208
    %vm4234 = vcmp.eq.f32.partialorder %v4233, 8.507059e+37
    %v4235 = vand.u32 %v4208, 2147483648
    %v4236 = vor.u32 1.1754944e-38, %v4235
    %v4237 = vsel %vm4234, %v4236, %v4232
    %v4238 = vmul.f32 1.0, %v4237
    %v4239 = vtanh.pop %v4199
    %v4240 = vtanh.pop %v4200
    %v4242 = vrot.slane %v4109, 7
    %v4244 = vmul.f32 %v4223, %v4242
    %4246 = vrot.lane.b32.xlu0 %v4239, 64
    %v4247 = vpop.permute.xlu0 %4246
    %v4249 = vmul.f32 %v4223, %v4247
    %4251 = vrot.lane.b32.xlu0 %v4249, 32
    %v4252 = vpop.permute.xlu0 %4251
    %v4254 = vadd.f32 %v4244, %v4252
    %v4256 = vrot.slane %v4123, 7
    %v4258 = vmul.f32 %v4238, %v4256
    %4260 = vrot.lane.b32.xlu0 %v4240, 64
    %v4261 = vpop.permute.xlu0 %4260
    %v4263 = vmul.f32 %v4238, %v4261
    %4265 = vrot.lane.b32.xlu0 %v4263, 32
    %v4266 = vpop.permute.xlu0 %4265
    %v4268 = vadd.f32 %v4258, %v4266
    %v4269 = vtanh.pop %v4254
    %4271 = vrot.lane.b32.xlu0 %v4269, 64
    %v4272 = vpop.permute.xlu0 %4271
    %v4274 = vmul.f32 %v4223, %v4272
    %v4275 = vtanh.pop %v4268
    %4277 = vrot.lane.b32.xlu0 %v4275, 64
    %v4278 = vpop.permute.xlu0 %4277
    %v4280 = vmul.f32 %v4238, %v4278
    %4282 = vrot.lane.b32.xlu0 %v4274, 32
    %v4283 = vpop.permute.xlu0 %4282
    %4286 = vrot.lane.b32.xlu0 %v4280, 64
    %v4287 = vpop.permute.xlu0 %4286
    %v4289 = vsel %vm164, %v4283, %v4287
    %v4295 = vrot.slane %v4289, 6
    %v4296 = vsel %vm290, %v4295, 0
    %4298 = vmatpush.msra.mxu0 0.0
    %4299 = vmatpush.msra.mxu0 0.0
    %4300 = vmatpush.msra.mxu0 0.0
    %4301 = vmatpush.msra.mxu0 0.0
    %4302 = vmatpush.msra.mxu0 0.0
    %4303 = vmatpush.msra.mxu0 0.0
    %4304 = vmatpush.msra.mxu0 0.0
    %4305 = vmatpush.msra.mxu0 0.0
    %4306 = vmatpush.msra.mxu0 %v3221
    %4307 = vmatpush.msra.mxu0 %v3219
    %4308 = vmatpush.msra.mxu0 %v3217
    %4309 = vmatpush.msra.mxu0 %v3215
    %4310 = vmatpush.msra.mxu0 %v3213
    %4311 = vmatpush.msra.mxu0 %v3211
    %4312 = vmatpush.msra.mxu0 %v3209
    %4313 = vmatpush.msra.mxu0 %v3207
    %4314 = vmatmul.f32.gmra.mxu0 %v4296
    %v4315 = vpop.f32.mrf.mxu0
    %v4316 = vadd.f32 0.0, %v4315
    %4317 = vdwg.mxu0
    %4318 = vmatpush.msra.mxu0 0.0
    %4319 = vmatpush.msra.mxu0 0.0
    %4320 = vmatpush.msra.mxu0 0.0
    %4321 = vmatpush.msra.mxu0 0.0
    %4322 = vmatpush.msra.mxu0 0.0
    %4323 = vmatpush.msra.mxu0 0.0
    %4324 = vmatpush.msra.mxu0 0.0
    %4325 = vmatpush.msra.mxu0 0.0
    %4326 = vmatpush.msra.mxu0 %v3222
    %4327 = vmatpush.msra.mxu0 %v3220
    %4328 = vmatpush.msra.mxu0 %v3218
    %4329 = vmatpush.msra.mxu0 %v3216
    %4330 = vmatpush.msra.mxu0 %v3214
    %4331 = vmatpush.msra.mxu0 %v3212
    %4332 = vmatpush.msra.mxu0 %v3210
    %4333 = vmatpush.msra.mxu0 %v3208
    %4334 = vmatmul.f32.gmra.mxu0 %v4296
    %v4335 = vpop.f32.mrf.mxu0
    %v4336 = vadd.f32 0.0, %v4335
    %4337 = vdwg.mxu0
    %v4340 = vrot.slane %v4316, 1
    %v4341 = vrot.slane %v4336, 1
    %v4344 = vadd.f32 %v3252, %v4340
    %v4345 = vadd.f32 %v3711, %v4341
    %v4346 = vadd.f32 %v3282, %v4340
    %v4347 = vadd.f32 %v3278, %v4341
    %v4348 = vxor.u32 %v4344, 2147483648
    %v4349 = vxor.u32 %v4345, 2147483648
    %v4350 = vxor.u32 %v4346, 2147483648
    %v4351 = vxor.u32 %v4347, 2147483648
    %v4352 = vmul.f32 %v4348, 1.442695
    %v4353 = vpow.pop %v4352
    %v4354 = vmul.f32 %v4349, 1.442695
    %v4355 = vpow.pop %v4354
    %v4356 = vmul.f32 %v4350, 1.442695
    %v4357 = vpow.pop %v4356
    %v4358 = vmul.f32 %v4351, 1.442695
    %v4359 = vpow.pop %v4358
    %v4360 = vadd.f32 %v4353, 1.0
    %v4361 = vadd.f32 %v4355, 1.0
    %v4362 = vadd.f32 %v4357, 1.0
    %v4363 = vadd.f32 %v4359, 1.0
    %v4364 = vrcp.pop %v4360
    %v4365 = vmul.f32 %v4360, %v4364
    %v4366 = vsub.f32 1.0, %v4365
    %v4367 = vmul.f32 %v4364, %v4366
    %v4368 = vadd.f32 %v4364, %v4367
    %vm4369 = vweird.f32 %v4360
    %vm4370 = vweird.f32 %v4364
    %vm4371 = vmor %vm4369, %vm4370
    %v4372 = vsel %vm4371, %v4364, %v4368
    %v4373 = vand.u32 2147483647, %v4360
    %vm4374 = vcmp.eq.f32.partialorder %v4373, 8.507059e+37
    %v4375 = vand.u32 %v4360, 2147483648
    %v4376 = vor.u32 1.1754944e-38, %v4375
    %v4377 = vsel %vm4374, %v4376, %v4372
    %v4378 = vmul.f32 1.0, %v4377
    %v4379 = vrcp.pop %v4361
    %v4380 = vmul.f32 %v4361, %v4379
    %v4381 = vsub.f32 1.0, %v4380
    %v4382 = vmul.f32 %v4379, %v4381
    %v4383 = vadd.f32 %v4379, %v4382
    %vm4384 = vweird.f32 %v4361
    %vm4385 = vweird.f32 %v4379
    %vm4386 = vmor %vm4384, %vm4385
    %v4387 = vsel %vm4386, %v4379, %v4383
    %v4388 = vand.u32 2147483647, %v4361
    %vm4389 = vcmp.eq.f32.partialorder %v4388, 8.507059e+37
    %v4390 = vand.u32 %v4361, 2147483648
    %v4391 = vor.u32 1.1754944e-38, %v4390
    %v4392 = vsel %vm4389, %v4391, %v4387
    %v4393 = vmul.f32 1.0, %v4392
    %v4394 = vrcp.pop %v4362
    %v4395 = vmul.f32 %v4362, %v4394
    %v4396 = vsub.f32 1.0, %v4395
    %v4397 = vmul.f32 %v4394, %v4396
    %v4398 = vadd.f32 %v4394, %v4397
    %vm4399 = vweird.f32 %v4362
    %vm4400 = vweird.f32 %v4394
    %vm4401 = vmor %vm4399, %vm4400
    %v4402 = vsel %vm4401, %v4394, %v4398
    %v4403 = vand.u32 2147483647, %v4362
    %vm4404 = vcmp.eq.f32.partialorder %v4403, 8.507059e+37
    %v4405 = vand.u32 %v4362, 2147483648
    %v4406 = vor.u32 1.1754944e-38, %v4405
    %v4407 = vsel %vm4404, %v4406, %v4402
    %v4408 = vmul.f32 1.0, %v4407
    %v4409 = vrcp.pop %v4363
    %v4410 = vmul.f32 %v4363, %v4409
    %v4411 = vsub.f32 1.0, %v4410
    %v4412 = vmul.f32 %v4409, %v4411
    %v4413 = vadd.f32 %v4409, %v4412
    %vm4414 = vweird.f32 %v4363
    %vm4415 = vweird.f32 %v4409
    %vm4416 = vmor %vm4414, %vm4415
    %v4417 = vsel %vm4416, %v4409, %v4413
    %v4418 = vand.u32 2147483647, %v4363
    %vm4419 = vcmp.eq.f32.partialorder %v4418, 8.507059e+37
    %v4420 = vand.u32 %v4363, 2147483648
    %v4421 = vor.u32 1.1754944e-38, %v4420
    %v4422 = vsel %vm4419, %v4421, %v4417
    %v4423 = vmul.f32 1.0, %v4422
    %v4424 = vtanh.pop %v4344
    %v4425 = vtanh.pop %v4345
    %v4426 = vtanh.pop %v4346
    %v4427 = vtanh.pop %v4347
    %v4429 = vrot.slane %v4254, 7
    %v4431 = vmul.f32 %v4378, %v4429
    %v4432 = vmul.f32 %v4408, %v4429
    %4435 = vrot.lane.b32.xlu0 %v4424, 64
    %v4436 = vpop.permute.xlu0 %4435
    %4437 = vrot.lane.b32.xlu0 %v4426, 64
    %v4438 = vpop.permute.xlu0 %4437
    %v4441 = vmul.f32 %v4378, %v4436
    %v4442 = vmul.f32 %v4408, %v4438
    %4445 = vrot.lane.b32.xlu0 %v4441, 32
    %v4446 = vpop.permute.xlu0 %4445
    %4447 = vrot.lane.b32.xlu0 %v4442, 32
    %v4448 = vpop.permute.xlu0 %4447
    %v4451 = vadd.f32 %v4431, %v4446
    %v4452 = vadd.f32 %v4432, %v4448
    %v4454 = vrot.slane %v4268, 7
    %v4456 = vmul.f32 %v4393, %v4454
    %v4457 = vmul.f32 %v4423, %v4454
    %4460 = vrot.lane.b32.xlu0 %v4425, 64
    %v4461 = vpop.permute.xlu0 %4460
    %4462 = vrot.lane.b32.xlu0 %v4427, 64
    %v4463 = vpop.permute.xlu0 %4462
    %v4466 = vmul.f32 %v4393, %v4461
    %v4467 = vmul.f32 %v4423, %v4463
    %4470 = vrot.lane.b32.xlu0 %v4466, 32
    %v4471 = vpop.permute.xlu0 %4470
    %4472 = vrot.lane.b32.xlu0 %v4467, 32
    %v4473 = vpop.permute.xlu0 %4472
    %v4476 = vadd.f32 %v4456, %v4471
    %v4477 = vadd.f32 %v4457, %v4473
    %v4478 = vtanh.pop %v4451
    %v4479 = vtanh.pop %v4452
    %4482 = vrot.lane.b32.xlu0 %v4478, 64
    %v4483 = vpop.permute.xlu0 %4482
    %4484 = vrot.lane.b32.xlu0 %v4479, 64
    %v4485 = vpop.permute.xlu0 %4484
    %v4488 = vmul.f32 %v4378, %v4483
    %v4489 = vmul.f32 %v4408, %v4485
    %v4490 = vtanh.pop %v4476
    %v4491 = vtanh.pop %v4477
    %4494 = vrot.lane.b32.xlu0 %v4490, 64
    %v4495 = vpop.permute.xlu0 %4494
    %4496 = vrot.lane.b32.xlu0 %v4491, 64
    %v4497 = vpop.permute.xlu0 %4496
    %v4500 = vmul.f32 %v4393, %v4495
    %v4501 = vmul.f32 %v4423, %v4497
    %v4502 = vrot.slane %v3400, 1
    %4504 = vst [vmem:[#allocation1] sm:$0xff] %v3546
    %s4505 = scalar_lea.vmem [#allocation1], 1
    %v4506 = vld [vmem:[%s4505] ss:$9 sm:$0xff]
    %s4507 = scalar_lea.vmem [#allocation1], 2
    %v4508 = vld [vmem:[%s4507] ss:$9 sm:$0xff]
    %4509 = vst [vmem:[#allocation1] sm:$0xff] %v3693
    %s4510 = scalar_lea.vmem [#allocation1], 2
    %v4511 = vld [vmem:[%s4510] ss:$9 sm:$0xff]
    %s4512 = scalar_lea.vmem [#allocation1], 3
    %v4513 = vld [vmem:[%s4512] ss:$9 sm:$0xff]
    %4514 = vst [vmem:[#allocation1] sm:$0xff] %v3839
    %s4515 = scalar_lea.vmem [#allocation1], 3
    %v4516 = vld [vmem:[%s4515] ss:$9 sm:$0xff]
    %s4517 = scalar_lea.vmem [#allocation1], 4
    %v4518 = vld [vmem:[%s4517] ss:$9 sm:$0xff]
    %4519 = vst [vmem:[#allocation1] sm:$0xff] %v3984
    %s4520 = scalar_lea.vmem [#allocation1], 4
    %v4521 = vld [vmem:[%s4520] ss:$9 sm:$0xff]
    %s4522 = scalar_lea.vmem [#allocation1], 5
    %v4523 = vld [vmem:[%s4522] ss:$9 sm:$0xff]
    %4524 = vst [vmem:[#allocation1] sm:$0xff] %v4129
    %s4525 = scalar_lea.vmem [#allocation1], 5
    %v4526 = vld [vmem:[%s4525] ss:$9 sm:$0xff]
    %s4527 = scalar_lea.vmem [#allocation1], 6
    %v4528 = vld [vmem:[%s4527] ss:$9 sm:$0xff]
    %4529 = vst [vmem:[#allocation1] sm:$0xff] %v4274
    %s4530 = scalar_lea.vmem [#allocation1], 6
    %v4531 = vld [vmem:[%s4530] ss:$9 sm:$0xff]
    %s4532 = scalar_lea.vmem [#allocation1], 7
    %v4533 = vld [vmem:[%s4532] ss:$9 sm:$0xff]
    %4536 = vst [vmem:[#allocation1] sm:$0xff] %v4488
    %s4537 = scalar_lea.vmem [#allocation1], 7
    %v4538 = vld [vmem:[%s4537] ss:$9 sm:$0xff]
    %4539 = vst [vmem:[#allocation1] sm:$0xff] %v4489
    %v4540 = vld [vmem:[#allocation1] ss:$9 sm:$0xff]
    %v4541 = vperm.slane %v4506, 0
    %v4542 = vperm.slane %v4508, 0
    %v4545 = vperm.slane %v4511, 0
    %v4546 = vperm.slane %v4513, 0
    %v4549 = vperm.slane %v4516, 0
    %v4550 = vperm.slane %v4518, 0
    %v4553 = vperm.slane %v4521, 0
    %v4554 = vperm.slane %v4523, 0
    %v4557 = vperm.slane %v4526, 0
    %v4558 = vperm.slane %v4528, 0
    %v4561 = vperm.slane %v4531, 0
    %v4562 = vperm.slane %v4533, 0
    %v4565 = vperm.slane %v4538, 0
    %v4566 = vperm.slane %v4540, 0
    %v4569 = vsel %vm39, %v3400, %v4541
    %v4570 = vsel %vm39, %v4502, %v4542
    %v4571 = vsel %vm1580, %v4569, %v4545
    %v4572 = vsel %vm1580, %v4570, %v4546
    %v4573 = vsel %vm1583, %v4571, %v4549
    %v4574 = vsel %vm1583, %v4572, %v4550
    %v4575 = vsel %vm87, %v4573, %v4553
    %v4576 = vsel %vm87, %v4574, %v4554
    %v4577 = vsel %vm1588, %v4575, %v4557
    %v4578 = vsel %vm1588, %v4576, %v4558
    %v4579 = vsel %vm61, %v4577, %v4561
    %v4580 = vsel %vm61, %v4578, %v4562
    %v4581 = vsel %vm48, %v4579, %v4565
    %v4582 = vsel %vm48, %v4580, %v4566
    %4585 = vst [vmem:[#allocation1] sm:$0xff] %v4500
    %s4586 = scalar_lea.vmem [#allocation1], 7
    %v4587 = vld [vmem:[%s4586] ss:$9 sm:$0xff]
    %4588 = vst [vmem:[#allocation1] sm:$0xff] %v4501
    %v4589 = vld [vmem:[#allocation1] ss:$9 sm:$0xff]
    %4592 = vst [vmem:[#allocation1] sm:$0xff] %v4280
    %s4593 = scalar_lea.vmem [#allocation1], 6
    %v4594 = vld [vmem:[%s4593] ss:$9 sm:$0xff]
    %s4595 = scalar_lea.vmem [#allocation1], 7
    %v4596 = vld [vmem:[%s4595] ss:$9 sm:$0xff]
    %4597 = vst [vmem:[#allocation1] sm:$0xff] %v4135
    %s4598 = scalar_lea.vmem [#allocation1], 5
    %v4599 = vld [vmem:[%s4598] ss:$9 sm:$0xff]
    %s4600 = scalar_lea.vmem [#allocation1], 6
    %v4601 = vld [vmem:[%s4600] ss:$9 sm:$0xff]
    %4602 = vst [vmem:[#allocation1] sm:$0xff] %v3990
    %s4603 = scalar_lea.vmem [#allocation1], 4
    %v4604 = vld [vmem:[%s4603] ss:$9 sm:$0xff]
    %s4605 = scalar_lea.vmem [#allocation1], 5
    %v4606 = vld [vmem:[%s4605] ss:$9 sm:$0xff]
    %4607 = vst [vmem:[#allocation1] sm:$0xff] %v3845
    %s4608 = scalar_lea.vmem [#allocation1], 3
    %v4609 = vld [vmem:[%s4608] ss:$9 sm:$0xff]
    %s4610 = scalar_lea.vmem [#allocation1], 4
    %v4611 = vld [vmem:[%s4610] ss:$9 sm:$0xff]
    %4612 = vst [vmem:[#allocation1] sm:$0xff] %v3699
    %s4613 = scalar_lea.vmem [#allocation1], 2
    %v4614 = vld [vmem:[%s4613] ss:$9 sm:$0xff]
    %s4615 = scalar_lea.vmem [#allocation1], 3
    %v4616 = vld [vmem:[%s4615] ss:$9 sm:$0xff]
    %4617 = vst [vmem:[#allocation1] sm:$0xff] %v3552
    %s4618 = scalar_lea.vmem [#allocation1], 1
    %v4619 = vld [vmem:[%s4618] ss:$9 sm:$0xff]
    %s4620 = scalar_lea.vmem [#allocation1], 2
    %v4621 = vld [vmem:[%s4620] ss:$9 sm:$0xff]
    %v4622 = vrot.slane %v3406, 1
    %v4623 = vperm.slane %v4594, 0
    %v4624 = vperm.slane %v4596, 0
    %v4627 = vperm.slane %v4599, 0
    %v4628 = vperm.slane %v4601, 0
    %v4631 = vperm.slane %v4604, 0
    %v4632 = vperm.slane %v4606, 0
    %v4635 = vperm.slane %v4609, 0
    %v4636 = vperm.slane %v4611, 0
    %v4639 = vperm.slane %v4614, 0
    %v4640 = vperm.slane %v4616, 0
    %v4643 = vperm.slane %v4619, 0
    %v4644 = vperm.slane %v4621, 0
    %v4647 = vperm.slane %v3406, 0
    %v4648 = vperm.slane %v4622, 0
    %v4651 = vsel %vm39, %v4587, %v4623
    %v4652 = vsel %vm39, %v4589, %v4624
    %v4653 = vsel %vm1580, %v4651, %v4627
    %v4654 = vsel %vm1580, %v4652, %v4628
    %v4655 = vsel %vm1583, %v4653, %v4631
    %v4656 = vsel %vm1583, %v4654, %v4632
    %v4657 = vsel %vm87, %v4655, %v4635
    %v4658 = vsel %vm87, %v4656, %v4636
    %v4659 = vsel %vm1588, %v4657, %v4639
    %v4660 = vsel %vm1588, %v4658, %v4640
    %v4661 = vsel %vm61, %v4659, %v4643
    %v4662 = vsel %vm61, %v4660, %v4644
    %v4663 = vsel %vm48, %v4661, %v4647
    %v4664 = vsel %vm48, %v4662, %v4648
    %4667 = vrot.lane.b32.xlu0 %v4581, 32
    %v4668 = vpop.permute.xlu0 %4667
    %4669 = vrot.lane.b32.xlu0 %v4582, 32
    %v4670 = vpop.permute.xlu0 %4669
    %4675 = vrot.lane.b32.xlu0 %v4663, 64
    %v4676 = vpop.permute.xlu0 %4675
    %4677 = vrot.lane.b32.xlu0 %v4664, 64
    %v4678 = vpop.permute.xlu0 %4677
    %v4681 = vsel %vm164, %v4668, %v4676
    %v4682 = vsel %vm164, %v4670, %v4678
    %v4683 = vld [vmem:[#allocation2 + $0x370] ss:$0 sm:$0xff]
    %v4684 = vld [vmem:[#allocation2 + $0x380] ss:$0 sm:$0xff]
    %v4685 = vmul.f32 %v4681, %v4683
    %v4686 = vmul.f32 %v4682, %v4683
    %v4687 = vsel %vm290, %v4685, 0.0
    %4688 = vadd.xlane.f32.xlu0 %v4687
    %v4689 = vpop.xlane.xlu0 %4688
    %v4690 = vsel %vm290, %v4686, 0.0
    %4691 = vadd.xlane.f32.xlu0 %v4690
    %v4692 = vpop.xlane.xlu0 %4691
    %v4693 = vadd.f32 %v4689, %v4684
    %v4694 = vadd.f32 %v4692, %v4684
    %vm4695 = vcmask 7168
    %v4696 = vsel %vm4695, %v4693, -inf
    %v4697 = vrot.slane %v4696, 4
    %v4698 = vmax.f32 %v4696, %v4697
    %v4699 = vrot.slane %v4698, 2
    %v4700 = vmax.f32 %v4698, %v4699
    %v4701 = vrot.slane %v4700, 1
    %v4702 = vmax.f32 %v4700, %v4701
    %v4703 = vsel %vm4695, %v4694, -inf
    %v4704 = vrot.slane %v4703, 4
    %v4705 = vmax.f32 %v4703, %v4704
    %v4706 = vrot.slane %v4705, 2
    %v4707 = vmax.f32 %v4705, %v4706
    %v4708 = vrot.slane %v4707, 1
    %v4709 = vmax.f32 %v4707, %v4708
    %v4710 = vsub.f32 %v4693, %v4702
    %v4711 = vsub.f32 %v4694, %v4709
    %v4712 = vmul.f32 %v4710, 1.442695
    %v4713 = vpow.pop %v4712
    %v4714 = vmul.f32 %v4711, 1.442695
    %v4715 = vpow.pop %v4714
    %v4716 = vsel %vm4695, %v4713, 0.0
    %v4717 = vrot.slane %v4716, 4
    %v4718 = vadd.f32 %v4716, %v4717
    %v4719 = vrot.slane %v4718, 2
    %v4720 = vadd.f32 %v4718, %v4719
    %v4721 = vrot.slane %v4720, 1
    %v4722 = vadd.f32 %v4720, %v4721
    %v4723 = vsel %vm4695, %v4715, 0.0
    %v4724 = vrot.slane %v4723, 4
    %v4725 = vadd.f32 %v4723, %v4724
    %v4726 = vrot.slane %v4725, 2
    %v4727 = vadd.f32 %v4725, %v4726
    %v4728 = vrot.slane %v4727, 1
    %v4729 = vadd.f32 %v4727, %v4728
    %v4730 = vrcp.pop %v4722
    %v4731 = vmul.f32 %v4722, %v4730
    %v4732 = vsub.f32 1.0, %v4731
    %v4733 = vmul.f32 %v4730, %v4732
    %v4734 = vadd.f32 %v4730, %v4733
    %vm4735 = vweird.f32 %v4722
    %vm4736 = vweird.f32 %v4730
    %vm4737 = vmor %vm4735, %vm4736
    %v4738 = vsel %vm4737, %v4730, %v4734
    %v4739 = vand.u32 2147483647, %v4722
    %vm4740 = vcmp.eq.f32.partialorder %v4739, 8.507059e+37
    %v4741 = vand.u32 %v4722, 2147483648
    %v4742 = vor.u32 1.1754944e-38, %v4741
    %v4743 = vsel %vm4740, %v4742, %v4738
    %v4744 = vmul.f32 %v4713, %v4743
    %v4745 = vrcp.pop %v4729
    %v4746 = vmul.f32 %v4729, %v4745
    %v4747 = vsub.f32 1.0, %v4746
    %v4748 = vmul.f32 %v4745, %v4747
    %v4749 = vadd.f32 %v4745, %v4748
    %vm4750 = vweird.f32 %v4729
    %vm4751 = vweird.f32 %v4745
    %vm4752 = vmor %vm4750, %vm4751
    %v4753 = vsel %vm4752, %v4745, %v4749
    %v4754 = vand.u32 2147483647, %v4729
    %vm4755 = vcmp.eq.f32.partialorder %v4754, 8.507059e+37
    %v4756 = vand.u32 %v4729, 2147483648
    %v4757 = vor.u32 1.1754944e-38, %v4756
    %v4758 = vsel %vm4755, %v4757, %v4753
    %v4759 = vmul.f32 %v4715, %v4758
    %4761 = vset.pattern.permute.xlu0 0
    %4762 = vperm.xlu0 %4761, %v4744
    %v4763 = vpop.permute.xlu0 %4762
    %4766 = vset.pattern.permute.xlu0 0
    %4767 = vperm.xlu0 %4766, %v4759
    %v4768 = vpop.permute.xlu0 %4767
    %v4770 = vmul.f32 %v4681, %v4763
    %v4771 = vmul.f32 %v4682, %v4768
    %v4772 = vsel %vm290, %v4770, 0.0
    %v4773 = vrot.slane %v4772, 4
    %v4774 = vadd.f32 %v4772, %v4773
    %v4775 = vrot.slane %v4774, 2
    %v4776 = vadd.f32 %v4774, %v4775
    %v4777 = vrot.slane %v4776, 1
    %v4778 = vadd.f32 %v4776, %v4777
    %v4779 = vsel %vm290, %v4771, 0.0
    %v4780 = vrot.slane %v4779, 4
    %v4781 = vadd.f32 %v4779, %v4780
    %v4782 = vrot.slane %v4781, 2
    %v4783 = vadd.f32 %v4781, %v4782
    %v4784 = vrot.slane %v4783, 1
    %v4785 = vadd.f32 %v4783, %v4784
    %v4788 = vsel %vm281, %v4785, %v4778
    %vm4790 = vcmask 517120
    %v4791 = vsel %vm4790, %v4788, 0.0
    %4792 = vadd.xlane.f32.xlu0 %v4791
    %v4793 = vpop.xlane.xlu0 %4792
    %v4794 = vrcp.pop 64.0
    %v4795 = vmul.f32 64.0, %v4794
    %v4796 = vsub.f32 1.0, %v4795
    %v4797 = vmul.f32 %v4794, %v4796
    %v4798 = vadd.f32 %v4794, %v4797
    %vm4799 = vweird.f32 %v4794
    %v4800 = vsel %vm4799, %v4794, %v4798
    %v4801 = vmul.f32 %v4793, %v4800
    %v4803 = vrot.slane %v4801, 1
    %v4806 = vsub.f32 %v4778, %v4801
    %v4807 = vsub.f32 %v4785, %v4803
    %v4808 = vmul.f32 %v4806, %v4806
    %v4809 = vmul.f32 %v4807, %v4807
    %v4812 = vrot.slane %v4809, 7
    %v4813 = vsel %vm281, %v4812, %v4808
    %v4815 = vsel %vm4790, %v4813, 0.0
    %4816 = vadd.xlane.f32.xlu0 %v4815
    %v4817 = vpop.xlane.xlu0 %4816
    %v4818 = vmul.f32 %v4817, %v4800
    %v4819 = vadd.f32 %v4818, 1e-05
    %v4820 = vrsqrt.pop %v4819
    %v4821 = vmul.f32 %v4820, %v4819
    %v4822 = vmul.f32 %v4821, %v4820
    %v4823 = vmul.f32 0.5, %v4822
    %v4824 = vsub.f32 1.5, %v4823
    %v4825 = vmul.f32 %v4820, %v4824
    %vm4826 = vweird.f32 %v4819
    %vm4827 = vweird.f32 %v4820
    %vm4828 = vmor %vm4826, %vm4827
    %v4829 = vsel %vm4828, %v4820, %v4825
    %v4831 = vrot.slane %v4829, 1
    %v4834 = vmul.f32 %v4806, %v4829
    %v4835 = vmul.f32 %v4807, %v4831
    %v4836 = vld [vmem:[#allocation2 + $0x390] ss:$0 sm:$0xff]
    %v4837 = vmul.f32 %v4834, %v4836
    %v4838 = vmul.f32 %v4835, %v4836
    %v4839 = vld [vmem:[#allocation2 + $0x3a0] ss:$0 sm:$0xff]
    %v4840 = vadd.f32 %v4837, %v4839
    %v4841 = vadd.f32 %v4838, %v4839
    %v4842 = vld [vmem:[#allocation2 + $0x3b0] sm:$0xff]
    %v4843 = vld [vmem:[#allocation2 + $0x3c0] sm:$0xff]
    %v4844 = vld [vmem:[#allocation2 + $0x3d0] sm:$0xff]
    %v4845 = vld [vmem:[#allocation2 + $0x3e0] sm:$0xff]
    %v4846 = vld [vmem:[#allocation2 + $0x3f0] sm:$0xff]
    %v4847 = vld [vmem:[#allocation2 + $0x400] sm:$0xff]
    %v4848 = vld [vmem:[#allocation2 + $0x410] sm:$0xff]
    %v4849 = vld [vmem:[#allocation2 + $0x420] sm:$0xff]
    %v4850 = vld [vmem:[#allocation2 + $0x430] ss:$0 sm:$0xff]
    %v4853 = vrot.slane %v4841, 7
    %v4854 = vsel %vm281, %v4853, %v4840
    %v4855 = vsel %vm290, %v4854, 0
    %4857 = vmatpush.msra.mxu0 0.0
    %4858 = vmatpush.msra.mxu0 0.0
    %4859 = vmatpush.msra.mxu0 0.0
    %4860 = vmatpush.msra.mxu0 0.0
    %4861 = vmatpush.msra.mxu0 0.0
    %4862 = vmatpush.msra.mxu0 0.0
    %4863 = vmatpush.msra.mxu0 0.0
    %4864 = vmatpush.msra.mxu0 0.0
    %4865 = vmatpush.msra.mxu0 %v4849
    %4866 = vmatpush.msra.mxu0 %v4848
    %4867 = vmatpush.msra.mxu0 %v4847
    %4868 = vmatpush.msra.mxu0 %v4846
    %4869 = vmatpush.msra.mxu0 %v4845
    %4870 = vmatpush.msra.mxu0 %v4844
    %4871 = vmatpush.msra.mxu0 %v4843
    %4872 = vmatpush.msra.mxu0 %v4842
    %4873 = vmatmul.f32.gmra.mxu0 %v4855
    %v4874 = vpop.f32.mrf.mxu0
    %v4875 = vadd.f32 %v4850, %v4874
    %4876 = vdwg.mxu0
    %v4877 = vmul.f32 %v4875, %v4875
    %v4878 = vmul.f32 %v4875, %v4877
    %v4879 = vmul.f32 %v4878, 0.044715
    %v4880 = vadd.f32 %v4875, %v4879
    %v4881 = vmul.f32 %v4880, 0.7978846
    %v4882 = vtanh.pop %v4881
    %v4883 = vadd.f32 %v4882, 1.0
    %v4884 = vmul.f32 %v4883, 0.5
    %v4885 = vmul.f32 %v4875, %v4884
    %v4886 = vld [vmem:[#allocation2 + $0x440] sm:$0xff]
    %v4887 = vld [vmem:[#allocation2 + $0x450] sm:$0xff]
    %v4888 = vld [vmem:[#allocation2 + $0x460] sm:$0xff]
    %v4889 = vld [vmem:[#allocation2 + $0x470] sm:$0xff]
    %v4890 = vld [vmem:[#allocation2 + $0x480] ss:$0 sm:$0xff]
    %v4892 = vsel %vm164, %v4885, 0
    %4894 = vmatpush.msra.mxu0 0.0
    %4895 = vmatpush.msra.mxu0 0.0
    %4896 = vmatpush.msra.mxu0 0.0
    %4897 = vmatpush.msra.mxu0 0.0
    %4898 = vmatpush.msra.mxu0 0.0
    %4899 = vmatpush.msra.mxu0 0.0
    %4900 = vmatpush.msra.mxu0 0.0
    %4901 = vmatpush.msra.mxu0 0.0
    %4902 = vmatpush.msra.mxu0 0.0
    %4903 = vmatpush.msra.mxu0 0.0
    %4904 = vmatpush.msra.mxu0 0.0
    %4905 = vmatpush.msra.mxu0 0.0
    %4906 = vmatpush.msra.mxu0 %v4889
    %4907 = vmatpush.msra.mxu0 %v4888
    %4908 = vmatpush.msra.mxu0 %v4887
    %4909 = vmatpush.msra.mxu0 %v4886
    %4910 = vmatmul.f32.gmra.mxu0 %v4892
    %v4911 = vpop.f32.mrf.mxu0
    %v4912 = vadd.f32 %v4890, %v4911
    %4913 = vdwg.mxu0
    %v4914 = vmul.f32 %v4912, %v4912
    %v4915 = vmul.f32 %v4912, %v4914
    %v4916 = vmul.f32 %v4915, 0.044715
    %v4917 = vadd.f32 %v4912, %v4916
    %v4918 = vmul.f32 %v4917, 0.7978846
    %v4919 = vtanh.pop %v4918
    %v4920 = vadd.f32 %v4919, 1.0
    %v4921 = vmul.f32 %v4920, 0.5
    %v4922 = vmul.f32 %v4912, %v4921
    %v4923 = vld [vmem:[#allocation2 + $0x490] sm:$0xff]
    %v4924 = vld [vmem:[#allocation2 + $0x4a0] sm:$0xff]
    %v4925 = vld [vmem:[#allocation2 + $0x4b0] ss:$0 sm:$0xff]
    %v4927 = vsel %vm161, %v4922, 0
    %4929 = vmatpush.msra.mxu0 0.0
    %4930 = vmatpush.msra.mxu0 0.0
    %4931 = vmatpush.msra.mxu0 0.0
    %4932 = vmatpush.msra.mxu0 0.0
    %4933 = vmatpush.msra.mxu0 0.0
    %4934 = vmatpush.msra.mxu0 0.0
    %4935 = vmatpush.msra.mxu0 0.0
    %4936 = vmatpush.msra.mxu0 0.0
    %4937 = vmatpush.msra.mxu0 0.0
    %4938 = vmatpush.msra.mxu0 0.0
    %4939 = vmatpush.msra.mxu0 0.0
    %4940 = vmatpush.msra.mxu0 0.0
    %4941 = vmatpush.msra.mxu0 0.0
    %4942 = vmatpush.msra.mxu0 0.0
    %4943 = vmatpush.msra.mxu0 %v4924
    %4944 = vmatpush.msra.mxu0 %v4923
    %4945 = vmatmul.f32.gmra.mxu0 %v4927
    %v4946 = vpop.f32.mrf.mxu0
    %v4947 = vadd.f32 %v4925, %v4946
    %4948 = vdwg.mxu0
    %vm4949 = vcmask 17408
    %4950 = vst.msk [vmem:[#allocation5] sm:$0x3] %vm4949, %v4947
    // Predicated region
    $region14: #{_lambda_.1} parent=1 // pred_check
      _
    $region15: #{_lambda_.1} parent=1 // pred_check_branch
      %4952 = sbr.rel (0) target = $region17
    $region16: #{_lambda_.1} parent=1 // pred_region
      %4954 = vsyncadd [#allocation4], 0
      %s4956 = sshll.u32 [#allocation5], 4
      %s4957 = int_to_ptr.vmem [resolvable:$true] %s4956
      %s4958 = sshll.u32 %s2, 4
      %s4959 = int_to_ptr.hbm [resolvable:$true] %s4958
      %4961 = dma.vmem_to_hbm [thread:$0]  %s4957, 32, %s4959, [#allocation4]
    $region17: #{_lambda_.1} parent=1 // pred_fallthru
      _
    // Predicated region
    $region18: #{_lambda_.1} parent=1 // pred_check
      _
    $region19: #{_lambda_.1} parent=1 // pred_check_branch
      %4963 = sbr.rel (0) target = $region21
    $region20: #{_lambda_.1} parent=1 // pred_region
      %4965 = dma.done [#allocation4], 32
    $region21: #{_lambda_.1} parent=1 // pred_fallthru
      _
    %4966 = vsyncpa [#allocation3], 1
    %4967 = vsyncpa [#allocation4], 1

</llo_original>
